<compile_context>
chip_gen: v5e
topology: v5e:2x2
jax: 0.10.0
libtpu: 0.0.40
codegen_flags: <defaults>
</compile_context>

<pallas_src>
import jax
import jax.numpy as jnp
from jax import lax
from jax.experimental import pallas as pl
from jax.experimental.pallas import tpu as pltpu

LABEL_NAMES = ['O', 'B-PER', 'I-PER', 'B-ORG', 'I-ORG', 'B-LOC', 'I-LOC',
               'B-MISC', 'I-MISC']
NUM_CLASSES = len(LABEL_NAMES)  # 9

LANE = 128      # lane tile (last dim)
SUBLANE = 8     # f32 sublane tile (second-to-last dim)


def _round_up(x, m):
    return ((x + m - 1) // m) * m


# --------------------------------------------------------------------------- #
# Kernel
# --------------------------------------------------------------------------- #
def _bilstm_kernel(xe_ref, w_in_ref, b_in_ref, whh_f_ref, whh_b_ref,
                   wfc_f_ref, wfc_b_ref, bfc_ref,
                   out_ref,
                   pre_scr, hf_scr, cf_scr, hb_scr, cb_scr,
                   hf_all, hb_all):
    Bp, Hp = hf_scr.shape
    TB = xe_ref.shape[0]
    T = TB // Bp

    # (1) Input projection for BOTH directions in one big MXU matmul,
    #     with the (b_ih + b_hh) biases folded in once.
    pre_scr[...] = (
        jnp.dot(xe_ref[...], w_in_ref[...], preferred_element_type=jnp.float32)
        + b_in_ref[...])

    # Zero initial hidden/cell states (PyTorch default h0 = c0 = 0).
    hf_scr[...] = jnp.zeros_like(hf_scr)
    cf_scr[...] = jnp.zeros_like(cf_scr)
    hb_scr[...] = jnp.zeros_like(hb_scr)
    cb_scr[...] = jnp.zeros_like(cb_scr)

    whh_f = whh_f_ref[...]
    whh_b = whh_b_ref[...]

    def gate_math(gates, c):
        # PyTorch gate order i, f, g, o; every slice is lane-aligned (Hp % 128 == 0).
        i = jax.nn.sigmoid(gates[:, 0 * Hp:1 * Hp])
        f = jax.nn.sigmoid(gates[:, 1 * Hp:2 * Hp])
        g = jnp.tanh(gates[:, 2 * Hp:3 * Hp])
        o = jax.nn.sigmoid(gates[:, 3 * Hp:4 * Hp])
        c_new = f * c + i * g
        h_new = o * jnp.tanh(c_new)
        return h_new, c_new

    # ---- forward direction: t = 0 .. T-1 ----
    def fwd_body(t, carry):
        row = pl.multiple_of(t * Bp, Bp)
        gates = (pre_scr[pl.ds(row, Bp), :4 * Hp]
                 + jnp.dot(hf_scr[...], whh_f,
                           preferred_element_type=jnp.float32))
        h_new, c_new = gate_math(gates, cf_scr[...])
        hf_scr[...] = h_new
        cf_scr[...] = c_new
        hf_all[pl.ds(row, Bp), :] = h_new
        return carry

    # ---- backward direction: t = T-1 .. 0 ----
    def bwd_body(i, carry):
        t = T - 1 - i
        row = pl.multiple_of(t * Bp, Bp)
        gates = (pre_scr[pl.ds(row, Bp), 4 * Hp:8 * Hp]
                 + jnp.dot(hb_scr[...], whh_b,
                           preferred_element_type=jnp.float32))
        h_new, c_new = gate_math(gates, cb_scr[...])
        hb_scr[...] = h_new
        cb_scr[...] = c_new
        hb_all[pl.ds(row, Bp), :] = h_new
        return carry

    # Fully unroll the latency-bound recurrences (T is small & static here).
    lax.fori_loop(0, T, fwd_body, 0, unroll=True)
    lax.fori_loop(0, T, bwd_body, 0, unroll=True)

    # (2) One fused, lane-dense FC over all timesteps (no per-step concat,
    #     no 9-lane masked stores).
    out_ref[...] = (
        jnp.dot(hf_all[...], wfc_f_ref[...], preferred_element_type=jnp.float32)
        + jnp.dot(hb_all[...], wfc_b_ref[...], preferred_element_type=jnp.float32)
        + bfc_ref[...]).astype(out_ref.dtype)


# --------------------------------------------------------------------------- #
# Parameter packing (done once): pad to lane/sublane tiles, keep each LSTM
# gate block lane-aligned, split the FC into fwd/bwd halves.
# Zero padding is numerically inert (padded h/c stay exactly 0).
# --------------------------------------------------------------------------- #
def pack_params(p):
    E = p['wih_f'].shape[0]
    H = p['whh_f'].shape[0]
    Ep = _round_up(E, LANE)
    Hp = _round_up(H, LANE)
    Cp = _round_up(NUM_CLASSES, LANE)

    def pad_to(a, shape):
        return jnp.pad(a, [(0, s - d) for d, s in zip(a.shape, shape)])

    def pad_gate_cols(w, rows_pad):
        # (rows, 4H) -> (rows_pad, 4*Hp), each gate block lane-aligned.
        blocks = [pad_to(w[:, k * H:(k + 1) * H], (rows_pad, Hp))
                  for k in range(4)]
        return jnp.concatenate(blocks, axis=1)

    packed = {
        # Embedding table padded to a lane-dense feature dim so the gather
        # already yields (T, B, Ep).
        'emb': pad_to(p['embedding'], (p['embedding'].shape[0], Ep)),
        # Both directions' input projections fused: (Ep, 8*Hp).
        'w_in': jnp.concatenate([pad_gate_cols(p['wih_f'], Ep),
                                 pad_gate_cols(p['wih_b'], Ep)], axis=1),
        'b_in': jnp.concatenate([pad_gate_cols(p['b_f'], 1),
                                 pad_gate_cols(p['b_b'], 1)], axis=1),
        'whh_f': pad_gate_cols(p['whh_f'], Hp),
        'whh_b': pad_gate_cols(p['whh_b'], Hp),
        # FC split into forward/backward halves -> no in-kernel concat.
        'wfc_f': pad_to(p['wfc'][:H], (Hp, Cp)),
        'wfc_b': pad_to(p['wfc'][H:], (Hp, Cp)),
        'bfc': pad_to(p['bfc'], (1, Cp)),
    }
    meta = dict(E=E, H=H, Ep=Ep, Hp=Hp, Cp=Cp)
    return packed, meta


# --------------------------------------------------------------------------- #
# Wrapper
# --------------------------------------------------------------------------- #
def bilstm_ner_forward(x_tokens, packed, meta):
    """x_tokens: (B, T) int32 -> (B, T, NUM_CLASSES) float32."""
    Ep, Hp, Cp = meta['Ep'], meta['Hp'], meta['Cp']
    B, T = x_tokens.shape
    Bp = _round_up(B, SUBLANE)

    # Time-major gather straight from the lane-padded table: (T, B, Ep).
    emb_tm = jnp.take(packed['emb'], x_tokens.T, axis=0)
    if Bp != B:
        emb_tm = jnp.pad(emb_tm, ((0, 0), (0, Bp - B), (0, 0)))
    xe2d = emb_tm.reshape(T * Bp, Ep).astype(jnp.float32)

    # TODO(synk): for production-size T*B add a batch-tile grid
    # (dimension_semantics=("parallel",)) so the (T,Bp,*) slabs fit v7x's
    # 64 MiB VMEM and the two TensorCores split the batch.
    vmem = pl.BlockSpec(memory_space=pltpu.MemorySpace.VMEM)
    out2d = pl.pallas_call(
        _bilstm_kernel,
        out_shape=jax.ShapeDtypeStruct((T * Bp, Cp), jnp.float32),
        in_specs=[vmem] * 8,
        out_specs=vmem,
        scratch_shapes=[
            pltpu.VMEM((T * Bp, 8 * Hp), jnp.float32),   # fused input projections
            pltpu.VMEM((Bp, Hp), jnp.float32),           # h forward
            pltpu.VMEM((Bp, Hp), jnp.float32),           # c forward
            pltpu.VMEM((Bp, Hp), jnp.float32),           # h backward
            pltpu.VMEM((Bp, Hp), jnp.float32),           # c backward
            pltpu.VMEM((T * Bp, Hp), jnp.float32),       # all forward hiddens
            pltpu.VMEM((T * Bp, Hp), jnp.float32),       # all backward hiddens
        ],
        compiler_params=pltpu.CompilerParams(
            vmem_limit_bytes=64 * 1024 * 1024),
    )(xe2d, packed['w_in'], packed['b_in'], packed['whh_f'], packed['whh_b'],
      packed['wfc_f'], packed['wfc_b'], packed['bfc'])

    out = out2d.reshape(T, Bp, Cp)[:, :B, :NUM_CLASSES]   # tiny slice
    return jnp.transpose(out, (1, 0, 2))                  # (B, T, NUM_CLASSES)


# --------------------------------------------------------------------------- #
# PyTorch-style parameter init (unpadded, weights stored pre-transposed)
# --------------------------------------------------------------------------- #
def init_params(key, vocab_size, embedding_dim, hidden_dim):
    ks = jax.random.split(key, 12)
    E, H = embedding_dim, hidden_dim
    k_lstm = 1.0 / jnp.sqrt(jnp.float32(H))
    k_fc = 1.0 / jnp.sqrt(jnp.float32(2 * H))

    def u(k, shape, bound):
        return jax.random.uniform(k, shape, jnp.float32, -bound, bound)

    return {
        'embedding': jax.random.normal(ks[0], (vocab_size, E), jnp.float32),
        # forward direction (W_ih^T, W_hh^T, b_ih + b_hh)
        'wih_f': u(ks[1], (E, 4 * H), k_lstm),
        'whh_f': u(ks[2], (H, 4 * H), k_lstm),
        'b_f': u(ks[3], (1, 4 * H), k_lstm) + u(ks[4], (1, 4 * H), k_lstm),
        # backward direction
        'wih_b': u(ks[5], (E, 4 * H), k_lstm),
        'whh_b': u(ks[6], (H, 4 * H), k_lstm),
        'b_b': u(ks[7], (1, 4 * H), k_lstm) + u(ks[8], (1, 4 * H), k_lstm),
        # fc: Linear(2H -> NUM_CLASSES) stored as (2H, C)
        'wfc': u(ks[9], (2 * H, NUM_CLASSES), k_fc),
        'bfc': u(ks[10], (1, NUM_CLASSES), k_fc),
    }


def reference_forward(x_tokens, p):
    """Pure-JAX reference with identical math (for correctness check)."""
    emb = jnp.take(p['embedding'], x_tokens, axis=0)      # (B, T, E)
    B, T, _ = emb.shape
    H = p['whh_f'].shape[0]

    def run(reverse, wih, whh, b):
        h = jnp.zeros((B, H), jnp.float32)
        c = jnp.zeros((B, H), jnp.float32)
        hs = [None] * T
        order = range(T - 1, -1, -1) if reverse else range(T)
        for t in order:
            gates = emb[:, t] @ wih + h @ whh + b
            i = jax.nn.sigmoid(gates[:, 0 * H:1 * H])
            f = jax.nn.sigmoid(gates[:, 1 * H:2 * H])
            g = jnp.tanh(gates[:, 2 * H:3 * H])
            o = jax.nn.sigmoid(gates[:, 3 * H:4 * H])
            c = f * c + i * g
            h = o * jnp.tanh(c)
            hs[t] = h
        return jnp.stack(hs, axis=1)                       # (B, T, H)

    hf = run(False, p['wih_f'], p['whh_f'], p['b_f'])
    hb = run(True, p['wih_b'], p['whh_b'], p['b_b'])
    hcat = jnp.concatenate([hf, hb], axis=-1)              # (B, T, 2H)
    return hcat @ p['wfc'] + p['bfc']


if __name__ == "__main__":
    vocab_size, embedding_dim, hidden_dim = 100, 32, 32
    B, T = 2, 8

    root = jax.random.PRNGKey(0)
    k_params, k_data = jax.random.split(root)
    params = init_params(k_params, vocab_size, embedding_dim, hidden_dim)
    packed, meta = pack_params(params)
    x = jax.random.randint(k_data, (B, T), 0, vocab_size, dtype=jnp.int32)

    out = jax.block_until_ready(bilstm_ner_forward(x, packed, meta))
    ref = jax.block_until_ready(reference_forward(x, params))

    assert out.shape == (B, T, NUM_CLASSES), out.shape
    assert jnp.allclose(out, ref, atol=1e-4, rtol=1e-4), \
        float(jnp.max(jnp.abs(out - ref)))
    print("KERNEL_OK")
</pallas_src>

<mosaic_0001>
module attributes {stable_mosaic.version = 11 : i64} {
  func.func @_bilstm_kernel(%arg0: memref<64x128xf32, #tpu.memory_space<vmem>>, %arg1: memref<128x1024xf32, #tpu.memory_space<vmem>>, %arg2: memref<1x1024xf32, #tpu.memory_space<vmem>>, %arg3: memref<128x512xf32, #tpu.memory_space<vmem>>, %arg4: memref<128x512xf32, #tpu.memory_space<vmem>>, %arg5: memref<128x128xf32, #tpu.memory_space<vmem>>, %arg6: memref<128x128xf32, #tpu.memory_space<vmem>>, %arg7: memref<1x128xf32, #tpu.memory_space<vmem>>, %arg8: memref<64x128xf32, #tpu.memory_space<vmem>>, %arg9: memref<64x1024xf32, #tpu.memory_space<vmem>>, %arg10: memref<8x128xf32, #tpu.memory_space<vmem>>, %arg11: memref<8x128xf32, #tpu.memory_space<vmem>>, %arg12: memref<8x128xf32, #tpu.memory_space<vmem>>, %arg13: memref<8x128xf32, #tpu.memory_space<vmem>>, %arg14: memref<64x128xf32, #tpu.memory_space<vmem>>, %arg15: memref<64x128xf32, #tpu.memory_space<vmem>>) attributes {dimension_semantics = [], scalar_prefetch = 0 : i64, scratch_operands = 7 : i64, tpu.core_type = #tpu.core_type<tc>} {
    %c0 = arith.constant 0 : index
    %c0_0 = arith.constant 0 : index
    %0 = vector.load %arg0[%c0, %c0_0] : memref<64x128xf32, #tpu.memory_space<vmem>>, vector<64x128xf32>
    %c0_1 = arith.constant 0 : index
    %c0_2 = arith.constant 0 : index
    %1 = vector.load %arg1[%c0_1, %c0_2] : memref<128x1024xf32, #tpu.memory_space<vmem>>, vector<128x1024xf32>
    %cst = arith.constant dense<0.000000e+00> : vector<64x1024xf32>
    %2 = tpu.matmul %0, %1, %cst {dimension_numbers = #tpu.dot_dimension_numbers<[1], [0], [0], [1], [0, 0, 1, 1], [], []>} : vector<64x128xf32>, vector<128x1024xf32>, vector<64x1024xf32> -> vector<64x1024xf32>
    %c0_3 = arith.constant 0 : index
    %c0_4 = arith.constant 0 : index
    %3 = vector.load %arg2[%c0_3, %c0_4] : memref<1x1024xf32, #tpu.memory_space<vmem>>, vector<1x1024xf32>
    %4 = vector.broadcast %3 : vector<1x1024xf32> to vector<64x1024xf32>
    %5 = arith.addf %2, %4 : vector<64x1024xf32>
    %c0_5 = arith.constant 0 : index
    %c0_6 = arith.constant 0 : index
    %6 = vector.load %arg9[%c0_5, %c0_6] : memref<64x1024xf32, #tpu.memory_space<vmem>>, vector<64x1024xf32>
    tpu.vector_store %arg9[%c0_5, %c0_6], %5 {strides = array<i32>} : memref<64x1024xf32, #tpu.memory_space<vmem>>, vector<64x1024xf32>,
    %cst_7 = arith.constant 0.000000e+00 : f32
    %7 = vector.broadcast %cst_7 : f32 to vector<8x128xf32>
    %c0_8 = arith.constant 0 : index
    %c0_9 = arith.constant 0 : index
    %8 = vector.load %arg10[%c0_8, %c0_9] : memref<8x128xf32, #tpu.memory_space<vmem>>, vector<8x128xf32>
    tpu.vector_store %arg10[%c0_8, %c0_9], %7 {strides = array<i32>} : memref<8x128xf32, #tpu.memory_space<vmem>>, vector<8x128xf32>,
    %cst_10 = arith.constant 0.000000e+00 : f32
    %9 = vector.broadcast %cst_10 : f32 to vector<8x128xf32>
    %c0_11 = arith.constant 0 : index
    %c0_12 = arith.constant 0 : index
    %10 = vector.load %arg11[%c0_11, %c0_12] : memref<8x128xf32, #tpu.memory_space<vmem>>, vector<8x128xf32>
    tpu.vector_store %arg11[%c0_11, %c0_12], %9 {strides = array<i32>} : memref<8x128xf32, #tpu.memory_space<vmem>>, vector<8x128xf32>,
    %cst_13 = arith.constant 0.000000e+00 : f32
    %11 = vector.broadcast %cst_13 : f32 to vector<8x128xf32>
    %c0_14 = arith.constant 0 : index
    %c0_15 = arith.constant 0 : index
    %12 = vector.load %arg12[%c0_14, %c0_15] : memref<8x128xf32, #tpu.memory_space<vmem>>, vector<8x128xf32>
    tpu.vector_store %arg12[%c0_14, %c0_15], %11 {strides = array<i32>} : memref<8x128xf32, #tpu.memory_space<vmem>>, vector<8x128xf32>,
    %cst_16 = arith.constant 0.000000e+00 : f32
    %13 = vector.broadcast %cst_16 : f32 to vector<8x128xf32>
    %c0_17 = arith.constant 0 : index
    %c0_18 = arith.constant 0 : index
    %14 = vector.load %arg13[%c0_17, %c0_18] : memref<8x128xf32, #tpu.memory_space<vmem>>, vector<8x128xf32>
    tpu.vector_store %arg13[%c0_17, %c0_18], %13 {strides = array<i32>} : memref<8x128xf32, #tpu.memory_space<vmem>>, vector<8x128xf32>,
    %c0_19 = arith.constant 0 : index
    %c0_20 = arith.constant 0 : index
    %15 = vector.load %arg3[%c0_19, %c0_20] : memref<128x512xf32, #tpu.memory_space<vmem>>, vector<128x512xf32>
    %c0_21 = arith.constant 0 : index
    %c0_22 = arith.constant 0 : index
    %16 = vector.load %arg4[%c0_21, %c0_22] : memref<128x512xf32, #tpu.memory_space<vmem>>, vector<128x512xf32>
    %c0_i32 = arith.constant 0 : i32
    %c8_i32 = arith.constant 8 : i32
    %17 = arith.muli %c0_i32, %c8_i32 : i32
    %18 = tpu.assume_multiple %17, 8 : i32
    %19 = arith.index_cast %18 : i32 to index
    %c0_23 = arith.constant 0 : index
    %20 = vector.load %arg9[%19, %c0_23] : memref<64x1024xf32, #tpu.memory_space<vmem>>, vector<8x512xf32>
    %c0_24 = arith.constant 0 : index
    %c0_25 = arith.constant 0 : index
    %21 = vector.load %arg10[%c0_24, %c0_25] : memref<8x128xf32, #tpu.memory_space<vmem>>, vector<8x128xf32>
    %cst_26 = arith.constant dense<0.000000e+00> : vector<8x512xf32>
    %22 = tpu.matmul %21, %15, %cst_26 {dimension_numbers = #tpu.dot_dimension_numbers<[1], [0], [0], [1], [0, 0, 1, 1], [], []>} : vector<8x128xf32>, vector<128x512xf32>, vector<8x512xf32> -> vector<8x512xf32>
    %23 = arith.addf %20, %22 : vector<8x512xf32>
    %c0_27 = arith.constant 0 : index
    %c0_28 = arith.constant 0 : index
    %24 = vector.load %arg11[%c0_27, %c0_28] : memref<8x128xf32, #tpu.memory_space<vmem>>, vector<8x128xf32>
    %25 = vector.extract_strided_slice %23 {offsets = [0, 0], sizes = [8, 128], strides = [1, 1]} : vector<8x512xf32> to vector<8x128xf32>
    %26 = arith.negf %25 : vector<8x128xf32>
    %27 = math.exp %26 : vector<8x128xf32>
    %cst_29 = arith.constant 1.000000e+00 : f32
    %28 = vector.broadcast %cst_29 : f32 to vector<8x128xf32>
    %29 = arith.addf %28, %27 : vector<8x128xf32>
    %30 = arith.divf %28, %29 : vector<8x128xf32>
    %31 = vector.extract_strided_slice %23 {offsets = [0, 128], sizes = [8, 128], strides = [1, 1]} : vector<8x512xf32> to vector<8x128xf32>
    %32 = arith.negf %31 : vector<8x128xf32>
    %33 = math.exp %32 : vector<8x128xf32>
    %cst_30 = arith.constant 1.000000e+00 : f32
    %34 = vector.broadcast %cst_30 : f32 to vector<8x128xf32>
    %35 = arith.addf %34, %33 : vector<8x128xf32>
    %36 = arith.divf %34, %35 : vector<8x128xf32>
    %37 = vector.extract_strided_slice %23 {offsets = [0, 256], sizes = [8, 128], strides = [1, 1]} : vector<8x512xf32> to vector<8x128xf32>
    %38 = math.tanh %37 : vector<8x128xf32>
    %39 = vector.extract_strided_slice %23 {offsets = [0, 384], sizes = [8, 128], strides = [1, 1]} : vector<8x512xf32> to vector<8x128xf32>
    %40 = arith.negf %39 : vector<8x128xf32>
    %41 = math.exp %40 : vector<8x128xf32>
    %cst_31 = arith.constant 1.000000e+00 : f32
    %42 = vector.broadcast %cst_31 : f32 to vector<8x128xf32>
    %43 = arith.addf %42, %41 : vector<8x128xf32>
    %44 = arith.divf %42, %43 : vector<8x128xf32>
    %45 = arith.mulf %36, %24 : vector<8x128xf32>
    %46 = arith.mulf %30, %38 : vector<8x128xf32>
    %47 = arith.addf %45, %46 : vector<8x128xf32>
    %48 = math.tanh %47 : vector<8x128xf32>
    %49 = arith.mulf %44, %48 : vector<8x128xf32>
    %c0_32 = arith.constant 0 : index
    %c0_33 = arith.constant 0 : index
    %50 = vector.load %arg10[%c0_32, %c0_33] : memref<8x128xf32, #tpu.memory_space<vmem>>, vector<8x128xf32>
    tpu.vector_store %arg10[%c0_32, %c0_33], %49 {strides = array<i32>} : memref<8x128xf32, #tpu.memory_space<vmem>>, vector<8x128xf32>,
    %c0_34 = arith.constant 0 : index
    %c0_35 = arith.constant 0 : index
    %51 = vector.load %arg11[%c0_34, %c0_35] : memref<8x128xf32, #tpu.memory_space<vmem>>, vector<8x128xf32>
    tpu.vector_store %arg11[%c0_34, %c0_35], %47 {strides = array<i32>} : memref<8x128xf32, #tpu.memory_space<vmem>>, vector<8x128xf32>,
    %52 = arith.index_cast %18 : i32 to index
    %c0_36 = arith.constant 0 : index
    %53 = vector.load %arg14[%52, %c0_36] : memref<64x128xf32, #tpu.memory_space<vmem>>, vector<8x128xf32>
    tpu.vector_store %arg14[%52, %c0_36], %49 {strides = array<i32>} : memref<64x128xf32, #tpu.memory_space<vmem>>, vector<8x128xf32>,
    %c1_i32 = arith.constant 1 : i32
    %c8_i32_37 = arith.constant 8 : i32
    %54 = arith.muli %c1_i32, %c8_i32_37 : i32
    %55 = tpu.assume_multiple %54, 8 : i32
    %56 = arith.index_cast %55 : i32 to index
    %c0_38 = arith.constant 0 : index
    %57 = vector.load %arg9[%56, %c0_38] : memref<64x1024xf32, #tpu.memory_space<vmem>>, vector<8x512xf32>
    %c0_39 = arith.constant 0 : index
    %c0_40 = arith.constant 0 : index
    %58 = vector.load %arg10[%c0_39, %c0_40] : memref<8x128xf32, #tpu.memory_space<vmem>>, vector<8x128xf32>
    %cst_41 = arith.constant dense<0.000000e+00> : vector<8x512xf32>
    %59 = tpu.matmul %58, %15, %cst_41 {dimension_numbers = #tpu.dot_dimension_numbers<[1], [0], [0], [1], [0, 0, 1, 1], [], []>} : vector<8x128xf32>, vector<128x512xf32>, vector<8x512xf32> -> vector<8x512xf32>
    %60 = arith.addf %57, %59 : vector<8x512xf32>
    %c0_42 = arith.constant 0 : index
    %c0_43 = arith.constant 0 : index
    %61 = vector.load %arg11[%c0_42, %c0_43] : memref<8x128xf32, #tpu.memory_space<vmem>>, vector<8x128xf32>
    %62 = vector.extract_strided_slice %60 {offsets = [0, 0], sizes = [8, 128], strides = [1, 1]} : vector<8x512xf32> to vector<8x128xf32>
    %63 = arith.negf %62 : vector<8x128xf32>
    %64 = math.exp %63 : vector<8x128xf32>
    %cst_44 = arith.constant 1.000000e+00 : f32
    %65 = vector.broadcast %cst_44 : f32 to vector<8x128xf32>
    %66 = arith.addf %65, %64 : vector<8x128xf32>
    %67 = arith.divf %65, %66 : vector<8x128xf32>
    %68 = vector.extract_strided_slice %60 {offsets = [0, 128], sizes = [8, 128], strides = [1, 1]} : vector<8x512xf32> to vector<8x128xf32>
    %69 = arith.negf %68 : vector<8x128xf32>
    %70 = math.exp %69 : vector<8x128xf32>
    %cst_45 = arith.constant 1.000000e+00 : f32
    %71 = vector.broadcast %cst_45 : f32 to vector<8x128xf32>
    %72 = arith.addf %71, %70 : vector<8x128xf32>
    %73 = arith.divf %71, %72 : vector<8x128xf32>
    %74 = vector.extract_strided_slice %60 {offsets = [0, 256], sizes = [8, 128], strides = [1, 1]} : vector<8x512xf32> to vector<8x128xf32>
    %75 = math.tanh %74 : vector<8x128xf32>
    %76 = vector.extract_strided_slice %60 {offsets = [0, 384], sizes = [8, 128], strides = [1, 1]} : vector<8x512xf32> to vector<8x128xf32>
    %77 = arith.negf %76 : vector<8x128xf32>
    %78 = math.exp %77 : vector<8x128xf32>
    %cst_46 = arith.constant 1.000000e+00 : f32
    %79 = vector.broadcast %cst_46 : f32 to vector<8x128xf32>
    %80 = arith.addf %79, %78 : vector<8x128xf32>
    %81 = arith.divf %79, %80 : vector<8x128xf32>
    %82 = arith.mulf %73, %61 : vector<8x128xf32>
    %83 = arith.mulf %67, %75 : vector<8x128xf32>
    %84 = arith.addf %82, %83 : vector<8x128xf32>
    %85 = math.tanh %84 : vector<8x128xf32>
    %86 = arith.mulf %81, %85 : vector<8x128xf32>
    %c0_47 = arith.constant 0 : index
    %c0_48 = arith.constant 0 : index
    %87 = vector.load %arg10[%c0_47, %c0_48] : memref<8x128xf32, #tpu.memory_space<vmem>>, vector<8x128xf32>
    tpu.vector_store %arg10[%c0_47, %c0_48], %86 {strides = array<i32>} : memref<8x128xf32, #tpu.memory_space<vmem>>, vector<8x128xf32>,
    %c0_49 = arith.constant 0 : index
    %c0_50 = arith.constant 0 : index
    %88 = vector.load %arg11[%c0_49, %c0_50] : memref<8x128xf32, #tpu.memory_space<vmem>>, vector<8x128xf32>
    tpu.vector_store %arg11[%c0_49, %c0_50], %84 {strides = array<i32>} : memref<8x128xf32, #tpu.memory_space<vmem>>, vector<8x128xf32>,
    %89 = arith.index_cast %55 : i32 to index
    %c0_51 = arith.constant 0 : index
    %90 = vector.load %arg14[%89, %c0_51] : memref<64x128xf32, #tpu.memory_space<vmem>>, vector<8x128xf32>
    tpu.vector_store %arg14[%89, %c0_51], %86 {strides = array<i32>} : memref<64x128xf32, #tpu.memory_space<vmem>>, vector<8x128xf32>,
    %c2_i32 = arith.constant 2 : i32
    %c8_i32_52 = arith.constant 8 : i32
    %91 = arith.muli %c2_i32, %c8_i32_52 : i32
    %92 = tpu.assume_multiple %91, 8 : i32
    %93 = arith.index_cast %92 : i32 to index
    %c0_53 = arith.constant 0 : index
    %94 = vector.load %arg9[%93, %c0_53] : memref<64x1024xf32, #tpu.memory_space<vmem>>, vector<8x512xf32>
    %c0_54 = arith.constant 0 : index
    %c0_55 = arith.constant 0 : index
    %95 = vector.load %arg10[%c0_54, %c0_55] : memref<8x128xf32, #tpu.memory_space<vmem>>, vector<8x128xf32>
    %cst_56 = arith.constant dense<0.000000e+00> : vector<8x512xf32>
    %96 = tpu.matmul %95, %15, %cst_56 {dimension_numbers = #tpu.dot_dimension_numbers<[1], [0], [0], [1], [0, 0, 1, 1], [], []>} : vector<8x128xf32>, vector<128x512xf32>, vector<8x512xf32> -> vector<8x512xf32>
    %97 = arith.addf %94, %96 : vector<8x512xf32>
    %c0_57 = arith.constant 0 : index
    %c0_58 = arith.constant 0 : index
    %98 = vector.load %arg11[%c0_57, %c0_58] : memref<8x128xf32, #tpu.memory_space<vmem>>, vector<8x128xf32>
    %99 = vector.extract_strided_slice %97 {offsets = [0, 0], sizes = [8, 128], strides = [1, 1]} : vector<8x512xf32> to vector<8x128xf32>
    %100 = arith.negf %99 : vector<8x128xf32>
    %101 = math.exp %100 : vector<8x128xf32>
    %cst_59 = arith.constant 1.000000e+00 : f32
    %102 = vector.broadcast %cst_59 : f32 to vector<8x128xf32>
    %103 = arith.addf %102, %101 : vector<8x128xf32>
    %104 = arith.divf %102, %103 : vector<8x128xf32>
    %105 = vector.extract_strided_slice %97 {offsets = [0, 128], sizes = [8, 128], strides = [1, 1]} : vector<8x512xf32> to vector<8x128xf32>
    %106 = arith.negf %105 : vector<8x128xf32>
    %107 = math.exp %106 : vector<8x128xf32>
    %cst_60 = arith.constant 1.000000e+00 : f32
    %108 = vector.broadcast %cst_60 : f32 to vector<8x128xf32>
    %109 = arith.addf %108, %107 : vector<8x128xf32>
    %110 = arith.divf %108, %109 : vector<8x128xf32>
    %111 = vector.extract_strided_slice %97 {offsets = [0, 256], sizes = [8, 128], strides = [1, 1]} : vector<8x512xf32> to vector<8x128xf32>
    %112 = math.tanh %111 : vector<8x128xf32>
    %113 = vector.extract_strided_slice %97 {offsets = [0, 384], sizes = [8, 128], strides = [1, 1]} : vector<8x512xf32> to vector<8x128xf32>
    %114 = arith.negf %113 : vector<8x128xf32>
    %115 = math.exp %114 : vector<8x128xf32>
    %cst_61 = arith.constant 1.000000e+00 : f32
    %116 = vector.broadcast %cst_61 : f32 to vector<8x128xf32>
    %117 = arith.addf %116, %115 : vector<8x128xf32>
    %118 = arith.divf %116, %117 : vector<8x128xf32>
    %119 = arith.mulf %110, %98 : vector<8x128xf32>
    %120 = arith.mulf %104, %112 : vector<8x128xf32>
    %121 = arith.addf %119, %120 : vector<8x128xf32>
    %122 = math.tanh %121 : vector<8x128xf32>
    %123 = arith.mulf %118, %122 : vector<8x128xf32>
    %c0_62 = arith.constant 0 : index
    %c0_63 = arith.constant 0 : index
    %124 = vector.load %arg10[%c0_62, %c0_63] : memref<8x128xf32, #tpu.memory_space<vmem>>, vector<8x128xf32>
    tpu.vector_store %arg10[%c0_62, %c0_63], %123 {strides = array<i32>} : memref<8x128xf32, #tpu.memory_space<vmem>>, vector<8x128xf32>,
    %c0_64 = arith.constant 0 : index
    %c0_65 = arith.constant 0 : index
    %125 = vector.load %arg11[%c0_64, %c0_65] : memref<8x128xf32, #tpu.memory_space<vmem>>, vector<8x128xf32>
    tpu.vector_store %arg11[%c0_64, %c0_65], %121 {strides = array<i32>} : memref<8x128xf32, #tpu.memory_space<vmem>>, vector<8x128xf32>,
    %126 = arith.index_cast %92 : i32 to index
    %c0_66 = arith.constant 0 : index
    %127 = vector.load %arg14[%126, %c0_66] : memref<64x128xf32, #tpu.memory_space<vmem>>, vector<8x128xf32>
    tpu.vector_store %arg14[%126, %c0_66], %123 {strides = array<i32>} : memref<64x128xf32, #tpu.memory_space<vmem>>, vector<8x128xf32>,
    %c3_i32 = arith.constant 3 : i32
    %c8_i32_67 = arith.constant 8 : i32
    %128 = arith.muli %c3_i32, %c8_i32_67 : i32
    %129 = tpu.assume_multiple %128, 8 : i32
    %130 = arith.index_cast %129 : i32 to index
    %c0_68 = arith.constant 0 : index
    %131 = vector.load %arg9[%130, %c0_68] : memref<64x1024xf32, #tpu.memory_space<vmem>>, vector<8x512xf32>
    %c0_69 = arith.constant 0 : index
    %c0_70 = arith.constant 0 : index
    %132 = vector.load %arg10[%c0_69, %c0_70] : memref<8x128xf32, #tpu.memory_space<vmem>>, vector<8x128xf32>
    %cst_71 = arith.constant dense<0.000000e+00> : vector<8x512xf32>
    %133 = tpu.matmul %132, %15, %cst_71 {dimension_numbers = #tpu.dot_dimension_numbers<[1], [0], [0], [1], [0, 0, 1, 1], [], []>} : vector<8x128xf32>, vector<128x512xf32>, vector<8x512xf32> -> vector<8x512xf32>
    %134 = arith.addf %131, %133 : vector<8x512xf32>
    %c0_72 = arith.constant 0 : index
    %c0_73 = arith.constant 0 : index
    %135 = vector.load %arg11[%c0_72, %c0_73] : memref<8x128xf32, #tpu.memory_space<vmem>>, vector<8x128xf32>
    %136 = vector.extract_strided_slice %134 {offsets = [0, 0], sizes = [8, 128], strides = [1, 1]} : vector<8x512xf32> to vector<8x128xf32>
    %137 = arith.negf %136 : vector<8x128xf32>
    %138 = math.exp %137 : vector<8x128xf32>
    %cst_74 = arith.constant 1.000000e+00 : f32
    %139 = vector.broadcast %cst_74 : f32 to vector<8x128xf32>
    %140 = arith.addf %139, %138 : vector<8x128xf32>
    %141 = arith.divf %139, %140 : vector<8x128xf32>
    %142 = vector.extract_strided_slice %134 {offsets = [0, 128], sizes = [8, 128], strides = [1, 1]} : vector<8x512xf32> to vector<8x128xf32>
    %143 = arith.negf %142 : vector<8x128xf32>
    %144 = math.exp %143 : vector<8x128xf32>
    %cst_75 = arith.constant 1.000000e+00 : f32
    %145 = vector.broadcast %cst_75 : f32 to vector<8x128xf32>
    %146 = arith.addf %145, %144 : vector<8x128xf32>
    %147 = arith.divf %145, %146 : vector<8x128xf32>
    %148 = vector.extract_strided_slice %134 {offsets = [0, 256], sizes = [8, 128], strides = [1, 1]} : vector<8x512xf32> to vector<8x128xf32>
    %149 = math.tanh %148 : vector<8x128xf32>
    %150 = vector.extract_strided_slice %134 {offsets = [0, 384], sizes = [8, 128], strides = [1, 1]} : vector<8x512xf32> to vector<8x128xf32>
    %151 = arith.negf %150 : vector<8x128xf32>
    %152 = math.exp %151 : vector<8x128xf32>
    %cst_76 = arith.constant 1.000000e+00 : f32
    %153 = vector.broadcast %cst_76 : f32 to vector<8x128xf32>
    %154 = arith.addf %153, %152 : vector<8x128xf32>
    %155 = arith.divf %153, %154 : vector<8x128xf32>
    %156 = arith.mulf %147, %135 : vector<8x128xf32>
    %157 = arith.mulf %141, %149 : vector<8x128xf32>
    %158 = arith.addf %156, %157 : vector<8x128xf32>
    %159 = math.tanh %158 : vector<8x128xf32>
    %160 = arith.mulf %155, %159 : vector<8x128xf32>
    %c0_77 = arith.constant 0 : index
    %c0_78 = arith.constant 0 : index
    %161 = vector.load %arg10[%c0_77, %c0_78] : memref<8x128xf32, #tpu.memory_space<vmem>>, vector<8x128xf32>
    tpu.vector_store %arg10[%c0_77, %c0_78], %160 {strides = array<i32>} : memref<8x128xf32, #tpu.memory_space<vmem>>, vector<8x128xf32>,
    %c0_79 = arith.constant 0 : index
    %c0_80 = arith.constant 0 : index
    %162 = vector.load %arg11[%c0_79, %c0_80] : memref<8x128xf32, #tpu.memory_space<vmem>>, vector<8x128xf32>
    tpu.vector_store %arg11[%c0_79, %c0_80], %158 {strides = array<i32>} : memref<8x128xf32, #tpu.memory_space<vmem>>, vector<8x128xf32>,
    %163 = arith.index_cast %129 : i32 to index
    %c0_81 = arith.constant 0 : index
    %164 = vector.load %arg14[%163, %c0_81] : memref<64x128xf32, #tpu.memory_space<vmem>>, vector<8x128xf32>
    tpu.vector_store %arg14[%163, %c0_81], %160 {strides = array<i32>} : memref<64x128xf32, #tpu.memory_space<vmem>>, vector<8x128xf32>,
    %c4_i32 = arith.constant 4 : i32
    %c8_i32_82 = arith.constant 8 : i32
    %165 = arith.muli %c4_i32, %c8_i32_82 : i32
    %166 = tpu.assume_multiple %165, 8 : i32
    %167 = arith.index_cast %166 : i32 to index
    %c0_83 = arith.constant 0 : index
    %168 = vector.load %arg9[%167, %c0_83] : memref<64x1024xf32, #tpu.memory_space<vmem>>, vector<8x512xf32>
    %c0_84 = arith.constant 0 : index
    %c0_85 = arith.constant 0 : index
    %169 = vector.load %arg10[%c0_84, %c0_85] : memref<8x128xf32, #tpu.memory_space<vmem>>, vector<8x128xf32>
    %cst_86 = arith.constant dense<0.000000e+00> : vector<8x512xf32>
    %170 = tpu.matmul %169, %15, %cst_86 {dimension_numbers = #tpu.dot_dimension_numbers<[1], [0], [0], [1], [0, 0, 1, 1], [], []>} : vector<8x128xf32>, vector<128x512xf32>, vector<8x512xf32> -> vector<8x512xf32>
    %171 = arith.addf %168, %170 : vector<8x512xf32>
    %c0_87 = arith.constant 0 : index
    %c0_88 = arith.constant 0 : index
    %172 = vector.load %arg11[%c0_87, %c0_88] : memref<8x128xf32, #tpu.memory_space<vmem>>, vector<8x128xf32>
    %173 = vector.extract_strided_slice %171 {offsets = [0, 0], sizes = [8, 128], strides = [1, 1]} : vector<8x512xf32> to vector<8x128xf32>
    %174 = arith.negf %173 : vector<8x128xf32>
    %175 = math.exp %174 : vector<8x128xf32>
    %cst_89 = arith.constant 1.000000e+00 : f32
    %176 = vector.broadcast %cst_89 : f32 to vector<8x128xf32>
    %177 = arith.addf %176, %175 : vector<8x128xf32>
    %178 = arith.divf %176, %177 : vector<8x128xf32>
    %179 = vector.extract_strided_slice %171 {offsets = [0, 128], sizes = [8, 128], strides = [1, 1]} : vector<8x512xf32> to vector<8x128xf32>
    %180 = arith.negf %179 : vector<8x128xf32>
    %181 = math.exp %180 : vector<8x128xf32>
    %cst_90 = arith.constant 1.000000e+00 : f32
    %182 = vector.broadcast %cst_90 : f32 to vector<8x128xf32>
    %183 = arith.addf %182, %181 : vector<8x128xf32>
    %184 = arith.divf %182, %183 : vector<8x128xf32>
    %185 = vector.extract_strided_slice %171 {offsets = [0, 256], sizes = [8, 128], strides = [1, 1]} : vector<8x512xf32> to vector<8x128xf32>
    %186 = math.tanh %185 : vector<8x128xf32>
    %187 = vector.extract_strided_slice %171 {offsets = [0, 384], sizes = [8, 128], strides = [1, 1]} : vector<8x512xf32> to vector<8x128xf32>
    %188 = arith.negf %187 : vector<8x128xf32>
    %189 = math.exp %188 : vector<8x128xf32>
    %cst_91 = arith.constant 1.000000e+00 : f32
    %190 = vector.broadcast %cst_91 : f32 to vector<8x128xf32>
    %191 = arith.addf %190, %189 : vector<8x128xf32>
    %192 = arith.divf %190, %191 : vector<8x128xf32>
    %193 = arith.mulf %184, %172 : vector<8x128xf32>
    %194 = arith.mulf %178, %186 : vector<8x128xf32>
    %195 = arith.addf %193, %194 : vector<8x128xf32>
    %196 = math.tanh %195 : vector<8x128xf32>
    %197 = arith.mulf %192, %196 : vector<8x128xf32>
    %c0_92 = arith.constant 0 : index
    %c0_93 = arith.constant 0 : index
    %198 = vector.load %arg10[%c0_92, %c0_93] : memref<8x128xf32, #tpu.memory_space<vmem>>, vector<8x128xf32>
    tpu.vector_store %arg10[%c0_92, %c0_93], %197 {strides = array<i32>} : memref<8x128xf32, #tpu.memory_space<vmem>>, vector<8x128xf32>,
    %c0_94 = arith.constant 0 : index
    %c0_95 = arith.constant 0 : index
    %199 = vector.load %arg11[%c0_94, %c0_95] : memref<8x128xf32, #tpu.memory_space<vmem>>, vector<8x128xf32>
    tpu.vector_store %arg11[%c0_94, %c0_95], %195 {strides = array<i32>} : memref<8x128xf32, #tpu.memory_space<vmem>>, vector<8x128xf32>,
    %200 = arith.index_cast %166 : i32 to index
    %c0_96 = arith.constant 0 : index
    %201 = vector.load %arg14[%200, %c0_96] : memref<64x128xf32, #tpu.memory_space<vmem>>, vector<8x128xf32>
    tpu.vector_store %arg14[%200, %c0_96], %197 {strides = array<i32>} : memref<64x128xf32, #tpu.memory_space<vmem>>, vector<8x128xf32>,
    %c5_i32 = arith.constant 5 : i32
    %c8_i32_97 = arith.constant 8 : i32
    %202 = arith.muli %c5_i32, %c8_i32_97 : i32
    %203 = tpu.assume_multiple %202, 8 : i32
    %204 = arith.index_cast %203 : i32 to index
    %c0_98 = arith.constant 0 : index
    %205 = vector.load %arg9[%204, %c0_98] : memref<64x1024xf32, #tpu.memory_space<vmem>>, vector<8x512xf32>
    %c0_99 = arith.constant 0 : index
    %c0_100 = arith.constant 0 : index
    %206 = vector.load %arg10[%c0_99, %c0_100] : memref<8x128xf32, #tpu.memory_space<vmem>>, vector<8x128xf32>
    %cst_101 = arith.constant dense<0.000000e+00> : vector<8x512xf32>
    %207 = tpu.matmul %206, %15, %cst_101 {dimension_numbers = #tpu.dot_dimension_numbers<[1], [0], [0], [1], [0, 0, 1, 1], [], []>} : vector<8x128xf32>, vector<128x512xf32>, vector<8x512xf32> -> vector<8x512xf32>
    %208 = arith.addf %205, %207 : vector<8x512xf32>
    %c0_102 = arith.constant 0 : index
    %c0_103 = arith.constant 0 : index
    %209 = vector.load %arg11[%c0_102, %c0_103] : memref<8x128xf32, #tpu.memory_space<vmem>>, vector<8x128xf32>
    %210 = vector.extract_strided_slice %208 {offsets = [0, 0], sizes = [8, 128], strides = [1, 1]} : vector<8x512xf32> to vector<8x128xf32>
    %211 = arith.negf %210 : vector<8x128xf32>
    %212 = math.exp %211 : vector<8x128xf32>
    %cst_104 = arith.constant 1.000000e+00 : f32
    %213 = vector.broadcast %cst_104 : f32 to vector<8x128xf32>
    %214 = arith.addf %213, %212 : vector<8x128xf32>
    %215 = arith.divf %213, %214 : vector<8x128xf32>
    %216 = vector.extract_strided_slice %208 {offsets = [0, 128], sizes = [8, 128], strides = [1, 1]} : vector<8x512xf32> to vector<8x128xf32>
    %217 = arith.negf %216 : vector<8x128xf32>
    %218 = math.exp %217 : vector<8x128xf32>
    %cst_105 = arith.constant 1.000000e+00 : f32
    %219 = vector.broadcast %cst_105 : f32 to vector<8x128xf32>
    %220 = arith.addf %219, %218 : vector<8x128xf32>
    %221 = arith.divf %219, %220 : vector<8x128xf32>
    %222 = vector.extract_strided_slice %208 {offsets = [0, 256], sizes = [8, 128], strides = [1, 1]} : vector<8x512xf32> to vector<8x128xf32>
    %223 = math.tanh %222 : vector<8x128xf32>
    %224 = vector.extract_strided_slice %208 {offsets = [0, 384], sizes = [8, 128], strides = [1, 1]} : vector<8x512xf32> to vector<8x128xf32>
    %225 = arith.negf %224 : vector<8x128xf32>
    %226 = math.exp %225 : vector<8x128xf32>
    %cst_106 = arith.constant 1.000000e+00 : f32
    %227 = vector.broadcast %cst_106 : f32 to vector<8x128xf32>
    %228 = arith.addf %227, %226 : vector<8x128xf32>
    %229 = arith.divf %227, %228 : vector<8x128xf32>
    %230 = arith.mulf %221, %209 : vector<8x128xf32>
    %231 = arith.mulf %215, %223 : vector<8x128xf32>
    %232 = arith.addf %230, %231 : vector<8x128xf32>
    %233 = math.tanh %232 : vector<8x128xf32>
    %234 = arith.mulf %229, %233 : vector<8x128xf32>
    %c0_107 = arith.constant 0 : index
    %c0_108 = arith.constant 0 : index
    %235 = vector.load %arg10[%c0_107, %c0_108] : memref<8x128xf32, #tpu.memory_space<vmem>>, vector<8x128xf32>
    tpu.vector_store %arg10[%c0_107, %c0_108], %234 {strides = array<i32>} : memref<8x128xf32, #tpu.memory_space<vmem>>, vector<8x128xf32>,
    %c0_109 = arith.constant 0 : index
    %c0_110 = arith.constant 0 : index
    %236 = vector.load %arg11[%c0_109, %c0_110] : memref<8x128xf32, #tpu.memory_space<vmem>>, vector<8x128xf32>
    tpu.vector_store %arg11[%c0_109, %c0_110], %232 {strides = array<i32>} : memref<8x128xf32, #tpu.memory_space<vmem>>, vector<8x128xf32>,
    %237 = arith.index_cast %203 : i32 to index
    %c0_111 = arith.constant 0 : index
    %238 = vector.load %arg14[%237, %c0_111] : memref<64x128xf32, #tpu.memory_space<vmem>>, vector<8x128xf32>
    tpu.vector_store %arg14[%237, %c0_111], %234 {strides = array<i32>} : memref<64x128xf32, #tpu.memory_space<vmem>>, vector<8x128xf32>,
    %c6_i32 = arith.constant 6 : i32
    %c8_i32_112 = arith.constant 8 : i32
    %239 = arith.muli %c6_i32, %c8_i32_112 : i32
    %240 = tpu.assume_multiple %239, 8 : i32
    %241 = arith.index_cast %240 : i32 to index
    %c0_113 = arith.constant 0 : index
    %242 = vector.load %arg9[%241, %c0_113] : memref<64x1024xf32, #tpu.memory_space<vmem>>, vector<8x512xf32>
    %c0_114 = arith.constant 0 : index
    %c0_115 = arith.constant 0 : index
    %243 = vector.load %arg10[%c0_114, %c0_115] : memref<8x128xf32, #tpu.memory_space<vmem>>, vector<8x128xf32>
    %cst_116 = arith.constant dense<0.000000e+00> : vector<8x512xf32>
    %244 = tpu.matmul %243, %15, %cst_116 {dimension_numbers = #tpu.dot_dimension_numbers<[1], [0], [0], [1], [0, 0, 1, 1], [], []>} : vector<8x128xf32>, vector<128x512xf32>, vector<8x512xf32> -> vector<8x512xf32>
    %245 = arith.addf %242, %244 : vector<8x512xf32>
    %c0_117 = arith.constant 0 : index
    %c0_118 = arith.constant 0 : index
    %246 = vector.load %arg11[%c0_117, %c0_118] : memref<8x128xf32, #tpu.memory_space<vmem>>, vector<8x128xf32>
    %247 = vector.extract_strided_slice %245 {offsets = [0, 0], sizes = [8, 128], strides = [1, 1]} : vector<8x512xf32> to vector<8x128xf32>
    %248 = arith.negf %247 : vector<8x128xf32>
    %249 = math.exp %248 : vector<8x128xf32>
    %cst_119 = arith.constant 1.000000e+00 : f32
    %250 = vector.broadcast %cst_119 : f32 to vector<8x128xf32>
    %251 = arith.addf %250, %249 : vector<8x128xf32>
    %252 = arith.divf %250, %251 : vector<8x128xf32>
    %253 = vector.extract_strided_slice %245 {offsets = [0, 128], sizes = [8, 128], strides = [1, 1]} : vector<8x512xf32> to vector<8x128xf32>
    %254 = arith.negf %253 : vector<8x128xf32>
    %255 = math.exp %254 : vector<8x128xf32>
    %cst_120 = arith.constant 1.000000e+00 : f32
    %256 = vector.broadcast %cst_120 : f32 to vector<8x128xf32>
    %257 = arith.addf %256, %255 : vector<8x128xf32>
    %258 = arith.divf %256, %257 : vector<8x128xf32>
    %259 = vector.extract_strided_slice %245 {offsets = [0, 256], sizes = [8, 128], strides = [1, 1]} : vector<8x512xf32> to vector<8x128xf32>
    %260 = math.tanh %259 : vector<8x128xf32>
    %261 = vector.extract_strided_slice %245 {offsets = [0, 384], sizes = [8, 128], strides = [1, 1]} : vector<8x512xf32> to vector<8x128xf32>
    %262 = arith.negf %261 : vector<8x128xf32>
    %263 = math.exp %262 : vector<8x128xf32>
    %cst_121 = arith.constant 1.000000e+00 : f32
    %264 = vector.broadcast %cst_121 : f32 to vector<8x128xf32>
    %265 = arith.addf %264, %263 : vector<8x128xf32>
    %266 = arith.divf %264, %265 : vector<8x128xf32>
    %267 = arith.mulf %258, %246 : vector<8x128xf32>
    %268 = arith.mulf %252, %260 : vector<8x128xf32>
    %269 = arith.addf %267, %268 : vector<8x128xf32>
    %270 = math.tanh %269 : vector<8x128xf32>
    %271 = arith.mulf %266, %270 : vector<8x128xf32>
    %c0_122 = arith.constant 0 : index
    %c0_123 = arith.constant 0 : index
    %272 = vector.load %arg10[%c0_122, %c0_123] : memref<8x128xf32, #tpu.memory_space<vmem>>, vector<8x128xf32>
    tpu.vector_store %arg10[%c0_122, %c0_123], %271 {strides = array<i32>} : memref<8x128xf32, #tpu.memory_space<vmem>>, vector<8x128xf32>,
    %c0_124 = arith.constant 0 : index
    %c0_125 = arith.constant 0 : index
    %273 = vector.load %arg11[%c0_124, %c0_125] : memref<8x128xf32, #tpu.memory_space<vmem>>, vector<8x128xf32>
    tpu.vector_store %arg11[%c0_124, %c0_125], %269 {strides = array<i32>} : memref<8x128xf32, #tpu.memory_space<vmem>>, vector<8x128xf32>,
    %274 = arith.index_cast %240 : i32 to index
    %c0_126 = arith.constant 0 : index
    %275 = vector.load %arg14[%274, %c0_126] : memref<64x128xf32, #tpu.memory_space<vmem>>, vector<8x128xf32>
    tpu.vector_store %arg14[%274, %c0_126], %271 {strides = array<i32>} : memref<64x128xf32, #tpu.memory_space<vmem>>, vector<8x128xf32>,
    %c7_i32 = arith.constant 7 : i32
    %c8_i32_127 = arith.constant 8 : i32
    %276 = arith.muli %c7_i32, %c8_i32_127 : i32
    %277 = tpu.assume_multiple %276, 8 : i32
    %278 = arith.index_cast %277 : i32 to index
    %c0_128 = arith.constant 0 : index
    %279 = vector.load %arg9[%278, %c0_128] : memref<64x1024xf32, #tpu.memory_space<vmem>>, vector<8x512xf32>
    %c0_129 = arith.constant 0 : index
    %c0_130 = arith.constant 0 : index
    %280 = vector.load %arg10[%c0_129, %c0_130] : memref<8x128xf32, #tpu.memory_space<vmem>>, vector<8x128xf32>
    %cst_131 = arith.constant dense<0.000000e+00> : vector<8x512xf32>
    %281 = tpu.matmul %280, %15, %cst_131 {dimension_numbers = #tpu.dot_dimension_numbers<[1], [0], [0], [1], [0, 0, 1, 1], [], []>} : vector<8x128xf32>, vector<128x512xf32>, vector<8x512xf32> -> vector<8x512xf32>
    %282 = arith.addf %279, %281 : vector<8x512xf32>
    %c0_132 = arith.constant 0 : index
    %c0_133 = arith.constant 0 : index
    %283 = vector.load %arg11[%c0_132, %c0_133] : memref<8x128xf32, #tpu.memory_space<vmem>>, vector<8x128xf32>
    %284 = vector.extract_strided_slice %282 {offsets = [0, 0], sizes = [8, 128], strides = [1, 1]} : vector<8x512xf32> to vector<8x128xf32>
    %285 = arith.negf %284 : vector<8x128xf32>
    %286 = math.exp %285 : vector<8x128xf32>
    %cst_134 = arith.constant 1.000000e+00 : f32
    %287 = vector.broadcast %cst_134 : f32 to vector<8x128xf32>
    %288 = arith.addf %287, %286 : vector<8x128xf32>
    %289 = arith.divf %287, %288 : vector<8x128xf32>
    %290 = vector.extract_strided_slice %282 {offsets = [0, 128], sizes = [8, 128], strides = [1, 1]} : vector<8x512xf32> to vector<8x128xf32>
    %291 = arith.negf %290 : vector<8x128xf32>
    %292 = math.exp %291 : vector<8x128xf32>
    %cst_135 = arith.constant 1.000000e+00 : f32
    %293 = vector.broadcast %cst_135 : f32 to vector<8x128xf32>
    %294 = arith.addf %293, %292 : vector<8x128xf32>
    %295 = arith.divf %293, %294 : vector<8x128xf32>
    %296 = vector.extract_strided_slice %282 {offsets = [0, 256], sizes = [8, 128], strides = [1, 1]} : vector<8x512xf32> to vector<8x128xf32>
    %297 = math.tanh %296 : vector<8x128xf32>
    %298 = vector.extract_strided_slice %282 {offsets = [0, 384], sizes = [8, 128], strides = [1, 1]} : vector<8x512xf32> to vector<8x128xf32>
    %299 = arith.negf %298 : vector<8x128xf32>
    %300 = math.exp %299 : vector<8x128xf32>
    %cst_136 = arith.constant 1.000000e+00 : f32
    %301 = vector.broadcast %cst_136 : f32 to vector<8x128xf32>
    %302 = arith.addf %301, %300 : vector<8x128xf32>
    %303 = arith.divf %301, %302 : vector<8x128xf32>
    %304 = arith.mulf %295, %283 : vector<8x128xf32>
    %305 = arith.mulf %289, %297 : vector<8x128xf32>
    %306 = arith.addf %304, %305 : vector<8x128xf32>
    %307 = math.tanh %306 : vector<8x128xf32>
    %308 = arith.mulf %303, %307 : vector<8x128xf32>
    %c0_137 = arith.constant 0 : index
    %c0_138 = arith.constant 0 : index
    %309 = vector.load %arg10[%c0_137, %c0_138] : memref<8x128xf32, #tpu.memory_space<vmem>>, vector<8x128xf32>
    tpu.vector_store %arg10[%c0_137, %c0_138], %308 {strides = array<i32>} : memref<8x128xf32, #tpu.memory_space<vmem>>, vector<8x128xf32>,
    %c0_139 = arith.constant 0 : index
    %c0_140 = arith.constant 0 : index
    %310 = vector.load %arg11[%c0_139, %c0_140] : memref<8x128xf32, #tpu.memory_space<vmem>>, vector<8x128xf32>
    tpu.vector_store %arg11[%c0_139, %c0_140], %306 {strides = array<i32>} : memref<8x128xf32, #tpu.memory_space<vmem>>, vector<8x128xf32>,
    %311 = arith.index_cast %277 : i32 to index
    %c0_141 = arith.constant 0 : index
    %312 = vector.load %arg14[%311, %c0_141] : memref<64x128xf32, #tpu.memory_space<vmem>>, vector<8x128xf32>
    tpu.vector_store %arg14[%311, %c0_141], %308 {strides = array<i32>} : memref<64x128xf32, #tpu.memory_space<vmem>>, vector<8x128xf32>,
    %c8_i32_142 = arith.constant 8 : i32
    %c0_i32_143 = arith.constant 0 : i32
    %c7_i32_144 = arith.constant 7 : i32
    %313 = arith.subi %c7_i32_144, %c0_i32_143 : i32
    %c8_i32_145 = arith.constant 8 : i32
    %314 = arith.muli %313, %c8_i32_145 : i32
    %315 = tpu.assume_multiple %314, 8 : i32
    %316 = arith.index_cast %315 : i32 to index
    %c512 = arith.constant 512 : index
    %317 = vector.load %arg9[%316, %c512] : memref<64x1024xf32, #tpu.memory_space<vmem>>, vector<8x512xf32>
    %c0_146 = arith.constant 0 : index
    %c0_147 = arith.constant 0 : index
    %318 = vector.load %arg12[%c0_146, %c0_147] : memref<8x128xf32, #tpu.memory_space<vmem>>, vector<8x128xf32>
    %cst_148 = arith.constant dense<0.000000e+00> : vector<8x512xf32>
    %319 = tpu.matmul %318, %16, %cst_148 {dimension_numbers = #tpu.dot_dimension_numbers<[1], [0], [0], [1], [0, 0, 1, 1], [], []>} : vector<8x128xf32>, vector<128x512xf32>, vector<8x512xf32> -> vector<8x512xf32>
    %320 = arith.addf %317, %319 : vector<8x512xf32>
    %c0_149 = arith.constant 0 : index
    %c0_150 = arith.constant 0 : index
    %321 = vector.load %arg13[%c0_149, %c0_150] : memref<8x128xf32, #tpu.memory_space<vmem>>, vector<8x128xf32>
    %322 = vector.extract_strided_slice %320 {offsets = [0, 0], sizes = [8, 128], strides = [1, 1]} : vector<8x512xf32> to vector<8x128xf32>
    %323 = arith.negf %322 : vector<8x128xf32>
    %324 = math.exp %323 : vector<8x128xf32>
    %cst_151 = arith.constant 1.000000e+00 : f32
    %325 = vector.broadcast %cst_151 : f32 to vector<8x128xf32>
    %326 = arith.addf %325, %324 : vector<8x128xf32>
    %327 = arith.divf %325, %326 : vector<8x128xf32>
    %328 = vector.extract_strided_slice %320 {offsets = [0, 128], sizes = [8, 128], strides = [1, 1]} : vector<8x512xf32> to vector<8x128xf32>
    %329 = arith.negf %328 : vector<8x128xf32>
    %330 = math.exp %329 : vector<8x128xf32>
    %cst_152 = arith.constant 1.000000e+00 : f32
    %331 = vector.broadcast %cst_152 : f32 to vector<8x128xf32>
    %332 = arith.addf %331, %330 : vector<8x128xf32>
    %333 = arith.divf %331, %332 : vector<8x128xf32>
    %334 = vector.extract_strided_slice %320 {offsets = [0, 256], sizes = [8, 128], strides = [1, 1]} : vector<8x512xf32> to vector<8x128xf32>
    %335 = math.tanh %334 : vector<8x128xf32>
    %336 = vector.extract_strided_slice %320 {offsets = [0, 384], sizes = [8, 128], strides = [1, 1]} : vector<8x512xf32> to vector<8x128xf32>
    %337 = arith.negf %336 : vector<8x128xf32>
    %338 = math.exp %337 : vector<8x128xf32>
    %cst_153 = arith.constant 1.000000e+00 : f32
    %339 = vector.broadcast %cst_153 : f32 to vector<8x128xf32>
    %340 = arith.addf %339, %338 : vector<8x128xf32>
    %341 = arith.divf %339, %340 : vector<8x128xf32>
    %342 = arith.mulf %333, %321 : vector<8x128xf32>
    %343 = arith.mulf %327, %335 : vector<8x128xf32>
    %344 = arith.addf %342, %343 : vector<8x128xf32>
    %345 = math.tanh %344 : vector<8x128xf32>
    %346 = arith.mulf %341, %345 : vector<8x128xf32>
    %c0_154 = arith.constant 0 : index
    %c0_155 = arith.constant 0 : index
    %347 = vector.load %arg12[%c0_154, %c0_155] : memref<8x128xf32, #tpu.memory_space<vmem>>, vector<8x128xf32>
    tpu.vector_store %arg12[%c0_154, %c0_155], %346 {strides = array<i32>} : memref<8x128xf32, #tpu.memory_space<vmem>>, vector<8x128xf32>,
    %c0_156 = arith.constant 0 : index
    %c0_157 = arith.constant 0 : index
    %348 = vector.load %arg13[%c0_156, %c0_157] : memref<8x128xf32, #tpu.memory_space<vmem>>, vector<8x128xf32>
    tpu.vector_store %arg13[%c0_156, %c0_157], %344 {strides = array<i32>} : memref<8x128xf32, #tpu.memory_space<vmem>>, vector<8x128xf32>,
    %349 = arith.index_cast %315 : i32 to index
    %c0_158 = arith.constant 0 : index
    %350 = vector.load %arg15[%349, %c0_158] : memref<64x128xf32, #tpu.memory_space<vmem>>, vector<8x128xf32>
    tpu.vector_store %arg15[%349, %c0_158], %346 {strides = array<i32>} : memref<64x128xf32, #tpu.memory_space<vmem>>, vector<8x128xf32>,
    %c1_i32_159 = arith.constant 1 : i32
    %c7_i32_160 = arith.constant 7 : i32
    %351 = arith.subi %c7_i32_160, %c1_i32_159 : i32
    %c8_i32_161 = arith.constant 8 : i32
    %352 = arith.muli %351, %c8_i32_161 : i32
    %353 = tpu.assume_multiple %352, 8 : i32
    %354 = arith.index_cast %353 : i32 to index
    %c512_162 = arith.constant 512 : index
    %355 = vector.load %arg9[%354, %c512_162] : memref<64x1024xf32, #tpu.memory_space<vmem>>, vector<8x512xf32>
    %c0_163 = arith.constant 0 : index
    %c0_164 = arith.constant 0 : index
    %356 = vector.load %arg12[%c0_163, %c0_164] : memref<8x128xf32, #tpu.memory_space<vmem>>, vector<8x128xf32>
    %cst_165 = arith.constant dense<0.000000e+00> : vector<8x512xf32>
    %357 = tpu.matmul %356, %16, %cst_165 {dimension_numbers = #tpu.dot_dimension_numbers<[1], [0], [0], [1], [0, 0, 1, 1], [], []>} : vector<8x128xf32>, vector<128x512xf32>, vector<8x512xf32> -> vector<8x512xf32>
    %358 = arith.addf %355, %357 : vector<8x512xf32>
    %c0_166 = arith.constant 0 : index
    %c0_167 = arith.constant 0 : index
    %359 = vector.load %arg13[%c0_166, %c0_167] : memref<8x128xf32, #tpu.memory_space<vmem>>, vector<8x128xf32>
    %360 = vector.extract_strided_slice %358 {offsets = [0, 0], sizes = [8, 128], strides = [1, 1]} : vector<8x512xf32> to vector<8x128xf32>
    %361 = arith.negf %360 : vector<8x128xf32>
    %362 = math.exp %361 : vector<8x128xf32>
    %cst_168 = arith.constant 1.000000e+00 : f32
    %363 = vector.broadcast %cst_168 : f32 to vector<8x128xf32>
    %364 = arith.addf %363, %362 : vector<8x128xf32>
    %365 = arith.divf %363, %364 : vector<8x128xf32>
    %366 = vector.extract_strided_slice %358 {offsets = [0, 128], sizes = [8, 128], strides = [1, 1]} : vector<8x512xf32> to vector<8x128xf32>
    %367 = arith.negf %366 : vector<8x128xf32>
    %368 = math.exp %367 : vector<8x128xf32>
    %cst_169 = arith.constant 1.000000e+00 : f32
    %369 = vector.broadcast %cst_169 : f32 to vector<8x128xf32>
    %370 = arith.addf %369, %368 : vector<8x128xf32>
    %371 = arith.divf %369, %370 : vector<8x128xf32>
    %372 = vector.extract_strided_slice %358 {offsets = [0, 256], sizes = [8, 128], strides = [1, 1]} : vector<8x512xf32> to vector<8x128xf32>
    %373 = math.tanh %372 : vector<8x128xf32>
    %374 = vector.extract_strided_slice %358 {offsets = [0, 384], sizes = [8, 128], strides = [1, 1]} : vector<8x512xf32> to vector<8x128xf32>
    %375 = arith.negf %374 : vector<8x128xf32>
    %376 = math.exp %375 : vector<8x128xf32>
    %cst_170 = arith.constant 1.000000e+00 : f32
    %377 = vector.broadcast %cst_170 : f32 to vector<8x128xf32>
    %378 = arith.addf %377, %376 : vector<8x128xf32>
    %379 = arith.divf %377, %378 : vector<8x128xf32>
    %380 = arith.mulf %371, %359 : vector<8x128xf32>
    %381 = arith.mulf %365, %373 : vector<8x128xf32>
    %382 = arith.addf %380, %381 : vector<8x128xf32>
    %383 = math.tanh %382 : vector<8x128xf32>
    %384 = arith.mulf %379, %383 : vector<8x128xf32>
    %c0_171 = arith.constant 0 : index
    %c0_172 = arith.constant 0 : index
    %385 = vector.load %arg12[%c0_171, %c0_172] : memref<8x128xf32, #tpu.memory_space<vmem>>, vector<8x128xf32>
    tpu.vector_store %arg12[%c0_171, %c0_172], %384 {strides = array<i32>} : memref<8x128xf32, #tpu.memory_space<vmem>>, vector<8x128xf32>,
    %c0_173 = arith.constant 0 : index
    %c0_174 = arith.constant 0 : index
    %386 = vector.load %arg13[%c0_173, %c0_174] : memref<8x128xf32, #tpu.memory_space<vmem>>, vector<8x128xf32>
    tpu.vector_store %arg13[%c0_173, %c0_174], %382 {strides = array<i32>} : memref<8x128xf32, #tpu.memory_space<vmem>>, vector<8x128xf32>,
    %387 = arith.index_cast %353 : i32 to index
    %c0_175 = arith.constant 0 : index
    %388 = vector.load %arg15[%387, %c0_175] : memref<64x128xf32, #tpu.memory_space<vmem>>, vector<8x128xf32>
    tpu.vector_store %arg15[%387, %c0_175], %384 {strides = array<i32>} : memref<64x128xf32, #tpu.memory_space<vmem>>, vector<8x128xf32>,
    %c2_i32_176 = arith.constant 2 : i32
    %c7_i32_177 = arith.constant 7 : i32
    %389 = arith.subi %c7_i32_177, %c2_i32_176 : i32
    %c8_i32_178 = arith.constant 8 : i32
    %390 = arith.muli %389, %c8_i32_178 : i32
    %391 = tpu.assume_multiple %390, 8 : i32
    %392 = arith.index_cast %391 : i32 to index
    %c512_179 = arith.constant 512 : index
    %393 = vector.load %arg9[%392, %c512_179] : memref<64x1024xf32, #tpu.memory_space<vmem>>, vector<8x512xf32>
    %c0_180 = arith.constant 0 : index
    %c0_181 = arith.constant 0 : index
    %394 = vector.load %arg12[%c0_180, %c0_181] : memref<8x128xf32, #tpu.memory_space<vmem>>, vector<8x128xf32>
    %cst_182 = arith.constant dense<0.000000e+00> : vector<8x512xf32>
    %395 = tpu.matmul %394, %16, %cst_182 {dimension_numbers = #tpu.dot_dimension_numbers<[1], [0], [0], [1], [0, 0, 1, 1], [], []>} : vector<8x128xf32>, vector<128x512xf32>, vector<8x512xf32> -> vector<8x512xf32>
    %396 = arith.addf %393, %395 : vector<8x512xf32>
    %c0_183 = arith.constant 0 : index
    %c0_184 = arith.constant 0 : index
    %397 = vector.load %arg13[%c0_183, %c0_184] : memref<8x128xf32, #tpu.memory_space<vmem>>, vector<8x128xf32>
    %398 = vector.extract_strided_slice %396 {offsets = [0, 0], sizes = [8, 128], strides = [1, 1]} : vector<8x512xf32> to vector<8x128xf32>
    %399 = arith.negf %398 : vector<8x128xf32>
    %400 = math.exp %399 : vector<8x128xf32>
    %cst_185 = arith.constant 1.000000e+00 : f32
    %401 = vector.broadcast %cst_185 : f32 to vector<8x128xf32>
    %402 = arith.addf %401, %400 : vector<8x128xf32>
    %403 = arith.divf %401, %402 : vector<8x128xf32>
    %404 = vector.extract_strided_slice %396 {offsets = [0, 128], sizes = [8, 128], strides = [1, 1]} : vector<8x512xf32> to vector<8x128xf32>
    %405 = arith.negf %404 : vector<8x128xf32>
    %406 = math.exp %405 : vector<8x128xf32>
    %cst_186 = arith.constant 1.000000e+00 : f32
    %407 = vector.broadcast %cst_186 : f32 to vector<8x128xf32>
    %408 = arith.addf %407, %406 : vector<8x128xf32>
    %409 = arith.divf %407, %408 : vector<8x128xf32>
    %410 = vector.extract_strided_slice %396 {offsets = [0, 256], sizes = [8, 128], strides = [1, 1]} : vector<8x512xf32> to vector<8x128xf32>
    %411 = math.tanh %410 : vector<8x128xf32>
    %412 = vector.extract_strided_slice %396 {offsets = [0, 384], sizes = [8, 128], strides = [1, 1]} : vector<8x512xf32> to vector<8x128xf32>
    %413 = arith.negf %412 : vector<8x128xf32>
    %414 = math.exp %413 : vector<8x128xf32>
    %cst_187 = arith.constant 1.000000e+00 : f32
    %415 = vector.broadcast %cst_187 : f32 to vector<8x128xf32>
    %416 = arith.addf %415, %414 : vector<8x128xf32>
    %417 = arith.divf %415, %416 : vector<8x128xf32>
    %418 = arith.mulf %409, %397 : vector<8x128xf32>
    %419 = arith.mulf %403, %411 : vector<8x128xf32>
    %420 = arith.addf %418, %419 : vector<8x128xf32>
    %421 = math.tanh %420 : vector<8x128xf32>
    %422 = arith.mulf %417, %421 : vector<8x128xf32>
    %c0_188 = arith.constant 0 : index
    %c0_189 = arith.constant 0 : index
    %423 = vector.load %arg12[%c0_188, %c0_189] : memref<8x128xf32, #tpu.memory_space<vmem>>, vector<8x128xf32>
    tpu.vector_store %arg12[%c0_188, %c0_189], %422 {strides = array<i32>} : memref<8x128xf32, #tpu.memory_space<vmem>>, vector<8x128xf32>,
    %c0_190 = arith.constant 0 : index
    %c0_191 = arith.constant 0 : index
    %424 = vector.load %arg13[%c0_190, %c0_191] : memref<8x128xf32, #tpu.memory_space<vmem>>, vector<8x128xf32>
    tpu.vector_store %arg13[%c0_190, %c0_191], %420 {strides = array<i32>} : memref<8x128xf32, #tpu.memory_space<vmem>>, vector<8x128xf32>,
    %425 = arith.index_cast %391 : i32 to index
    %c0_192 = arith.constant 0 : index
    %426 = vector.load %arg15[%425, %c0_192] : memref<64x128xf32, #tpu.memory_space<vmem>>, vector<8x128xf32>
    tpu.vector_store %arg15[%425, %c0_192], %422 {strides = array<i32>} : memref<64x128xf32, #tpu.memory_space<vmem>>, vector<8x128xf32>,
    %c3_i32_193 = arith.constant 3 : i32
    %c7_i32_194 = arith.constant 7 : i32
    %427 = arith.subi %c7_i32_194, %c3_i32_193 : i32
    %c8_i32_195 = arith.constant 8 : i32
    %428 = arith.muli %427, %c8_i32_195 : i32
    %429 = tpu.assume_multiple %428, 8 : i32
    %430 = arith.index_cast %429 : i32 to index
    %c512_196 = arith.constant 512 : index
    %431 = vector.load %arg9[%430, %c512_196] : memref<64x1024xf32, #tpu.memory_space<vmem>>, vector<8x512xf32>
    %c0_197 = arith.constant 0 : index
    %c0_198 = arith.constant 0 : index
    %432 = vector.load %arg12[%c0_197, %c0_198] : memref<8x128xf32, #tpu.memory_space<vmem>>, vector<8x128xf32>
    %cst_199 = arith.constant dense<0.000000e+00> : vector<8x512xf32>
    %433 = tpu.matmul %432, %16, %cst_199 {dimension_numbers = #tpu.dot_dimension_numbers<[1], [0], [0], [1], [0, 0, 1, 1], [], []>} : vector<8x128xf32>, vector<128x512xf32>, vector<8x512xf32> -> vector<8x512xf32>
    %434 = arith.addf %431, %433 : vector<8x512xf32>
    %c0_200 = arith.constant 0 : index
    %c0_201 = arith.constant 0 : index
    %435 = vector.load %arg13[%c0_200, %c0_201] : memref<8x128xf32, #tpu.memory_space<vmem>>, vector<8x128xf32>
    %436 = vector.extract_strided_slice %434 {offsets = [0, 0], sizes = [8, 128], strides = [1, 1]} : vector<8x512xf32> to vector<8x128xf32>
    %437 = arith.negf %436 : vector<8x128xf32>
    %438 = math.exp %437 : vector<8x128xf32>
    %cst_202 = arith.constant 1.000000e+00 : f32
    %439 = vector.broadcast %cst_202 : f32 to vector<8x128xf32>
    %440 = arith.addf %439, %438 : vector<8x128xf32>
    %441 = arith.divf %439, %440 : vector<8x128xf32>
    %442 = vector.extract_strided_slice %434 {offsets = [0, 128], sizes = [8, 128], strides = [1, 1]} : vector<8x512xf32> to vector<8x128xf32>
    %443 = arith.negf %442 : vector<8x128xf32>
    %444 = math.exp %443 : vector<8x128xf32>
    %cst_203 = arith.constant 1.000000e+00 : f32
    %445 = vector.broadcast %cst_203 : f32 to vector<8x128xf32>
    %446 = arith.addf %445, %444 : vector<8x128xf32>
    %447 = arith.divf %445, %446 : vector<8x128xf32>
    %448 = vector.extract_strided_slice %434 {offsets = [0, 256], sizes = [8, 128], strides = [1, 1]} : vector<8x512xf32> to vector<8x128xf32>
    %449 = math.tanh %448 : vector<8x128xf32>
    %450 = vector.extract_strided_slice %434 {offsets = [0, 384], sizes = [8, 128], strides = [1, 1]} : vector<8x512xf32> to vector<8x128xf32>
    %451 = arith.negf %450 : vector<8x128xf32>
    %452 = math.exp %451 : vector<8x128xf32>
    %cst_204 = arith.constant 1.000000e+00 : f32
    %453 = vector.broadcast %cst_204 : f32 to vector<8x128xf32>
    %454 = arith.addf %453, %452 : vector<8x128xf32>
    %455 = arith.divf %453, %454 : vector<8x128xf32>
    %456 = arith.mulf %447, %435 : vector<8x128xf32>
    %457 = arith.mulf %441, %449 : vector<8x128xf32>
    %458 = arith.addf %456, %457 : vector<8x128xf32>
    %459 = math.tanh %458 : vector<8x128xf32>
    %460 = arith.mulf %455, %459 : vector<8x128xf32>
    %c0_205 = arith.constant 0 : index
    %c0_206 = arith.constant 0 : index
    %461 = vector.load %arg12[%c0_205, %c0_206] : memref<8x128xf32, #tpu.memory_space<vmem>>, vector<8x128xf32>
    tpu.vector_store %arg12[%c0_205, %c0_206], %460 {strides = array<i32>} : memref<8x128xf32, #tpu.memory_space<vmem>>, vector<8x128xf32>,
    %c0_207 = arith.constant 0 : index
    %c0_208 = arith.constant 0 : index
    %462 = vector.load %arg13[%c0_207, %c0_208] : memref<8x128xf32, #tpu.memory_space<vmem>>, vector<8x128xf32>
    tpu.vector_store %arg13[%c0_207, %c0_208], %458 {strides = array<i32>} : memref<8x128xf32, #tpu.memory_space<vmem>>, vector<8x128xf32>,
    %463 = arith.index_cast %429 : i32 to index
    %c0_209 = arith.constant 0 : index
    %464 = vector.load %arg15[%463, %c0_209] : memref<64x128xf32, #tpu.memory_space<vmem>>, vector<8x128xf32>
    tpu.vector_store %arg15[%463, %c0_209], %460 {strides = array<i32>} : memref<64x128xf32, #tpu.memory_space<vmem>>, vector<8x128xf32>,
    %c4_i32_210 = arith.constant 4 : i32
    %c7_i32_211 = arith.constant 7 : i32
    %465 = arith.subi %c7_i32_211, %c4_i32_210 : i32
    %c8_i32_212 = arith.constant 8 : i32
    %466 = arith.muli %465, %c8_i32_212 : i32
    %467 = tpu.assume_multiple %466, 8 : i32
    %468 = arith.index_cast %467 : i32 to index
    %c512_213 = arith.constant 512 : index
    %469 = vector.load %arg9[%468, %c512_213] : memref<64x1024xf32, #tpu.memory_space<vmem>>, vector<8x512xf32>
    %c0_214 = arith.constant 0 : index
    %c0_215 = arith.constant 0 : index
    %470 = vector.load %arg12[%c0_214, %c0_215] : memref<8x128xf32, #tpu.memory_space<vmem>>, vector<8x128xf32>
    %cst_216 = arith.constant dense<0.000000e+00> : vector<8x512xf32>
    %471 = tpu.matmul %470, %16, %cst_216 {dimension_numbers = #tpu.dot_dimension_numbers<[1], [0], [0], [1], [0, 0, 1, 1], [], []>} : vector<8x128xf32>, vector<128x512xf32>, vector<8x512xf32> -> vector<8x512xf32>
    %472 = arith.addf %469, %471 : vector<8x512xf32>
    %c0_217 = arith.constant 0 : index
    %c0_218 = arith.constant 0 : index
    %473 = vector.load %arg13[%c0_217, %c0_218] : memref<8x128xf32, #tpu.memory_space<vmem>>, vector<8x128xf32>
    %474 = vector.extract_strided_slice %472 {offsets = [0, 0], sizes = [8, 128], strides = [1, 1]} : vector<8x512xf32> to vector<8x128xf32>
    %475 = arith.negf %474 : vector<8x128xf32>
    %476 = math.exp %475 : vector<8x128xf32>
    %cst_219 = arith.constant 1.000000e+00 : f32
    %477 = vector.broadcast %cst_219 : f32 to vector<8x128xf32>
    %478 = arith.addf %477, %476 : vector<8x128xf32>
    %479 = arith.divf %477, %478 : vector<8x128xf32>
    %480 = vector.extract_strided_slice %472 {offsets = [0, 128], sizes = [8, 128], strides = [1, 1]} : vector<8x512xf32> to vector<8x128xf32>
    %481 = arith.negf %480 : vector<8x128xf32>
    %482 = math.exp %481 : vector<8x128xf32>
    %cst_220 = arith.constant 1.000000e+00 : f32
    %483 = vector.broadcast %cst_220 : f32 to vector<8x128xf32>
    %484 = arith.addf %483, %482 : vector<8x128xf32>
    %485 = arith.divf %483, %484 : vector<8x128xf32>
    %486 = vector.extract_strided_slice %472 {offsets = [0, 256], sizes = [8, 128], strides = [1, 1]} : vector<8x512xf32> to vector<8x128xf32>
    %487 = math.tanh %486 : vector<8x128xf32>
    %488 = vector.extract_strided_slice %472 {offsets = [0, 384], sizes = [8, 128], strides = [1, 1]} : vector<8x512xf32> to vector<8x128xf32>
    %489 = arith.negf %488 : vector<8x128xf32>
    %490 = math.exp %489 : vector<8x128xf32>
    %cst_221 = arith.constant 1.000000e+00 : f32
    %491 = vector.broadcast %cst_221 : f32 to vector<8x128xf32>
    %492 = arith.addf %491, %490 : vector<8x128xf32>
    %493 = arith.divf %491, %492 : vector<8x128xf32>
    %494 = arith.mulf %485, %473 : vector<8x128xf32>
    %495 = arith.mulf %479, %487 : vector<8x128xf32>
    %496 = arith.addf %494, %495 : vector<8x128xf32>
    %497 = math.tanh %496 : vector<8x128xf32>
    %498 = arith.mulf %493, %497 : vector<8x128xf32>
    %c0_222 = arith.constant 0 : index
    %c0_223 = arith.constant 0 : index
    %499 = vector.load %arg12[%c0_222, %c0_223] : memref<8x128xf32, #tpu.memory_space<vmem>>, vector<8x128xf32>
    tpu.vector_store %arg12[%c0_222, %c0_223], %498 {strides = array<i32>} : memref<8x128xf32, #tpu.memory_space<vmem>>, vector<8x128xf32>,
    %c0_224 = arith.constant 0 : index
    %c0_225 = arith.constant 0 : index
    %500 = vector.load %arg13[%c0_224, %c0_225] : memref<8x128xf32, #tpu.memory_space<vmem>>, vector<8x128xf32>
    tpu.vector_store %arg13[%c0_224, %c0_225], %496 {strides = array<i32>} : memref<8x128xf32, #tpu.memory_space<vmem>>, vector<8x128xf32>,
    %501 = arith.index_cast %467 : i32 to index
    %c0_226 = arith.constant 0 : index
    %502 = vector.load %arg15[%501, %c0_226] : memref<64x128xf32, #tpu.memory_space<vmem>>, vector<8x128xf32>
    tpu.vector_store %arg15[%501, %c0_226], %498 {strides = array<i32>} : memref<64x128xf32, #tpu.memory_space<vmem>>, vector<8x128xf32>,
    %c5_i32_227 = arith.constant 5 : i32
    %c7_i32_228 = arith.constant 7 : i32
    %503 = arith.subi %c7_i32_228, %c5_i32_227 : i32
    %c8_i32_229 = arith.constant 8 : i32
    %504 = arith.muli %503, %c8_i32_229 : i32
    %505 = tpu.assume_multiple %504, 8 : i32
    %506 = arith.index_cast %505 : i32 to index
    %c512_230 = arith.constant 512 : index
    %507 = vector.load %arg9[%506, %c512_230] : memref<64x1024xf32, #tpu.memory_space<vmem>>, vector<8x512xf32>
    %c0_231 = arith.constant 0 : index
    %c0_232 = arith.constant 0 : index
    %508 = vector.load %arg12[%c0_231, %c0_232] : memref<8x128xf32, #tpu.memory_space<vmem>>, vector<8x128xf32>
    %cst_233 = arith.constant dense<0.000000e+00> : vector<8x512xf32>
    %509 = tpu.matmul %508, %16, %cst_233 {dimension_numbers = #tpu.dot_dimension_numbers<[1], [0], [0], [1], [0, 0, 1, 1], [], []>} : vector<8x128xf32>, vector<128x512xf32>, vector<8x512xf32> -> vector<8x512xf32>
    %510 = arith.addf %507, %509 : vector<8x512xf32>
    %c0_234 = arith.constant 0 : index
    %c0_235 = arith.constant 0 : index
    %511 = vector.load %arg13[%c0_234, %c0_235] : memref<8x128xf32, #tpu.memory_space<vmem>>, vector<8x128xf32>
    %512 = vector.extract_strided_slice %510 {offsets = [0, 0], sizes = [8, 128], strides = [1, 1]} : vector<8x512xf32> to vector<8x128xf32>
    %513 = arith.negf %512 : vector<8x128xf32>
    %514 = math.exp %513 : vector<8x128xf32>
    %cst_236 = arith.constant 1.000000e+00 : f32
    %515 = vector.broadcast %cst_236 : f32 to vector<8x128xf32>
    %516 = arith.addf %515, %514 : vector<8x128xf32>
    %517 = arith.divf %515, %516 : vector<8x128xf32>
    %518 = vector.extract_strided_slice %510 {offsets = [0, 128], sizes = [8, 128], strides = [1, 1]} : vector<8x512xf32> to vector<8x128xf32>
    %519 = arith.negf %518 : vector<8x128xf32>
    %520 = math.exp %519 : vector<8x128xf32>
    %cst_237 = arith.constant 1.000000e+00 : f32
    %521 = vector.broadcast %cst_237 : f32 to vector<8x128xf32>
    %522 = arith.addf %521, %520 : vector<8x128xf32>
    %523 = arith.divf %521, %522 : vector<8x128xf32>
    %524 = vector.extract_strided_slice %510 {offsets = [0, 256], sizes = [8, 128], strides = [1, 1]} : vector<8x512xf32> to vector<8x128xf32>
    %525 = math.tanh %524 : vector<8x128xf32>
    %526 = vector.extract_strided_slice %510 {offsets = [0, 384], sizes = [8, 128], strides = [1, 1]} : vector<8x512xf32> to vector<8x128xf32>
    %527 = arith.negf %526 : vector<8x128xf32>
    %528 = math.exp %527 : vector<8x128xf32>
    %cst_238 = arith.constant 1.000000e+00 : f32
    %529 = vector.broadcast %cst_238 : f32 to vector<8x128xf32>
    %530 = arith.addf %529, %528 : vector<8x128xf32>
    %531 = arith.divf %529, %530 : vector<8x128xf32>
    %532 = arith.mulf %523, %511 : vector<8x128xf32>
    %533 = arith.mulf %517, %525 : vector<8x128xf32>
    %534 = arith.addf %532, %533 : vector<8x128xf32>
    %535 = math.tanh %534 : vector<8x128xf32>
    %536 = arith.mulf %531, %535 : vector<8x128xf32>
    %c0_239 = arith.constant 0 : index
    %c0_240 = arith.constant 0 : index
    %537 = vector.load %arg12[%c0_239, %c0_240] : memref<8x128xf32, #tpu.memory_space<vmem>>, vector<8x128xf32>
    tpu.vector_store %arg12[%c0_239, %c0_240], %536 {strides = array<i32>} : memref<8x128xf32, #tpu.memory_space<vmem>>, vector<8x128xf32>,
    %c0_241 = arith.constant 0 : index
    %c0_242 = arith.constant 0 : index
    %538 = vector.load %arg13[%c0_241, %c0_242] : memref<8x128xf32, #tpu.memory_space<vmem>>, vector<8x128xf32>
    tpu.vector_store %arg13[%c0_241, %c0_242], %534 {strides = array<i32>} : memref<8x128xf32, #tpu.memory_space<vmem>>, vector<8x128xf32>,
    %539 = arith.index_cast %505 : i32 to index
    %c0_243 = arith.constant 0 : index
    %540 = vector.load %arg15[%539, %c0_243] : memref<64x128xf32, #tpu.memory_space<vmem>>, vector<8x128xf32>
    tpu.vector_store %arg15[%539, %c0_243], %536 {strides = array<i32>} : memref<64x128xf32, #tpu.memory_space<vmem>>, vector<8x128xf32>,
    %c6_i32_244 = arith.constant 6 : i32
    %c7_i32_245 = arith.constant 7 : i32
    %541 = arith.subi %c7_i32_245, %c6_i32_244 : i32
    %c8_i32_246 = arith.constant 8 : i32
    %542 = arith.muli %541, %c8_i32_246 : i32
    %543 = tpu.assume_multiple %542, 8 : i32
    %544 = arith.index_cast %543 : i32 to index
    %c512_247 = arith.constant 512 : index
    %545 = vector.load %arg9[%544, %c512_247] : memref<64x1024xf32, #tpu.memory_space<vmem>>, vector<8x512xf32>
    %c0_248 = arith.constant 0 : index
    %c0_249 = arith.constant 0 : index
    %546 = vector.load %arg12[%c0_248, %c0_249] : memref<8x128xf32, #tpu.memory_space<vmem>>, vector<8x128xf32>
    %cst_250 = arith.constant dense<0.000000e+00> : vector<8x512xf32>
    %547 = tpu.matmul %546, %16, %cst_250 {dimension_numbers = #tpu.dot_dimension_numbers<[1], [0], [0], [1], [0, 0, 1, 1], [], []>} : vector<8x128xf32>, vector<128x512xf32>, vector<8x512xf32> -> vector<8x512xf32>
    %548 = arith.addf %545, %547 : vector<8x512xf32>
    %c0_251 = arith.constant 0 : index
    %c0_252 = arith.constant 0 : index
    %549 = vector.load %arg13[%c0_251, %c0_252] : memref<8x128xf32, #tpu.memory_space<vmem>>, vector<8x128xf32>
    %550 = vector.extract_strided_slice %548 {offsets = [0, 0], sizes = [8, 128], strides = [1, 1]} : vector<8x512xf32> to vector<8x128xf32>
    %551 = arith.negf %550 : vector<8x128xf32>
    %552 = math.exp %551 : vector<8x128xf32>
    %cst_253 = arith.constant 1.000000e+00 : f32
    %553 = vector.broadcast %cst_253 : f32 to vector<8x128xf32>
    %554 = arith.addf %553, %552 : vector<8x128xf32>
    %555 = arith.divf %553, %554 : vector<8x128xf32>
    %556 = vector.extract_strided_slice %548 {offsets = [0, 128], sizes = [8, 128], strides = [1, 1]} : vector<8x512xf32> to vector<8x128xf32>
    %557 = arith.negf %556 : vector<8x128xf32>
    %558 = math.exp %557 : vector<8x128xf32>
    %cst_254 = arith.constant 1.000000e+00 : f32
    %559 = vector.broadcast %cst_254 : f32 to vector<8x128xf32>
    %560 = arith.addf %559, %558 : vector<8x128xf32>
    %561 = arith.divf %559, %560 : vector<8x128xf32>
    %562 = vector.extract_strided_slice %548 {offsets = [0, 256], sizes = [8, 128], strides = [1, 1]} : vector<8x512xf32> to vector<8x128xf32>
    %563 = math.tanh %562 : vector<8x128xf32>
    %564 = vector.extract_strided_slice %548 {offsets = [0, 384], sizes = [8, 128], strides = [1, 1]} : vector<8x512xf32> to vector<8x128xf32>
    %565 = arith.negf %564 : vector<8x128xf32>
    %566 = math.exp %565 : vector<8x128xf32>
    %cst_255 = arith.constant 1.000000e+00 : f32
    %567 = vector.broadcast %cst_255 : f32 to vector<8x128xf32>
    %568 = arith.addf %567, %566 : vector<8x128xf32>
    %569 = arith.divf %567, %568 : vector<8x128xf32>
    %570 = arith.mulf %561, %549 : vector<8x128xf32>
    %571 = arith.mulf %555, %563 : vector<8x128xf32>
    %572 = arith.addf %570, %571 : vector<8x128xf32>
    %573 = math.tanh %572 : vector<8x128xf32>
    %574 = arith.mulf %569, %573 : vector<8x128xf32>
    %c0_256 = arith.constant 0 : index
    %c0_257 = arith.constant 0 : index
    %575 = vector.load %arg12[%c0_256, %c0_257] : memref<8x128xf32, #tpu.memory_space<vmem>>, vector<8x128xf32>
    tpu.vector_store %arg12[%c0_256, %c0_257], %574 {strides = array<i32>} : memref<8x128xf32, #tpu.memory_space<vmem>>, vector<8x128xf32>,
    %c0_258 = arith.constant 0 : index
    %c0_259 = arith.constant 0 : index
    %576 = vector.load %arg13[%c0_258, %c0_259] : memref<8x128xf32, #tpu.memory_space<vmem>>, vector<8x128xf32>
    tpu.vector_store %arg13[%c0_258, %c0_259], %572 {strides = array<i32>} : memref<8x128xf32, #tpu.memory_space<vmem>>, vector<8x128xf32>,
    %577 = arith.index_cast %543 : i32 to index
    %c0_260 = arith.constant 0 : index
    %578 = vector.load %arg15[%577, %c0_260] : memref<64x128xf32, #tpu.memory_space<vmem>>, vector<8x128xf32>
    tpu.vector_store %arg15[%577, %c0_260], %574 {strides = array<i32>} : memref<64x128xf32, #tpu.memory_space<vmem>>, vector<8x128xf32>,
    %c7_i32_261 = arith.constant 7 : i32
    %c7_i32_262 = arith.constant 7 : i32
    %579 = arith.subi %c7_i32_262, %c7_i32_261 : i32
    %c8_i32_263 = arith.constant 8 : i32
    %580 = arith.muli %579, %c8_i32_263 : i32
    %581 = tpu.assume_multiple %580, 8 : i32
    %582 = arith.index_cast %581 : i32 to index
    %c512_264 = arith.constant 512 : index
    %583 = vector.load %arg9[%582, %c512_264] : memref<64x1024xf32, #tpu.memory_space<vmem>>, vector<8x512xf32>
    %c0_265 = arith.constant 0 : index
    %c0_266 = arith.constant 0 : index
    %584 = vector.load %arg12[%c0_265, %c0_266] : memref<8x128xf32, #tpu.memory_space<vmem>>, vector<8x128xf32>
    %cst_267 = arith.constant dense<0.000000e+00> : vector<8x512xf32>
    %585 = tpu.matmul %584, %16, %cst_267 {dimension_numbers = #tpu.dot_dimension_numbers<[1], [0], [0], [1], [0, 0, 1, 1], [], []>} : vector<8x128xf32>, vector<128x512xf32>, vector<8x512xf32> -> vector<8x512xf32>
    %586 = arith.addf %583, %585 : vector<8x512xf32>
    %c0_268 = arith.constant 0 : index
    %c0_269 = arith.constant 0 : index
    %587 = vector.load %arg13[%c0_268, %c0_269] : memref<8x128xf32, #tpu.memory_space<vmem>>, vector<8x128xf32>
    %588 = vector.extract_strided_slice %586 {offsets = [0, 0], sizes = [8, 128], strides = [1, 1]} : vector<8x512xf32> to vector<8x128xf32>
    %589 = arith.negf %588 : vector<8x128xf32>
    %590 = math.exp %589 : vector<8x128xf32>
    %cst_270 = arith.constant 1.000000e+00 : f32
    %591 = vector.broadcast %cst_270 : f32 to vector<8x128xf32>
    %592 = arith.addf %591, %590 : vector<8x128xf32>
    %593 = arith.divf %591, %592 : vector<8x128xf32>
    %594 = vector.extract_strided_slice %586 {offsets = [0, 128], sizes = [8, 128], strides = [1, 1]} : vector<8x512xf32> to vector<8x128xf32>
    %595 = arith.negf %594 : vector<8x128xf32>
    %596 = math.exp %595 : vector<8x128xf32>
    %cst_271 = arith.constant 1.000000e+00 : f32
    %597 = vector.broadcast %cst_271 : f32 to vector<8x128xf32>
    %598 = arith.addf %597, %596 : vector<8x128xf32>
    %599 = arith.divf %597, %598 : vector<8x128xf32>
    %600 = vector.extract_strided_slice %586 {offsets = [0, 256], sizes = [8, 128], strides = [1, 1]} : vector<8x512xf32> to vector<8x128xf32>
    %601 = math.tanh %600 : vector<8x128xf32>
    %602 = vector.extract_strided_slice %586 {offsets = [0, 384], sizes = [8, 128], strides = [1, 1]} : vector<8x512xf32> to vector<8x128xf32>
    %603 = arith.negf %602 : vector<8x128xf32>
    %604 = math.exp %603 : vector<8x128xf32>
    %cst_272 = arith.constant 1.000000e+00 : f32
    %605 = vector.broadcast %cst_272 : f32 to vector<8x128xf32>
    %606 = arith.addf %605, %604 : vector<8x128xf32>
    %607 = arith.divf %605, %606 : vector<8x128xf32>
    %608 = arith.mulf %599, %587 : vector<8x128xf32>
    %609 = arith.mulf %593, %601 : vector<8x128xf32>
    %610 = arith.addf %608, %609 : vector<8x128xf32>
    %611 = math.tanh %610 : vector<8x128xf32>
    %612 = arith.mulf %607, %611 : vector<8x128xf32>
    %c0_273 = arith.constant 0 : index
    %c0_274 = arith.constant 0 : index
    %613 = vector.load %arg12[%c0_273, %c0_274] : memref<8x128xf32, #tpu.memory_space<vmem>>, vector<8x128xf32>
    tpu.vector_store %arg12[%c0_273, %c0_274], %612 {strides = array<i32>} : memref<8x128xf32, #tpu.memory_space<vmem>>, vector<8x128xf32>,
    %c0_275 = arith.constant 0 : index
    %c0_276 = arith.constant 0 : index
    %614 = vector.load %arg13[%c0_275, %c0_276] : memref<8x128xf32, #tpu.memory_space<vmem>>, vector<8x128xf32>
    tpu.vector_store %arg13[%c0_275, %c0_276], %610 {strides = array<i32>} : memref<8x128xf32, #tpu.memory_space<vmem>>, vector<8x128xf32>,
    %615 = arith.index_cast %581 : i32 to index
    %c0_277 = arith.constant 0 : index
    %616 = vector.load %arg15[%615, %c0_277] : memref<64x128xf32, #tpu.memory_space<vmem>>, vector<8x128xf32>
    tpu.vector_store %arg15[%615, %c0_277], %612 {strides = array<i32>} : memref<64x128xf32, #tpu.memory_space<vmem>>, vector<8x128xf32>,
    %c8_i32_278 = arith.constant 8 : i32
    %c0_279 = arith.constant 0 : index
    %c0_280 = arith.constant 0 : index
    %617 = vector.load %arg14[%c0_279, %c0_280] : memref<64x128xf32, #tpu.memory_space<vmem>>, vector<64x128xf32>
    %c0_281 = arith.constant 0 : index
    %c0_282 = arith.constant 0 : index
    %618 = vector.load %arg5[%c0_281, %c0_282] : memref<128x128xf32, #tpu.memory_space<vmem>>, vector<128x128xf32>
    %cst_283 = arith.constant dense<0.000000e+00> : vector<64x128xf32>
    %619 = tpu.matmul %617, %618, %cst_283 {dimension_numbers = #tpu.dot_dimension_numbers<[1], [0], [0], [1], [0, 0, 1, 1], [], []>} : vector<64x128xf32>, vector<128x128xf32>, vector<64x128xf32> -> vector<64x128xf32>
    %c0_284 = arith.constant 0 : index
    %c0_285 = arith.constant 0 : index
    %620 = vector.load %arg15[%c0_284, %c0_285] : memref<64x128xf32, #tpu.memory_space<vmem>>, vector<64x128xf32>
    %c0_286 = arith.constant 0 : index
    %c0_287 = arith.constant 0 : index
    %621 = vector.load %arg6[%c0_286, %c0_287] : memref<128x128xf32, #tpu.memory_space<vmem>>, vector<128x128xf32>
    %cst_288 = arith.constant dense<0.000000e+00> : vector<64x128xf32>
    %622 = tpu.matmul %620, %621, %cst_288 {dimension_numbers = #tpu.dot_dimension_numbers<[1], [0], [0], [1], [0, 0, 1, 1], [], []>} : vector<64x128xf32>, vector<128x128xf32>, vector<64x128xf32> -> vector<64x128xf32>
    %623 = arith.addf %619, %622 : vector<64x128xf32>
    %c0_289 = arith.constant 0 : index
    %c0_290 = arith.constant 0 : index
    %624 = vector.load %arg7[%c0_289, %c0_290] : memref<1x128xf32, #tpu.memory_space<vmem>>, vector<1x128xf32>
    %625 = vector.broadcast %624 : vector<1x128xf32> to vector<64x128xf32>
    %626 = arith.addf %623, %625 : vector<64x128xf32>
    %c0_291 = arith.constant 0 : index
    %c0_292 = arith.constant 0 : index
    %627 = vector.load %arg8[%c0_291, %c0_292] : memref<64x128xf32, #tpu.memory_space<vmem>>, vector<64x128xf32>
    tpu.vector_store %arg8[%c0_291, %c0_292], %626 {strides = array<i32>} : memref<64x128xf32, #tpu.memory_space<vmem>>, vector<64x128xf32>,
    return
  }
}

</mosaic_0001>

<llo_original>
// kernel: tpu_custom_call.1
$region0: #{tpu_custom_call.1}
  #allocation0 [shape = 'u32[]', space=smem, size = 0x4, offset = 0x4, fixed_abs, tag = 'smem constant byte address 0x4 - core index']
  #allocation1 [shape = 'u32[72,128]{1,0:T(1,128)}', space=vmem, size = 0x9000, scoped, tag = 'internal scratch']
  #allocation2 [shape = 'f32[64,1024]{1,0:T(8,128)}', space=vmem, size = 0x40000, scoped, tag = 'scratch operand']
  #allocation3 [shape = 'f32[8,128]{1,0:T(8,128)}', space=vmem, size = 0x1000, scoped, tag = 'scratch operand']
  #allocation4 [shape = 'f32[8,128]{1,0:T(8,128)}', space=vmem, size = 0x1000, scoped, tag = 'scratch operand']
  #allocation5 [shape = 'f32[8,128]{1,0:T(8,128)}', space=vmem, size = 0x1000, scoped, tag = 'scratch operand']
  #allocation6 [shape = 'f32[8,128]{1,0:T(8,128)}', space=vmem, size = 0x1000, scoped, tag = 'scratch operand']
  #allocation7 [shape = 'f32[64,128]{1,0:T(8,128)}', space=vmem, size = 0x8000, scoped, tag = 'scratch operand']
  #allocation8 [shape = 'f32[64,128]{1,0:T(8,128)}', space=vmem, size = 0x8000, scoped, tag = 'scratch operand']
  %s0 = inlined_call_operand.hbm [shape: f32[64,128], index: 0, kind: input, shape index: {}]
  %s1 = inlined_call_operand.hbm [shape: f32[128,1024], index: 1, kind: input, shape index: {}]
  %s2 = inlined_call_operand.hbm [shape: f32[1,1024], index: 2, kind: input, shape index: {}]
  %s3 = inlined_call_operand.hbm [shape: f32[128,512], index: 3, kind: input, shape index: {}]
  %s4 = inlined_call_operand.hbm [shape: f32[128,512], index: 4, kind: input, shape index: {}]
  %s5 = inlined_call_operand.hbm [shape: f32[128,128], index: 5, kind: input, shape index: {}]
  %s6 = inlined_call_operand.hbm [shape: f32[128,128], index: 6, kind: input, shape index: {}]
  %s7 = inlined_call_operand.vmem [shape: f32[1,128], index: 7, kind: input, shape index: {}]
  %s8 = inlined_call_operand.hbm [shape: f32[64,128], index: 8, kind: output, shape index: {}]
  %s9 = sld [smem:[#allocation0]]
  $region70: #{tpu_custom_call.1} parent=0
    _
  %s11 = ssub.s32 1, %s9
  %s12 = scalar_select 0, %s11, %s9
  $region1: #{tpu_custom_call.1} parent=0
    #allocation9 [shape = 'u8[32768]{0}', space=vmem, size = 0x8000, scoped, tag = 'input window, operand 0, single buffered']
    #allocation10 [shape = 's32[1]{0}', space=sflag, size = 0x4, scoped, tag = 'scoped memory for tpu_custom_call.1']
    #allocation11 [shape = 's32[1]{0}', space=sflag, size = 0x4, scoped, tag = 'scoped memory for tpu_custom_call.1']
    #allocation12 [shape = 'u8[524288]{0}', space=vmem, size = 0x80000, scoped, tag = 'input window, operand 1, single buffered']
    #allocation13 [shape = 's32[1]{0}', space=sflag, size = 0x4, scoped, tag = 'scoped memory for tpu_custom_call.1']
    #allocation14 [shape = 'u8[4096]{0}', space=vmem, size = 0x1000, scoped, tag = 'input window, operand 2, single buffered']
    #allocation15 [shape = 'u8[262144]{0}', space=vmem, size = 0x40000, scoped, tag = 'input window, operand 3, single buffered']
    #allocation16 [shape = 's32[1]{0}', space=sflag, size = 0x4, scoped, tag = 'scoped memory for tpu_custom_call.1']
    #allocation17 [shape = 'u8[262144]{0}', space=vmem, size = 0x40000, scoped, tag = 'input window, operand 4, single buffered']
    #allocation18 [shape = 'u8[65536]{0}', space=vmem, size = 0x10000, scoped, tag = 'input window, operand 5, single buffered']
    #allocation19 [shape = 's32[1]{0}', space=sflag, size = 0x4, scoped, tag = 'scoped memory for tpu_custom_call.1']
    #allocation20 [shape = 'u8[65536]{0}', space=vmem, size = 0x10000, scoped, tag = 'input window, operand 6, single buffered']
    #allocation21 [shape = 'u8[32768]{0}', space=vmem, size = 0x8000, scoped, tag = 'output window, operand 0, single buffered']
    %13 = vsyncpa [#allocation10], 0
    %14 = vsyncpa [#allocation13], 0
    %15 = vsyncpa [#allocation16], 0
    %16 = vsyncpa [#allocation19], 0
    %17 = vsyncpa [#allocation11], 0
    // Predicated region
    $region2: #{tpu_custom_call.1} parent=1 // pred_check
      _
    $region3: #{tpu_custom_call.1} parent=1 // pred_check_branch
      %19 = sbr.rel (0) target = $region5
    $region4: #{tpu_custom_call.1} parent=1 // pred_region
      %21 = vsyncadd [#allocation10], 0
      %s22 = sshll.u32 %s0, 4
      %s23 = int_to_ptr.hbm [resolvable:$true] %s22
      %s24 = sshll.u32 [#allocation9], 4
      %s25 = int_to_ptr.vmem [resolvable:$true] %s24
      %30 = dma.hbm_to_vmem [thread:$0]  %s23, 1024, %s25, [#allocation10], 128, 128, 8
    $region5: #{tpu_custom_call.1} parent=1 // pred_fallthru
      _
    // Predicated region
    $region6: #{tpu_custom_call.1} parent=1 // pred_check
      _
    $region7: #{tpu_custom_call.1} parent=1 // pred_check_branch
      %32 = sbr.rel (0) target = $region9
    $region8: #{tpu_custom_call.1} parent=1 // pred_region
      %34 = vsyncadd [#allocation13], 0
      %s35 = sshll.u32 %s1, 4
      %s36 = int_to_ptr.hbm [resolvable:$true] %s35
      %s37 = sshll.u32 [#allocation12], 4
      %s38 = int_to_ptr.vmem [resolvable:$true] %s37
      %43 = dma.hbm_to_vmem [thread:$0]  %s36, 16384, %s38, [#allocation13], 1024, 1024, 64
    $region9: #{tpu_custom_call.1} parent=1 // pred_fallthru
      _
    // Predicated region
    $region10: #{tpu_custom_call.1} parent=1 // pred_check
      _
    $region11: #{tpu_custom_call.1} parent=1 // pred_check_branch
      %45 = sbr.rel (0) target = $region13
    $region12: #{tpu_custom_call.1} parent=1 // pred_region
      %47 = vsyncadd [#allocation13], 0
      %s49 = sshll.u32 %s2, 4
      %s50 = int_to_ptr.hbm [resolvable:$true] %s49
      %s51 = sshll.u32 [#allocation14], 4
      %s52 = int_to_ptr.vmem [resolvable:$true] %s51
      %54 = dma.hbm_to_vmem [thread:$0]  %s50, 128, %s52, [#allocation13]
    $region13: #{tpu_custom_call.1} parent=1 // pred_fallthru
      _
    // Predicated region
    $region14: #{tpu_custom_call.1} parent=1 // pred_check
      _
    $region15: #{tpu_custom_call.1} parent=1 // pred_check_branch
      %56 = sbr.rel (0) target = $region17
    $region16: #{tpu_custom_call.1} parent=1 // pred_region
      %58 = vsyncadd [#allocation16], 0
      %s59 = sshll.u32 %s3, 4
      %s60 = int_to_ptr.hbm [resolvable:$true] %s59
      %s61 = sshll.u32 [#allocation15], 4
      %s62 = int_to_ptr.vmem [resolvable:$true] %s61
      %67 = dma.hbm_to_vmem [thread:$0]  %s60, 8192, %s62, [#allocation16], 512, 512, 32
    $region17: #{tpu_custom_call.1} parent=1 // pred_fallthru
      _
    // Predicated region
    $region18: #{tpu_custom_call.1} parent=1 // pred_check
      _
    $region19: #{tpu_custom_call.1} parent=1 // pred_check_branch
      %69 = sbr.rel (0) target = $region21
    $region20: #{tpu_custom_call.1} parent=1 // pred_region
      %71 = vsyncadd [#allocation16], 0
      %s72 = sshll.u32 %s4, 4
      %s73 = int_to_ptr.hbm [resolvable:$true] %s72
      %s74 = sshll.u32 [#allocation17], 4
      %s75 = int_to_ptr.vmem [resolvable:$true] %s74
      %80 = dma.hbm_to_vmem [thread:$0]  %s73, 8192, %s75, [#allocation16], 512, 512, 32
    $region21: #{tpu_custom_call.1} parent=1 // pred_fallthru
      _
    // Predicated region
    $region22: #{tpu_custom_call.1} parent=1 // pred_check
      _
    $region23: #{tpu_custom_call.1} parent=1 // pred_check_branch
      %82 = sbr.rel (0) target = $region25
    $region24: #{tpu_custom_call.1} parent=1 // pred_region
      %84 = vsyncadd [#allocation19], 0
      %s85 = sshll.u32 %s5, 4
      %s86 = int_to_ptr.hbm [resolvable:$true] %s85
      %s87 = sshll.u32 [#allocation18], 4
      %s88 = int_to_ptr.vmem [resolvable:$true] %s87
      %93 = dma.hbm_to_vmem [thread:$0]  %s86, 2048, %s88, [#allocation19], 128, 128, 8
    $region25: #{tpu_custom_call.1} parent=1 // pred_fallthru
      _
    // Predicated region
    $region26: #{tpu_custom_call.1} parent=1 // pred_check
      _
    $region27: #{tpu_custom_call.1} parent=1 // pred_check_branch
      %95 = sbr.rel (0) target = $region29
    $region28: #{tpu_custom_call.1} parent=1 // pred_region
      %97 = vsyncadd [#allocation19], 0
      %s98 = sshll.u32 %s6, 4
      %s99 = int_to_ptr.hbm [resolvable:$true] %s98
      %s100 = sshll.u32 [#allocation20], 4
      %s101 = int_to_ptr.vmem [resolvable:$true] %s100
      %106 = dma.hbm_to_vmem [thread:$0]  %s99, 2048, %s101, [#allocation19], 128, 128, 8
    $region29: #{tpu_custom_call.1} parent=1 // pred_fallthru
      _
    // Predicated region
    $region30: #{tpu_custom_call.1} parent=1 // pred_check
      _
    $region31: #{tpu_custom_call.1} parent=1 // pred_check_branch
      %108 = sbr.rel (0) target = $region33
    $region32: #{tpu_custom_call.1} parent=1 // pred_region
      _
    $region33: #{tpu_custom_call.1} parent=1 // pred_fallthru
      _
    // Predicated region
    $region34: #{tpu_custom_call.1} parent=1 // pred_check
      _
    $region35: #{tpu_custom_call.1} parent=1 // pred_check_branch
      %110 = sbr.rel (0) target = $region37
    $region36: #{tpu_custom_call.1} parent=1 // pred_region
      %112 = dma.done [#allocation10], 1024
    $region37: #{tpu_custom_call.1} parent=1 // pred_fallthru
      _
    // Predicated region
    $region38: #{tpu_custom_call.1} parent=1 // pred_check
      _
    $region39: #{tpu_custom_call.1} parent=1 // pred_check_branch
      %114 = sbr.rel (0) target = $region41
    $region40: #{tpu_custom_call.1} parent=1 // pred_region
      %116 = dma.done [#allocation13], 16384
    $region41: #{tpu_custom_call.1} parent=1 // pred_fallthru
      _
    // Predicated region
    $region42: #{tpu_custom_call.1} parent=1 // pred_check
      _
    $region43: #{tpu_custom_call.1} parent=1 // pred_check_branch
      %118 = sbr.rel (0) target = $region45
    $region44: #{tpu_custom_call.1} parent=1 // pred_region
      %120 = dma.done [#allocation13], 128
    $region45: #{tpu_custom_call.1} parent=1 // pred_fallthru
      _
    // Predicated region
    $region46: #{tpu_custom_call.1} parent=1 // pred_check
      _
    $region47: #{tpu_custom_call.1} parent=1 // pred_check_branch
      %122 = sbr.rel (0) target = $region49
    $region48: #{tpu_custom_call.1} parent=1 // pred_region
      %124 = dma.done [#allocation16], 8192
    $region49: #{tpu_custom_call.1} parent=1 // pred_fallthru
      _
    // Predicated region
    $region50: #{tpu_custom_call.1} parent=1 // pred_check
      _
    $region51: #{tpu_custom_call.1} parent=1 // pred_check_branch
      %126 = sbr.rel (0) target = $region53
    $region52: #{tpu_custom_call.1} parent=1 // pred_region
      %128 = dma.done [#allocation16], 8192
    $region53: #{tpu_custom_call.1} parent=1 // pred_fallthru
      _
    // Predicated region
    $region54: #{tpu_custom_call.1} parent=1 // pred_check
      _
    $region55: #{tpu_custom_call.1} parent=1 // pred_check_branch
      %130 = sbr.rel (0) target = $region57
    $region56: #{tpu_custom_call.1} parent=1 // pred_region
      %132 = dma.done [#allocation19], 2048
    $region57: #{tpu_custom_call.1} parent=1 // pred_fallthru
      _
    // Predicated region
    $region58: #{tpu_custom_call.1} parent=1 // pred_check
      _
    $region59: #{tpu_custom_call.1} parent=1 // pred_check_branch
      %134 = sbr.rel (0) target = $region61
    $region60: #{tpu_custom_call.1} parent=1 // pred_region
      %136 = dma.done [#allocation19], 2048
    $region61: #{tpu_custom_call.1} parent=1 // pred_fallthru
      _
    %v137 = vld [vmem:[#allocation9] sm:$0xff]
    %v138 = vld [vmem:[#allocation9 + $0x8] sm:$0xff]
    %v139 = vld [vmem:[#allocation9 + $0x10] sm:$0xff]
    %v140 = vld [vmem:[#allocation9 + $0x18] sm:$0xff]
    %v141 = vld [vmem:[#allocation9 + $0x20] sm:$0xff]
    %v142 = vld [vmem:[#allocation9 + $0x28] sm:$0xff]
    %v143 = vld [vmem:[#allocation9 + $0x30] sm:$0xff]
    %v144 = vld [vmem:[#allocation9 + $0x38] sm:$0xff]
    %v145 = vld [vmem:[#allocation12] sm:$0xff]
    %v146 = vld [vmem:[#allocation12 + $0x8] sm:$0xff]
    %v147 = vld [vmem:[#allocation12 + $0x10] sm:$0xff]
    %v148 = vld [vmem:[#allocation12 + $0x18] sm:$0xff]
    %v149 = vld [vmem:[#allocation12 + $0x20] sm:$0xff]
    %v150 = vld [vmem:[#allocation12 + $0x28] sm:$0xff]
    %v151 = vld [vmem:[#allocation12 + $0x30] sm:$0xff]
    %v152 = vld [vmem:[#allocation12 + $0x38] sm:$0xff]
    %v153 = vld [vmem:[#allocation12 + $0x40] sm:$0xff]
    %v154 = vld [vmem:[#allocation12 + $0x48] sm:$0xff]
    %v155 = vld [vmem:[#allocation12 + $0x50] sm:$0xff]
    %v156 = vld [vmem:[#allocation12 + $0x58] sm:$0xff]
    %v157 = vld [vmem:[#allocation12 + $0x60] sm:$0xff]
    %v158 = vld [vmem:[#allocation12 + $0x68] sm:$0xff]
    %v159 = vld [vmem:[#allocation12 + $0x70] sm:$0xff]
    %v160 = vld [vmem:[#allocation12 + $0x78] sm:$0xff]
    %v161 = vld [vmem:[#allocation12 + $0x80] sm:$0xff]
    %v162 = vld [vmem:[#allocation12 + $0x88] sm:$0xff]
    %v163 = vld [vmem:[#allocation12 + $0x90] sm:$0xff]
    %v164 = vld [vmem:[#allocation12 + $0x98] sm:$0xff]
    %v165 = vld [vmem:[#allocation12 + $0xa0] sm:$0xff]
    %v166 = vld [vmem:[#allocation12 + $0xa8] sm:$0xff]
    %v167 = vld [vmem:[#allocation12 + $0xb0] sm:$0xff]
    %v168 = vld [vmem:[#allocation12 + $0xb8] sm:$0xff]
    %v169 = vld [vmem:[#allocation12 + $0xc0] sm:$0xff]
    %v170 = vld [vmem:[#allocation12 + $0xc8] sm:$0xff]
    %v171 = vld [vmem:[#allocation12 + $0xd0] sm:$0xff]
    %v172 = vld [vmem:[#allocation12 + $0xd8] sm:$0xff]
    %v173 = vld [vmem:[#allocation12 + $0xe0] sm:$0xff]
    %v174 = vld [vmem:[#allocation12 + $0xe8] sm:$0xff]
    %v175 = vld [vmem:[#allocation12 + $0xf0] sm:$0xff]
    %v176 = vld [vmem:[#allocation12 + $0xf8] sm:$0xff]
    %v177 = vld [vmem:[#allocation12 + $0x100] sm:$0xff]
    %v178 = vld [vmem:[#allocation12 + $0x108] sm:$0xff]
    %v179 = vld [vmem:[#allocation12 + $0x110] sm:$0xff]
    %v180 = vld [vmem:[#allocation12 + $0x118] sm:$0xff]
    %v181 = vld [vmem:[#allocation12 + $0x120] sm:$0xff]
    %v182 = vld [vmem:[#allocation12 + $0x128] sm:$0xff]
    %v183 = vld [vmem:[#allocation12 + $0x130] sm:$0xff]
    %v184 = vld [vmem:[#allocation12 + $0x138] sm:$0xff]
    %v185 = vld [vmem:[#allocation12 + $0x140] sm:$0xff]
    %v186 = vld [vmem:[#allocation12 + $0x148] sm:$0xff]
    %v187 = vld [vmem:[#allocation12 + $0x150] sm:$0xff]
    %v188 = vld [vmem:[#allocation12 + $0x158] sm:$0xff]
    %v189 = vld [vmem:[#allocation12 + $0x160] sm:$0xff]
    %v190 = vld [vmem:[#allocation12 + $0x168] sm:$0xff]
    %v191 = vld [vmem:[#allocation12 + $0x170] sm:$0xff]
    %v192 = vld [vmem:[#allocation12 + $0x178] sm:$0xff]
    %v193 = vld [vmem:[#allocation12 + $0x180] sm:$0xff]
    %v194 = vld [vmem:[#allocation12 + $0x188] sm:$0xff]
    %v195 = vld [vmem:[#allocation12 + $0x190] sm:$0xff]
    %v196 = vld [vmem:[#allocation12 + $0x198] sm:$0xff]
    %v197 = vld [vmem:[#allocation12 + $0x1a0] sm:$0xff]
    %v198 = vld [vmem:[#allocation12 + $0x1a8] sm:$0xff]
    %v199 = vld [vmem:[#allocation12 + $0x1b0] sm:$0xff]
    %v200 = vld [vmem:[#allocation12 + $0x1b8] sm:$0xff]
    %v201 = vld [vmem:[#allocation12 + $0x1c0] sm:$0xff]
    %v202 = vld [vmem:[#allocation12 + $0x1c8] sm:$0xff]
    %v203 = vld [vmem:[#allocation12 + $0x1d0] sm:$0xff]
    %v204 = vld [vmem:[#allocation12 + $0x1d8] sm:$0xff]
    %v205 = vld [vmem:[#allocation12 + $0x1e0] sm:$0xff]
    %v206 = vld [vmem:[#allocation12 + $0x1e8] sm:$0xff]
    %v207 = vld [vmem:[#allocation12 + $0x1f0] sm:$0xff]
    %v208 = vld [vmem:[#allocation12 + $0x1f8] sm:$0xff]
    %v209 = vld [vmem:[#allocation12 + $0x200] sm:$0xff]
    %v210 = vld [vmem:[#allocation12 + $0x208] sm:$0xff]
    %v211 = vld [vmem:[#allocation12 + $0x210] sm:$0xff]
    %v212 = vld [vmem:[#allocation12 + $0x218] sm:$0xff]
    %v213 = vld [vmem:[#allocation12 + $0x220] sm:$0xff]
    %v214 = vld [vmem:[#allocation12 + $0x228] sm:$0xff]
    %v215 = vld [vmem:[#allocation12 + $0x230] sm:$0xff]
    %v216 = vld [vmem:[#allocation12 + $0x238] sm:$0xff]
    %v217 = vld [vmem:[#allocation12 + $0x240] sm:$0xff]
    %v218 = vld [vmem:[#allocation12 + $0x248] sm:$0xff]
    %v219 = vld [vmem:[#allocation12 + $0x250] sm:$0xff]
    %v220 = vld [vmem:[#allocation12 + $0x258] sm:$0xff]
    %v221 = vld [vmem:[#allocation12 + $0x260] sm:$0xff]
    %v222 = vld [vmem:[#allocation12 + $0x268] sm:$0xff]
    %v223 = vld [vmem:[#allocation12 + $0x270] sm:$0xff]
    %v224 = vld [vmem:[#allocation12 + $0x278] sm:$0xff]
    %v225 = vld [vmem:[#allocation12 + $0x280] sm:$0xff]
    %v226 = vld [vmem:[#allocation12 + $0x288] sm:$0xff]
    %v227 = vld [vmem:[#allocation12 + $0x290] sm:$0xff]
    %v228 = vld [vmem:[#allocation12 + $0x298] sm:$0xff]
    %v229 = vld [vmem:[#allocation12 + $0x2a0] sm:$0xff]
    %v230 = vld [vmem:[#allocation12 + $0x2a8] sm:$0xff]
    %v231 = vld [vmem:[#allocation12 + $0x2b0] sm:$0xff]
    %v232 = vld [vmem:[#allocation12 + $0x2b8] sm:$0xff]
    %v233 = vld [vmem:[#allocation12 + $0x2c0] sm:$0xff]
    %v234 = vld [vmem:[#allocation12 + $0x2c8] sm:$0xff]
    %v235 = vld [vmem:[#allocation12 + $0x2d0] sm:$0xff]
    %v236 = vld [vmem:[#allocation12 + $0x2d8] sm:$0xff]
    %v237 = vld [vmem:[#allocation12 + $0x2e0] sm:$0xff]
    %v238 = vld [vmem:[#allocation12 + $0x2e8] sm:$0xff]
    %v239 = vld [vmem:[#allocation12 + $0x2f0] sm:$0xff]
    %v240 = vld [vmem:[#allocation12 + $0x2f8] sm:$0xff]
    %v241 = vld [vmem:[#allocation12 + $0x300] sm:$0xff]
    %v242 = vld [vmem:[#allocation12 + $0x308] sm:$0xff]
    %v243 = vld [vmem:[#allocation12 + $0x310] sm:$0xff]
    %v244 = vld [vmem:[#allocation12 + $0x318] sm:$0xff]
    %v245 = vld [vmem:[#allocation12 + $0x320] sm:$0xff]
    %v246 = vld [vmem:[#allocation12 + $0x328] sm:$0xff]
    %v247 = vld [vmem:[#allocation12 + $0x330] sm:$0xff]
    %v248 = vld [vmem:[#allocation12 + $0x338] sm:$0xff]
    %v249 = vld [vmem:[#allocation12 + $0x340] sm:$0xff]
    %v250 = vld [vmem:[#allocation12 + $0x348] sm:$0xff]
    %v251 = vld [vmem:[#allocation12 + $0x350] sm:$0xff]
    %v252 = vld [vmem:[#allocation12 + $0x358] sm:$0xff]
    %v253 = vld [vmem:[#allocation12 + $0x360] sm:$0xff]
    %v254 = vld [vmem:[#allocation12 + $0x368] sm:$0xff]
    %v255 = vld [vmem:[#allocation12 + $0x370] sm:$0xff]
    %v256 = vld [vmem:[#allocation12 + $0x378] sm:$0xff]
    %v257 = vld [vmem:[#allocation12 + $0x380] sm:$0xff]
    %v258 = vld [vmem:[#allocation12 + $0x388] sm:$0xff]
    %v259 = vld [vmem:[#allocation12 + $0x390] sm:$0xff]
    %v260 = vld [vmem:[#allocation12 + $0x398] sm:$0xff]
    %v261 = vld [vmem:[#allocation12 + $0x3a0] sm:$0xff]
    %v262 = vld [vmem:[#allocation12 + $0x3a8] sm:$0xff]
    %v263 = vld [vmem:[#allocation12 + $0x3b0] sm:$0xff]
    %v264 = vld [vmem:[#allocation12 + $0x3b8] sm:$0xff]
    %v265 = vld [vmem:[#allocation12 + $0x3c0] sm:$0xff]
    %v266 = vld [vmem:[#allocation12 + $0x3c8] sm:$0xff]
    %v267 = vld [vmem:[#allocation12 + $0x3d0] sm:$0xff]
    %v268 = vld [vmem:[#allocation12 + $0x3d8] sm:$0xff]
    %v269 = vld [vmem:[#allocation12 + $0x3e0] sm:$0xff]
    %v270 = vld [vmem:[#allocation12 + $0x3e8] sm:$0xff]
    %v271 = vld [vmem:[#allocation12 + $0x3f0] sm:$0xff]
    %v272 = vld [vmem:[#allocation12 + $0x3f8] sm:$0xff]
    %v273 = vld [vmem:[#allocation14] sm:$0xff]
    %v275 = vperm.slane %v273, 0
    %v276 = vperm.slane %v273, 1
    %v277 = vperm.slane %v273, 2
    %v278 = vperm.slane %v273, 3
    %v279 = vperm.slane %v273, 4
    %v280 = vperm.slane %v273, 5
    %v281 = vperm.slane %v273, 6
    %v282 = vperm.slane %v273, 7
    %291 = vmatpush.msra.mxu0 %v265
    %292 = vmatpush.msra.mxu0 %v257
    %293 = vmatpush.msra.mxu0 %v249
    %294 = vmatpush.msra.mxu0 %v241
    %295 = vmatpush.msra.mxu0 %v233
    %296 = vmatpush.msra.mxu0 %v225
    %297 = vmatpush.msra.mxu0 %v217
    %298 = vmatpush.msra.mxu0 %v209
    %299 = vmatpush.msra.mxu0 %v201
    %300 = vmatpush.msra.mxu0 %v193
    %301 = vmatpush.msra.mxu0 %v185
    %302 = vmatpush.msra.mxu0 %v177
    %303 = vmatpush.msra.mxu0 %v169
    %304 = vmatpush.msra.mxu0 %v161
    %305 = vmatpush.msra.mxu0 %v153
    %306 = vmatpush.msra.mxu0 %v145
    %307 = vmatmul.f32.gmra.mxu0 %v137
    %v308 = vpop.f32.mrf.mxu0
    %v309 = vadd.f32 %v275, %v308
    %310 = vmatmul.f32.gmra.mxu0 %v138
    %v311 = vpop.f32.mrf.mxu0
    %v312 = vadd.f32 %v275, %v311
    %313 = vmatmul.f32.gmra.mxu0 %v139
    %v314 = vpop.f32.mrf.mxu0
    %v315 = vadd.f32 %v275, %v314
    %316 = vmatmul.f32.gmra.mxu0 %v140
    %v317 = vpop.f32.mrf.mxu0
    %v318 = vadd.f32 %v275, %v317
    %319 = vmatmul.f32.gmra.mxu0 %v141
    %v320 = vpop.f32.mrf.mxu0
    %v321 = vadd.f32 %v275, %v320
    %322 = vmatmul.f32.gmra.mxu0 %v142
    %v323 = vpop.f32.mrf.mxu0
    %v324 = vadd.f32 %v275, %v323
    %325 = vmatmul.f32.gmra.mxu0 %v143
    %v326 = vpop.f32.mrf.mxu0
    %v327 = vadd.f32 %v275, %v326
    %328 = vmatmul.f32.gmra.mxu0 %v144
    %v329 = vpop.f32.mrf.mxu0
    %v330 = vadd.f32 %v275, %v329
    %331 = vdwg.mxu0
    %332 = vmatpush.msra.mxu0 %v266
    %333 = vmatpush.msra.mxu0 %v258
    %334 = vmatpush.msra.mxu0 %v250
    %335 = vmatpush.msra.mxu0 %v242
    %336 = vmatpush.msra.mxu0 %v234
    %337 = vmatpush.msra.mxu0 %v226
    %338 = vmatpush.msra.mxu0 %v218
    %339 = vmatpush.msra.mxu0 %v210
    %340 = vmatpush.msra.mxu0 %v202
    %341 = vmatpush.msra.mxu0 %v194
    %342 = vmatpush.msra.mxu0 %v186
    %343 = vmatpush.msra.mxu0 %v178
    %344 = vmatpush.msra.mxu0 %v170
    %345 = vmatpush.msra.mxu0 %v162
    %346 = vmatpush.msra.mxu0 %v154
    %347 = vmatpush.msra.mxu0 %v146
    %348 = vmatmul.f32.gmra.mxu0 %v137
    %v349 = vpop.f32.mrf.mxu0
    %v350 = vadd.f32 %v276, %v349
    %351 = vmatmul.f32.gmra.mxu0 %v138
    %v352 = vpop.f32.mrf.mxu0
    %v353 = vadd.f32 %v276, %v352
    %354 = vmatmul.f32.gmra.mxu0 %v139
    %v355 = vpop.f32.mrf.mxu0
    %v356 = vadd.f32 %v276, %v355
    %357 = vmatmul.f32.gmra.mxu0 %v140
    %v358 = vpop.f32.mrf.mxu0
    %v359 = vadd.f32 %v276, %v358
    %360 = vmatmul.f32.gmra.mxu0 %v141
    %v361 = vpop.f32.mrf.mxu0
    %v362 = vadd.f32 %v276, %v361
    %363 = vmatmul.f32.gmra.mxu0 %v142
    %v364 = vpop.f32.mrf.mxu0
    %v365 = vadd.f32 %v276, %v364
    %366 = vmatmul.f32.gmra.mxu0 %v143
    %v367 = vpop.f32.mrf.mxu0
    %v368 = vadd.f32 %v276, %v367
    %369 = vmatmul.f32.gmra.mxu0 %v144
    %v370 = vpop.f32.mrf.mxu0
    %v371 = vadd.f32 %v276, %v370
    %372 = vdwg.mxu0
    %373 = vmatpush.msra.mxu0 %v267
    %374 = vmatpush.msra.mxu0 %v259
    %375 = vmatpush.msra.mxu0 %v251
    %376 = vmatpush.msra.mxu0 %v243
    %377 = vmatpush.msra.mxu0 %v235
    %378 = vmatpush.msra.mxu0 %v227
    %379 = vmatpush.msra.mxu0 %v219
    %380 = vmatpush.msra.mxu0 %v211
    %381 = vmatpush.msra.mxu0 %v203
    %382 = vmatpush.msra.mxu0 %v195
    %383 = vmatpush.msra.mxu0 %v187
    %384 = vmatpush.msra.mxu0 %v179
    %385 = vmatpush.msra.mxu0 %v171
    %386 = vmatpush.msra.mxu0 %v163
    %387 = vmatpush.msra.mxu0 %v155
    %388 = vmatpush.msra.mxu0 %v147
    %389 = vmatmul.f32.gmra.mxu0 %v137
    %v390 = vpop.f32.mrf.mxu0
    %v391 = vadd.f32 %v277, %v390
    %392 = vmatmul.f32.gmra.mxu0 %v138
    %v393 = vpop.f32.mrf.mxu0
    %v394 = vadd.f32 %v277, %v393
    %395 = vmatmul.f32.gmra.mxu0 %v139
    %v396 = vpop.f32.mrf.mxu0
    %v397 = vadd.f32 %v277, %v396
    %398 = vmatmul.f32.gmra.mxu0 %v140
    %v399 = vpop.f32.mrf.mxu0
    %v400 = vadd.f32 %v277, %v399
    %401 = vmatmul.f32.gmra.mxu0 %v141
    %v402 = vpop.f32.mrf.mxu0
    %v403 = vadd.f32 %v277, %v402
    %404 = vmatmul.f32.gmra.mxu0 %v142
    %v405 = vpop.f32.mrf.mxu0
    %v406 = vadd.f32 %v277, %v405
    %407 = vmatmul.f32.gmra.mxu0 %v143
    %v408 = vpop.f32.mrf.mxu0
    %v409 = vadd.f32 %v277, %v408
    %410 = vmatmul.f32.gmra.mxu0 %v144
    %v411 = vpop.f32.mrf.mxu0
    %v412 = vadd.f32 %v277, %v411
    %413 = vdwg.mxu0
    %414 = vmatpush.msra.mxu0 %v268
    %415 = vmatpush.msra.mxu0 %v260
    %416 = vmatpush.msra.mxu0 %v252
    %417 = vmatpush.msra.mxu0 %v244
    %418 = vmatpush.msra.mxu0 %v236
    %419 = vmatpush.msra.mxu0 %v228
    %420 = vmatpush.msra.mxu0 %v220
    %421 = vmatpush.msra.mxu0 %v212
    %422 = vmatpush.msra.mxu0 %v204
    %423 = vmatpush.msra.mxu0 %v196
    %424 = vmatpush.msra.mxu0 %v188
    %425 = vmatpush.msra.mxu0 %v180
    %426 = vmatpush.msra.mxu0 %v172
    %427 = vmatpush.msra.mxu0 %v164
    %428 = vmatpush.msra.mxu0 %v156
    %429 = vmatpush.msra.mxu0 %v148
    %430 = vmatmul.f32.gmra.mxu0 %v137
    %v431 = vpop.f32.mrf.mxu0
    %v432 = vadd.f32 %v278, %v431
    %433 = vmatmul.f32.gmra.mxu0 %v138
    %v434 = vpop.f32.mrf.mxu0
    %v435 = vadd.f32 %v278, %v434
    %436 = vmatmul.f32.gmra.mxu0 %v139
    %v437 = vpop.f32.mrf.mxu0
    %v438 = vadd.f32 %v278, %v437
    %439 = vmatmul.f32.gmra.mxu0 %v140
    %v440 = vpop.f32.mrf.mxu0
    %v441 = vadd.f32 %v278, %v440
    %442 = vmatmul.f32.gmra.mxu0 %v141
    %v443 = vpop.f32.mrf.mxu0
    %v444 = vadd.f32 %v278, %v443
    %445 = vmatmul.f32.gmra.mxu0 %v142
    %v446 = vpop.f32.mrf.mxu0
    %v447 = vadd.f32 %v278, %v446
    %448 = vmatmul.f32.gmra.mxu0 %v143
    %v449 = vpop.f32.mrf.mxu0
    %v450 = vadd.f32 %v278, %v449
    %451 = vmatmul.f32.gmra.mxu0 %v144
    %v452 = vpop.f32.mrf.mxu0
    %v453 = vadd.f32 %v278, %v452
    %454 = vdwg.mxu0
    %455 = vmatpush.msra.mxu0 %v269
    %456 = vmatpush.msra.mxu0 %v261
    %457 = vmatpush.msra.mxu0 %v253
    %458 = vmatpush.msra.mxu0 %v245
    %459 = vmatpush.msra.mxu0 %v237
    %460 = vmatpush.msra.mxu0 %v229
    %461 = vmatpush.msra.mxu0 %v221
    %462 = vmatpush.msra.mxu0 %v213
    %463 = vmatpush.msra.mxu0 %v205
    %464 = vmatpush.msra.mxu0 %v197
    %465 = vmatpush.msra.mxu0 %v189
    %466 = vmatpush.msra.mxu0 %v181
    %467 = vmatpush.msra.mxu0 %v173
    %468 = vmatpush.msra.mxu0 %v165
    %469 = vmatpush.msra.mxu0 %v157
    %470 = vmatpush.msra.mxu0 %v149
    %471 = vmatmul.f32.gmra.mxu0 %v137
    %v472 = vpop.f32.mrf.mxu0
    %v473 = vadd.f32 %v279, %v472
    %474 = vmatmul.f32.gmra.mxu0 %v138
    %v475 = vpop.f32.mrf.mxu0
    %v476 = vadd.f32 %v279, %v475
    %477 = vmatmul.f32.gmra.mxu0 %v139
    %v478 = vpop.f32.mrf.mxu0
    %v479 = vadd.f32 %v279, %v478
    %480 = vmatmul.f32.gmra.mxu0 %v140
    %v481 = vpop.f32.mrf.mxu0
    %v482 = vadd.f32 %v279, %v481
    %483 = vmatmul.f32.gmra.mxu0 %v141
    %v484 = vpop.f32.mrf.mxu0
    %v485 = vadd.f32 %v279, %v484
    %486 = vmatmul.f32.gmra.mxu0 %v142
    %v487 = vpop.f32.mrf.mxu0
    %v488 = vadd.f32 %v279, %v487
    %489 = vmatmul.f32.gmra.mxu0 %v143
    %v490 = vpop.f32.mrf.mxu0
    %v491 = vadd.f32 %v279, %v490
    %492 = vmatmul.f32.gmra.mxu0 %v144
    %v493 = vpop.f32.mrf.mxu0
    %v494 = vadd.f32 %v279, %v493
    %495 = vdwg.mxu0
    %496 = vmatpush.msra.mxu0 %v270
    %497 = vmatpush.msra.mxu0 %v262
    %498 = vmatpush.msra.mxu0 %v254
    %499 = vmatpush.msra.mxu0 %v246
    %500 = vmatpush.msra.mxu0 %v238
    %501 = vmatpush.msra.mxu0 %v230
    %502 = vmatpush.msra.mxu0 %v222
    %503 = vmatpush.msra.mxu0 %v214
    %504 = vmatpush.msra.mxu0 %v206
    %505 = vmatpush.msra.mxu0 %v198
    %506 = vmatpush.msra.mxu0 %v190
    %507 = vmatpush.msra.mxu0 %v182
    %508 = vmatpush.msra.mxu0 %v174
    %509 = vmatpush.msra.mxu0 %v166
    %510 = vmatpush.msra.mxu0 %v158
    %511 = vmatpush.msra.mxu0 %v150
    %512 = vmatmul.f32.gmra.mxu0 %v137
    %v513 = vpop.f32.mrf.mxu0
    %v514 = vadd.f32 %v280, %v513
    %515 = vmatmul.f32.gmra.mxu0 %v138
    %v516 = vpop.f32.mrf.mxu0
    %v517 = vadd.f32 %v280, %v516
    %518 = vmatmul.f32.gmra.mxu0 %v139
    %v519 = vpop.f32.mrf.mxu0
    %v520 = vadd.f32 %v280, %v519
    %521 = vmatmul.f32.gmra.mxu0 %v140
    %v522 = vpop.f32.mrf.mxu0
    %v523 = vadd.f32 %v280, %v522
    %524 = vmatmul.f32.gmra.mxu0 %v141
    %v525 = vpop.f32.mrf.mxu0
    %v526 = vadd.f32 %v280, %v525
    %527 = vmatmul.f32.gmra.mxu0 %v142
    %v528 = vpop.f32.mrf.mxu0
    %v529 = vadd.f32 %v280, %v528
    %530 = vmatmul.f32.gmra.mxu0 %v143
    %v531 = vpop.f32.mrf.mxu0
    %v532 = vadd.f32 %v280, %v531
    %533 = vmatmul.f32.gmra.mxu0 %v144
    %v534 = vpop.f32.mrf.mxu0
    %v535 = vadd.f32 %v280, %v534
    %536 = vdwg.mxu0
    %537 = vmatpush.msra.mxu0 %v271
    %538 = vmatpush.msra.mxu0 %v263
    %539 = vmatpush.msra.mxu0 %v255
    %540 = vmatpush.msra.mxu0 %v247
    %541 = vmatpush.msra.mxu0 %v239
    %542 = vmatpush.msra.mxu0 %v231
    %543 = vmatpush.msra.mxu0 %v223
    %544 = vmatpush.msra.mxu0 %v215
    %545 = vmatpush.msra.mxu0 %v207
    %546 = vmatpush.msra.mxu0 %v199
    %547 = vmatpush.msra.mxu0 %v191
    %548 = vmatpush.msra.mxu0 %v183
    %549 = vmatpush.msra.mxu0 %v175
    %550 = vmatpush.msra.mxu0 %v167
    %551 = vmatpush.msra.mxu0 %v159
    %552 = vmatpush.msra.mxu0 %v151
    %553 = vmatmul.f32.gmra.mxu0 %v137
    %v554 = vpop.f32.mrf.mxu0
    %v555 = vadd.f32 %v281, %v554
    %556 = vmatmul.f32.gmra.mxu0 %v138
    %v557 = vpop.f32.mrf.mxu0
    %v558 = vadd.f32 %v281, %v557
    %559 = vmatmul.f32.gmra.mxu0 %v139
    %v560 = vpop.f32.mrf.mxu0
    %v561 = vadd.f32 %v281, %v560
    %562 = vmatmul.f32.gmra.mxu0 %v140
    %v563 = vpop.f32.mrf.mxu0
    %v564 = vadd.f32 %v281, %v563
    %565 = vmatmul.f32.gmra.mxu0 %v141
    %v566 = vpop.f32.mrf.mxu0
    %v567 = vadd.f32 %v281, %v566
    %568 = vmatmul.f32.gmra.mxu0 %v142
    %v569 = vpop.f32.mrf.mxu0
    %v570 = vadd.f32 %v281, %v569
    %571 = vmatmul.f32.gmra.mxu0 %v143
    %v572 = vpop.f32.mrf.mxu0
    %v573 = vadd.f32 %v281, %v572
    %574 = vmatmul.f32.gmra.mxu0 %v144
    %v575 = vpop.f32.mrf.mxu0
    %v576 = vadd.f32 %v281, %v575
    %577 = vdwg.mxu0
    %578 = vmatpush.msra.mxu0 %v272
    %579 = vmatpush.msra.mxu0 %v264
    %580 = vmatpush.msra.mxu0 %v256
    %581 = vmatpush.msra.mxu0 %v248
    %582 = vmatpush.msra.mxu0 %v240
    %583 = vmatpush.msra.mxu0 %v232
    %584 = vmatpush.msra.mxu0 %v224
    %585 = vmatpush.msra.mxu0 %v216
    %586 = vmatpush.msra.mxu0 %v208
    %587 = vmatpush.msra.mxu0 %v200
    %588 = vmatpush.msra.mxu0 %v192
    %589 = vmatpush.msra.mxu0 %v184
    %590 = vmatpush.msra.mxu0 %v176
    %591 = vmatpush.msra.mxu0 %v168
    %592 = vmatpush.msra.mxu0 %v160
    %593 = vmatpush.msra.mxu0 %v152
    %594 = vmatmul.f32.gmra.mxu0 %v137
    %v595 = vpop.f32.mrf.mxu0
    %v596 = vadd.f32 %v282, %v595
    %597 = vmatmul.f32.gmra.mxu0 %v138
    %v598 = vpop.f32.mrf.mxu0
    %v599 = vadd.f32 %v282, %v598
    %600 = vmatmul.f32.gmra.mxu0 %v139
    %v601 = vpop.f32.mrf.mxu0
    %v602 = vadd.f32 %v282, %v601
    %603 = vmatmul.f32.gmra.mxu0 %v140
    %v604 = vpop.f32.mrf.mxu0
    %v605 = vadd.f32 %v282, %v604
    %606 = vmatmul.f32.gmra.mxu0 %v141
    %v607 = vpop.f32.mrf.mxu0
    %v608 = vadd.f32 %v282, %v607
    %609 = vmatmul.f32.gmra.mxu0 %v142
    %v610 = vpop.f32.mrf.mxu0
    %v611 = vadd.f32 %v282, %v610
    %612 = vmatmul.f32.gmra.mxu0 %v143
    %v613 = vpop.f32.mrf.mxu0
    %v614 = vadd.f32 %v282, %v613
    %615 = vmatmul.f32.gmra.mxu0 %v144
    %v616 = vpop.f32.mrf.mxu0
    %v617 = vadd.f32 %v282, %v616
    %618 = vdwg.mxu0
    %619 = vst [vmem:[#allocation2] sm:$0xff] %v309
    %620 = vst [vmem:[#allocation2 + $0x8] sm:$0xff] %v350
    %621 = vst [vmem:[#allocation2 + $0x10] sm:$0xff] %v391
    %622 = vst [vmem:[#allocation2 + $0x18] sm:$0xff] %v432
    %623 = vst [vmem:[#allocation2 + $0x20] sm:$0xff] %v473
    %624 = vst [vmem:[#allocation2 + $0x28] sm:$0xff] %v514
    %625 = vst [vmem:[#allocation2 + $0x30] sm:$0xff] %v555
    %626 = vst [vmem:[#allocation2 + $0x38] sm:$0xff] %v596
    %627 = vst [vmem:[#allocation2 + $0x40] sm:$0xff] %v312
    %628 = vst [vmem:[#allocation2 + $0x48] sm:$0xff] %v353
    %629 = vst [vmem:[#allocation2 + $0x50] sm:$0xff] %v394
    %630 = vst [vmem:[#allocation2 + $0x58] sm:$0xff] %v435
    %631 = vst [vmem:[#allocation2 + $0x60] sm:$0xff] %v476
    %632 = vst [vmem:[#allocation2 + $0x68] sm:$0xff] %v517
    %633 = vst [vmem:[#allocation2 + $0x70] sm:$0xff] %v558
    %634 = vst [vmem:[#allocation2 + $0x78] sm:$0xff] %v599
    %635 = vst [vmem:[#allocation2 + $0x80] sm:$0xff] %v315
    %636 = vst [vmem:[#allocation2 + $0x88] sm:$0xff] %v356
    %637 = vst [vmem:[#allocation2 + $0x90] sm:$0xff] %v397
    %638 = vst [vmem:[#allocation2 + $0x98] sm:$0xff] %v438
    %639 = vst [vmem:[#allocation2 + $0xa0] sm:$0xff] %v479
    %640 = vst [vmem:[#allocation2 + $0xa8] sm:$0xff] %v520
    %641 = vst [vmem:[#allocation2 + $0xb0] sm:$0xff] %v561
    %642 = vst [vmem:[#allocation2 + $0xb8] sm:$0xff] %v602
    %643 = vst [vmem:[#allocation2 + $0xc0] sm:$0xff] %v318
    %644 = vst [vmem:[#allocation2 + $0xc8] sm:$0xff] %v359
    %645 = vst [vmem:[#allocation2 + $0xd0] sm:$0xff] %v400
    %646 = vst [vmem:[#allocation2 + $0xd8] sm:$0xff] %v441
    %647 = vst [vmem:[#allocation2 + $0xe0] sm:$0xff] %v482
    %648 = vst [vmem:[#allocation2 + $0xe8] sm:$0xff] %v523
    %649 = vst [vmem:[#allocation2 + $0xf0] sm:$0xff] %v564
    %650 = vst [vmem:[#allocation2 + $0xf8] sm:$0xff] %v605
    %651 = vst [vmem:[#allocation2 + $0x100] sm:$0xff] %v321
    %652 = vst [vmem:[#allocation2 + $0x108] sm:$0xff] %v362
    %653 = vst [vmem:[#allocation2 + $0x110] sm:$0xff] %v403
    %654 = vst [vmem:[#allocation2 + $0x118] sm:$0xff] %v444
    %655 = vst [vmem:[#allocation2 + $0x120] sm:$0xff] %v485
    %656 = vst [vmem:[#allocation2 + $0x128] sm:$0xff] %v526
    %657 = vst [vmem:[#allocation2 + $0x130] sm:$0xff] %v567
    %658 = vst [vmem:[#allocation2 + $0x138] sm:$0xff] %v608
    %659 = vst [vmem:[#allocation2 + $0x140] sm:$0xff] %v324
    %660 = vst [vmem:[#allocation2 + $0x148] sm:$0xff] %v365
    %661 = vst [vmem:[#allocation2 + $0x150] sm:$0xff] %v406
    %662 = vst [vmem:[#allocation2 + $0x158] sm:$0xff] %v447
    %663 = vst [vmem:[#allocation2 + $0x160] sm:$0xff] %v488
    %664 = vst [vmem:[#allocation2 + $0x168] sm:$0xff] %v529
    %665 = vst [vmem:[#allocation2 + $0x170] sm:$0xff] %v570
    %666 = vst [vmem:[#allocation2 + $0x178] sm:$0xff] %v611
    %667 = vst [vmem:[#allocation2 + $0x180] sm:$0xff] %v327
    %668 = vst [vmem:[#allocation2 + $0x188] sm:$0xff] %v368
    %669 = vst [vmem:[#allocation2 + $0x190] sm:$0xff] %v409
    %670 = vst [vmem:[#allocation2 + $0x198] sm:$0xff] %v450
    %671 = vst [vmem:[#allocation2 + $0x1a0] sm:$0xff] %v491
    %672 = vst [vmem:[#allocation2 + $0x1a8] sm:$0xff] %v532
    %673 = vst [vmem:[#allocation2 + $0x1b0] sm:$0xff] %v573
    %674 = vst [vmem:[#allocation2 + $0x1b8] sm:$0xff] %v614
    %675 = vst [vmem:[#allocation2 + $0x1c0] sm:$0xff] %v330
    %676 = vst [vmem:[#allocation2 + $0x1c8] sm:$0xff] %v371
    %677 = vst [vmem:[#allocation2 + $0x1d0] sm:$0xff] %v412
    %678 = vst [vmem:[#allocation2 + $0x1d8] sm:$0xff] %v453
    %679 = vst [vmem:[#allocation2 + $0x1e0] sm:$0xff] %v494
    %680 = vst [vmem:[#allocation2 + $0x1e8] sm:$0xff] %v535
    %681 = vst [vmem:[#allocation2 + $0x1f0] sm:$0xff] %v576
    %682 = vst [vmem:[#allocation2 + $0x1f8] sm:$0xff] %v617
    %683 = vst [vmem:[#allocation3] sm:$0xff] 0.0
    %684 = vst [vmem:[#allocation4] sm:$0xff] 0.0
    %685 = vst [vmem:[#allocation5] sm:$0xff] 0.0
    %686 = vst [vmem:[#allocation6] sm:$0xff] 0.0
    %v687 = vld [vmem:[#allocation15] sm:$0xff]
    %v688 = vld [vmem:[#allocation15 + $0x8] sm:$0xff]
    %v689 = vld [vmem:[#allocation15 + $0x10] sm:$0xff]
    %v690 = vld [vmem:[#allocation15 + $0x18] sm:$0xff]
    %v691 = vld [vmem:[#allocation15 + $0x20] sm:$0xff]
    %v692 = vld [vmem:[#allocation15 + $0x28] sm:$0xff]
    %v693 = vld [vmem:[#allocation15 + $0x30] sm:$0xff]
    %v694 = vld [vmem:[#allocation15 + $0x38] sm:$0xff]
    %v695 = vld [vmem:[#allocation15 + $0x40] sm:$0xff]
    %v696 = vld [vmem:[#allocation15 + $0x48] sm:$0xff]
    %v697 = vld [vmem:[#allocation15 + $0x50] sm:$0xff]
    %v698 = vld [vmem:[#allocation15 + $0x58] sm:$0xff]
    %v699 = vld [vmem:[#allocation15 + $0x60] sm:$0xff]
    %v700 = vld [vmem:[#allocation15 + $0x68] sm:$0xff]
    %v701 = vld [vmem:[#allocation15 + $0x70] sm:$0xff]
    %v702 = vld [vmem:[#allocation15 + $0x78] sm:$0xff]
    %v703 = vld [vmem:[#allocation15 + $0x80] sm:$0xff]
    %v704 = vld [vmem:[#allocation15 + $0x88] sm:$0xff]
    %v705 = vld [vmem:[#allocation15 + $0x90] sm:$0xff]
    %v706 = vld [vmem:[#allocation15 + $0x98] sm:$0xff]
    %v707 = vld [vmem:[#allocation15 + $0xa0] sm:$0xff]
    %v708 = vld [vmem:[#allocation15 + $0xa8] sm:$0xff]
    %v709 = vld [vmem:[#allocation15 + $0xb0] sm:$0xff]
    %v710 = vld [vmem:[#allocation15 + $0xb8] sm:$0xff]
    %v711 = vld [vmem:[#allocation15 + $0xc0] sm:$0xff]
    %v712 = vld [vmem:[#allocation15 + $0xc8] sm:$0xff]
    %v713 = vld [vmem:[#allocation15 + $0xd0] sm:$0xff]
    %v714 = vld [vmem:[#allocation15 + $0xd8] sm:$0xff]
    %v715 = vld [vmem:[#allocation15 + $0xe0] sm:$0xff]
    %v716 = vld [vmem:[#allocation15 + $0xe8] sm:$0xff]
    %v717 = vld [vmem:[#allocation15 + $0xf0] sm:$0xff]
    %v718 = vld [vmem:[#allocation15 + $0xf8] sm:$0xff]
    %v719 = vld [vmem:[#allocation15 + $0x100] sm:$0xff]
    %v720 = vld [vmem:[#allocation15 + $0x108] sm:$0xff]
    %v721 = vld [vmem:[#allocation15 + $0x110] sm:$0xff]
    %v722 = vld [vmem:[#allocation15 + $0x118] sm:$0xff]
    %v723 = vld [vmem:[#allocation15 + $0x120] sm:$0xff]
    %v724 = vld [vmem:[#allocation15 + $0x128] sm:$0xff]
    %v725 = vld [vmem:[#allocation15 + $0x130] sm:$0xff]
    %v726 = vld [vmem:[#allocation15 + $0x138] sm:$0xff]
    %v727 = vld [vmem:[#allocation15 + $0x140] sm:$0xff]
    %v728 = vld [vmem:[#allocation15 + $0x148] sm:$0xff]
    %v729 = vld [vmem:[#allocation15 + $0x150] sm:$0xff]
    %v730 = vld [vmem:[#allocation15 + $0x158] sm:$0xff]
    %v731 = vld [vmem:[#allocation15 + $0x160] sm:$0xff]
    %v732 = vld [vmem:[#allocation15 + $0x168] sm:$0xff]
    %v733 = vld [vmem:[#allocation15 + $0x170] sm:$0xff]
    %v734 = vld [vmem:[#allocation15 + $0x178] sm:$0xff]
    %v735 = vld [vmem:[#allocation15 + $0x180] sm:$0xff]
    %v736 = vld [vmem:[#allocation15 + $0x188] sm:$0xff]
    %v737 = vld [vmem:[#allocation15 + $0x190] sm:$0xff]
    %v738 = vld [vmem:[#allocation15 + $0x198] sm:$0xff]
    %v739 = vld [vmem:[#allocation15 + $0x1a0] sm:$0xff]
    %v740 = vld [vmem:[#allocation15 + $0x1a8] sm:$0xff]
    %v741 = vld [vmem:[#allocation15 + $0x1b0] sm:$0xff]
    %v742 = vld [vmem:[#allocation15 + $0x1b8] sm:$0xff]
    %v743 = vld [vmem:[#allocation15 + $0x1c0] sm:$0xff]
    %v744 = vld [vmem:[#allocation15 + $0x1c8] sm:$0xff]
    %v745 = vld [vmem:[#allocation15 + $0x1d0] sm:$0xff]
    %v746 = vld [vmem:[#allocation15 + $0x1d8] sm:$0xff]
    %v747 = vld [vmem:[#allocation15 + $0x1e0] sm:$0xff]
    %v748 = vld [vmem:[#allocation15 + $0x1e8] sm:$0xff]
    %v749 = vld [vmem:[#allocation15 + $0x1f0] sm:$0xff]
    %v750 = vld [vmem:[#allocation15 + $0x1f8] sm:$0xff]
    %v751 = vld [vmem:[#allocation17] sm:$0xff]
    %v752 = vld [vmem:[#allocation17 + $0x8] sm:$0xff]
    %v753 = vld [vmem:[#allocation17 + $0x10] sm:$0xff]
    %v754 = vld [vmem:[#allocation17 + $0x18] sm:$0xff]
    %v755 = vld [vmem:[#allocation17 + $0x20] sm:$0xff]
    %v756 = vld [vmem:[#allocation17 + $0x28] sm:$0xff]
    %v757 = vld [vmem:[#allocation17 + $0x30] sm:$0xff]
    %v758 = vld [vmem:[#allocation17 + $0x38] sm:$0xff]
    %v759 = vld [vmem:[#allocation17 + $0x40] sm:$0xff]
    %v760 = vld [vmem:[#allocation17 + $0x48] sm:$0xff]
    %v761 = vld [vmem:[#allocation17 + $0x50] sm:$0xff]
    %v762 = vld [vmem:[#allocation17 + $0x58] sm:$0xff]
    %v763 = vld [vmem:[#allocation17 + $0x60] sm:$0xff]
    %v764 = vld [vmem:[#allocation17 + $0x68] sm:$0xff]
    %v765 = vld [vmem:[#allocation17 + $0x70] sm:$0xff]
    %v766 = vld [vmem:[#allocation17 + $0x78] sm:$0xff]
    %v767 = vld [vmem:[#allocation17 + $0x80] sm:$0xff]
    %v768 = vld [vmem:[#allocation17 + $0x88] sm:$0xff]
    %v769 = vld [vmem:[#allocation17 + $0x90] sm:$0xff]
    %v770 = vld [vmem:[#allocation17 + $0x98] sm:$0xff]
    %v771 = vld [vmem:[#allocation17 + $0xa0] sm:$0xff]
    %v772 = vld [vmem:[#allocation17 + $0xa8] sm:$0xff]
    %v773 = vld [vmem:[#allocation17 + $0xb0] sm:$0xff]
    %v774 = vld [vmem:[#allocation17 + $0xb8] sm:$0xff]
    %v775 = vld [vmem:[#allocation17 + $0xc0] sm:$0xff]
    %v776 = vld [vmem:[#allocation17 + $0xc8] sm:$0xff]
    %v777 = vld [vmem:[#allocation17 + $0xd0] sm:$0xff]
    %v778 = vld [vmem:[#allocation17 + $0xd8] sm:$0xff]
    %v779 = vld [vmem:[#allocation17 + $0xe0] sm:$0xff]
    %v780 = vld [vmem:[#allocation17 + $0xe8] sm:$0xff]
    %v781 = vld [vmem:[#allocation17 + $0xf0] sm:$0xff]
    %v782 = vld [vmem:[#allocation17 + $0xf8] sm:$0xff]
    %v783 = vld [vmem:[#allocation17 + $0x100] sm:$0xff]
    %v784 = vld [vmem:[#allocation17 + $0x108] sm:$0xff]
    %v785 = vld [vmem:[#allocation17 + $0x110] sm:$0xff]
    %v786 = vld [vmem:[#allocation17 + $0x118] sm:$0xff]
    %v787 = vld [vmem:[#allocation17 + $0x120] sm:$0xff]
    %v788 = vld [vmem:[#allocation17 + $0x128] sm:$0xff]
    %v789 = vld [vmem:[#allocation17 + $0x130] sm:$0xff]
    %v790 = vld [vmem:[#allocation17 + $0x138] sm:$0xff]
    %v791 = vld [vmem:[#allocation17 + $0x140] sm:$0xff]
    %v792 = vld [vmem:[#allocation17 + $0x148] sm:$0xff]
    %v793 = vld [vmem:[#allocation17 + $0x150] sm:$0xff]
    %v794 = vld [vmem:[#allocation17 + $0x158] sm:$0xff]
    %v795 = vld [vmem:[#allocation17 + $0x160] sm:$0xff]
    %v796 = vld [vmem:[#allocation17 + $0x168] sm:$0xff]
    %v797 = vld [vmem:[#allocation17 + $0x170] sm:$0xff]
    %v798 = vld [vmem:[#allocation17 + $0x178] sm:$0xff]
    %v799 = vld [vmem:[#allocation17 + $0x180] sm:$0xff]
    %v800 = vld [vmem:[#allocation17 + $0x188] sm:$0xff]
    %v801 = vld [vmem:[#allocation17 + $0x190] sm:$0xff]
    %v802 = vld [vmem:[#allocation17 + $0x198] sm:$0xff]
    %v803 = vld [vmem:[#allocation17 + $0x1a0] sm:$0xff]
    %v804 = vld [vmem:[#allocation17 + $0x1a8] sm:$0xff]
    %v805 = vld [vmem:[#allocation17 + $0x1b0] sm:$0xff]
    %v806 = vld [vmem:[#allocation17 + $0x1b8] sm:$0xff]
    %v807 = vld [vmem:[#allocation17 + $0x1c0] sm:$0xff]
    %v808 = vld [vmem:[#allocation17 + $0x1c8] sm:$0xff]
    %v809 = vld [vmem:[#allocation17 + $0x1d0] sm:$0xff]
    %v810 = vld [vmem:[#allocation17 + $0x1d8] sm:$0xff]
    %v811 = vld [vmem:[#allocation17 + $0x1e0] sm:$0xff]
    %v812 = vld [vmem:[#allocation17 + $0x1e8] sm:$0xff]
    %v813 = vld [vmem:[#allocation17 + $0x1f0] sm:$0xff]
    %v814 = vld [vmem:[#allocation17 + $0x1f8] sm:$0xff]
    %s815 = smul.u32 0, 8
    %s816 = smul.addr %s815, 8
    %s817 = scalar_lea.vmem [#allocation2], %s816
    %v818 = vld [vmem:[%s817] sm:$0xff]
    %v819 = vld [vmem:[%s817 + $0x8] sm:$0xff]
    %v820 = vld [vmem:[%s817 + $0x10] sm:$0xff]
    %v821 = vld [vmem:[%s817 + $0x18] sm:$0xff]
    %v822 = vld [vmem:[#allocation3] sm:$0xff]
    %823 = vmatpush.msra.mxu0 %v747
    %824 = vmatpush.msra.mxu0 %v743
    %825 = vmatpush.msra.mxu0 %v739
    %826 = vmatpush.msra.mxu0 %v735
    %827 = vmatpush.msra.mxu0 %v731
    %828 = vmatpush.msra.mxu0 %v727
    %829 = vmatpush.msra.mxu0 %v723
    %830 = vmatpush.msra.mxu0 %v719
    %831 = vmatpush.msra.mxu0 %v715
    %832 = vmatpush.msra.mxu0 %v711
    %833 = vmatpush.msra.mxu0 %v707
    %834 = vmatpush.msra.mxu0 %v703
    %835 = vmatpush.msra.mxu0 %v699
    %836 = vmatpush.msra.mxu0 %v695
    %837 = vmatpush.msra.mxu0 %v691
    %838 = vmatpush.msra.mxu0 %v687
    %839 = vmatmul.f32.gmra.mxu0 %v822
    %v840 = vpop.f32.mrf.mxu0
    %v841 = vadd.f32 0.0, %v840
    %842 = vdwg.mxu0
    %843 = vmatpush.msra.mxu0 %v748
    %844 = vmatpush.msra.mxu0 %v744
    %845 = vmatpush.msra.mxu0 %v740
    %846 = vmatpush.msra.mxu0 %v736
    %847 = vmatpush.msra.mxu0 %v732
    %848 = vmatpush.msra.mxu0 %v728
    %849 = vmatpush.msra.mxu0 %v724
    %850 = vmatpush.msra.mxu0 %v720
    %851 = vmatpush.msra.mxu0 %v716
    %852 = vmatpush.msra.mxu0 %v712
    %853 = vmatpush.msra.mxu0 %v708
    %854 = vmatpush.msra.mxu0 %v704
    %855 = vmatpush.msra.mxu0 %v700
    %856 = vmatpush.msra.mxu0 %v696
    %857 = vmatpush.msra.mxu0 %v692
    %858 = vmatpush.msra.mxu0 %v688
    %859 = vmatmul.f32.gmra.mxu0 %v822
    %v860 = vpop.f32.mrf.mxu0
    %v861 = vadd.f32 0.0, %v860
    %862 = vdwg.mxu0
    %863 = vmatpush.msra.mxu0 %v749
    %864 = vmatpush.msra.mxu0 %v745
    %865 = vmatpush.msra.mxu0 %v741
    %866 = vmatpush.msra.mxu0 %v737
    %867 = vmatpush.msra.mxu0 %v733
    %868 = vmatpush.msra.mxu0 %v729
    %869 = vmatpush.msra.mxu0 %v725
    %870 = vmatpush.msra.mxu0 %v721
    %871 = vmatpush.msra.mxu0 %v717
    %872 = vmatpush.msra.mxu0 %v713
    %873 = vmatpush.msra.mxu0 %v709
    %874 = vmatpush.msra.mxu0 %v705
    %875 = vmatpush.msra.mxu0 %v701
    %876 = vmatpush.msra.mxu0 %v697
    %877 = vmatpush.msra.mxu0 %v693
    %878 = vmatpush.msra.mxu0 %v689
    %879 = vmatmul.f32.gmra.mxu0 %v822
    %v880 = vpop.f32.mrf.mxu0
    %v881 = vadd.f32 0.0, %v880
    %882 = vdwg.mxu0
    %883 = vmatpush.msra.mxu0 %v750
    %884 = vmatpush.msra.mxu0 %v746
    %885 = vmatpush.msra.mxu0 %v742
    %886 = vmatpush.msra.mxu0 %v738
    %887 = vmatpush.msra.mxu0 %v734
    %888 = vmatpush.msra.mxu0 %v730
    %889 = vmatpush.msra.mxu0 %v726
    %890 = vmatpush.msra.mxu0 %v722
    %891 = vmatpush.msra.mxu0 %v718
    %892 = vmatpush.msra.mxu0 %v714
    %893 = vmatpush.msra.mxu0 %v710
    %894 = vmatpush.msra.mxu0 %v706
    %895 = vmatpush.msra.mxu0 %v702
    %896 = vmatpush.msra.mxu0 %v698
    %897 = vmatpush.msra.mxu0 %v694
    %898 = vmatpush.msra.mxu0 %v690
    %899 = vmatmul.f32.gmra.mxu0 %v822
    %v900 = vpop.f32.mrf.mxu0
    %v901 = vadd.f32 0.0, %v900
    %902 = vdwg.mxu0
    %v903 = vadd.f32 %v818, %v841
    %v904 = vadd.f32 %v819, %v861
    %v905 = vadd.f32 %v820, %v881
    %v906 = vadd.f32 %v821, %v901
    %v907 = vld [vmem:[#allocation4] sm:$0xff]
    %v908 = vxor.u32 %v903, 2147483648
    %v909 = vmul.f32 %v908, 1.442695
    %v910 = vpow.pop %v909
    %v911 = vadd.f32 %v910, 1.0
    %v912 = vrcp.pop %v911
    %v913 = vmul.f32 %v911, %v912
    %v914 = vsub.f32 1.0, %v913
    %v915 = vmul.f32 %v912, %v914
    %v916 = vadd.f32 %v912, %v915
    %vm917 = vweird.f32 %v911
    %vm918 = vweird.f32 %v912
    %vm919 = vmor %vm917, %vm918
    %v920 = vsel %vm919, %v912, %v916
    %v921 = vand.u32 2147483647, %v911
    %vm922 = vcmp.eq.f32.partialorder %v921, 8.507059e+37
    %v923 = vand.u32 %v911, 2147483648
    %v924 = vor.u32 1.1754944e-38, %v923
    %v925 = vsel %vm922, %v924, %v920
    %v926 = vmul.f32 1.0, %v925
    %v927 = vxor.u32 %v904, 2147483648
    %v928 = vmul.f32 %v927, 1.442695
    %v929 = vpow.pop %v928
    %v930 = vadd.f32 %v929, 1.0
    %v931 = vrcp.pop %v930
    %v932 = vmul.f32 %v930, %v931
    %v933 = vsub.f32 1.0, %v932
    %v934 = vmul.f32 %v931, %v933
    %v935 = vadd.f32 %v931, %v934
    %vm936 = vweird.f32 %v930
    %vm937 = vweird.f32 %v931
    %vm938 = vmor %vm936, %vm937
    %v939 = vsel %vm938, %v931, %v935
    %v940 = vand.u32 2147483647, %v930
    %vm941 = vcmp.eq.f32.partialorder %v940, 8.507059e+37
    %v942 = vand.u32 %v930, 2147483648
    %v943 = vor.u32 1.1754944e-38, %v942
    %v944 = vsel %vm941, %v943, %v939
    %v945 = vmul.f32 1.0, %v944
    %v946 = vtanh.pop %v905
    %v947 = vxor.u32 %v906, 2147483648
    %v948 = vmul.f32 %v947, 1.442695
    %v949 = vpow.pop %v948
    %v950 = vadd.f32 %v949, 1.0
    %v951 = vrcp.pop %v950
    %v952 = vmul.f32 %v950, %v951
    %v953 = vsub.f32 1.0, %v952
    %v954 = vmul.f32 %v951, %v953
    %v955 = vadd.f32 %v951, %v954
    %vm956 = vweird.f32 %v950
    %vm957 = vweird.f32 %v951
    %vm958 = vmor %vm956, %vm957
    %v959 = vsel %vm958, %v951, %v955
    %v960 = vand.u32 2147483647, %v950
    %vm961 = vcmp.eq.f32.partialorder %v960, 8.507059e+37
    %v962 = vand.u32 %v950, 2147483648
    %v963 = vor.u32 1.1754944e-38, %v962
    %v964 = vsel %vm961, %v963, %v959
    %v965 = vmul.f32 1.0, %v964
    %v966 = vmul.f32 %v945, %v907
    %v967 = vmul.f32 %v926, %v946
    %v968 = vadd.f32 %v966, %v967
    %v969 = vtanh.pop %v968
    %v970 = vmul.f32 %v965, %v969
    %971 = vst [vmem:[#allocation3] sm:$0xff] %v970
    %972 = vst [vmem:[#allocation4] sm:$0xff] %v968
    %973 = vst [vmem:[#allocation7] sm:$0xff] %v970
    %s974 = smul.u32 1, 8
    %s975 = smul.addr %s974, 8
    %s976 = scalar_lea.vmem [#allocation2], %s975
    %v977 = vld [vmem:[%s976] sm:$0xff]
    %v978 = vld [vmem:[%s976 + $0x8] sm:$0xff]
    %v979 = vld [vmem:[%s976 + $0x10] sm:$0xff]
    %v980 = vld [vmem:[%s976 + $0x18] sm:$0xff]
    %v981 = vld [vmem:[#allocation3] sm:$0xff]
    %982 = vmatpush.msra.mxu0 %v747
    %983 = vmatpush.msra.mxu0 %v743
    %984 = vmatpush.msra.mxu0 %v739
    %985 = vmatpush.msra.mxu0 %v735
    %986 = vmatpush.msra.mxu0 %v731
    %987 = vmatpush.msra.mxu0 %v727
    %988 = vmatpush.msra.mxu0 %v723
    %989 = vmatpush.msra.mxu0 %v719
    %990 = vmatpush.msra.mxu0 %v715
    %991 = vmatpush.msra.mxu0 %v711
    %992 = vmatpush.msra.mxu0 %v707
    %993 = vmatpush.msra.mxu0 %v703
    %994 = vmatpush.msra.mxu0 %v699
    %995 = vmatpush.msra.mxu0 %v695
    %996 = vmatpush.msra.mxu0 %v691
    %997 = vmatpush.msra.mxu0 %v687
    %998 = vmatmul.f32.gmra.mxu0 %v981
    %v999 = vpop.f32.mrf.mxu0
    %v1000 = vadd.f32 0.0, %v999
    %1001 = vdwg.mxu0
    %1002 = vmatpush.msra.mxu0 %v748
    %1003 = vmatpush.msra.mxu0 %v744
    %1004 = vmatpush.msra.mxu0 %v740
    %1005 = vmatpush.msra.mxu0 %v736
    %1006 = vmatpush.msra.mxu0 %v732
    %1007 = vmatpush.msra.mxu0 %v728
    %1008 = vmatpush.msra.mxu0 %v724
    %1009 = vmatpush.msra.mxu0 %v720
    %1010 = vmatpush.msra.mxu0 %v716
    %1011 = vmatpush.msra.mxu0 %v712
    %1012 = vmatpush.msra.mxu0 %v708
    %1013 = vmatpush.msra.mxu0 %v704
    %1014 = vmatpush.msra.mxu0 %v700
    %1015 = vmatpush.msra.mxu0 %v696
    %1016 = vmatpush.msra.mxu0 %v692
    %1017 = vmatpush.msra.mxu0 %v688
    %1018 = vmatmul.f32.gmra.mxu0 %v981
    %v1019 = vpop.f32.mrf.mxu0
    %v1020 = vadd.f32 0.0, %v1019
    %1021 = vdwg.mxu0
    %1022 = vmatpush.msra.mxu0 %v749
    %1023 = vmatpush.msra.mxu0 %v745
    %1024 = vmatpush.msra.mxu0 %v741
    %1025 = vmatpush.msra.mxu0 %v737
    %1026 = vmatpush.msra.mxu0 %v733
    %1027 = vmatpush.msra.mxu0 %v729
    %1028 = vmatpush.msra.mxu0 %v725
    %1029 = vmatpush.msra.mxu0 %v721
    %1030 = vmatpush.msra.mxu0 %v717
    %1031 = vmatpush.msra.mxu0 %v713
    %1032 = vmatpush.msra.mxu0 %v709
    %1033 = vmatpush.msra.mxu0 %v705
    %1034 = vmatpush.msra.mxu0 %v701
    %1035 = vmatpush.msra.mxu0 %v697
    %1036 = vmatpush.msra.mxu0 %v693
    %1037 = vmatpush.msra.mxu0 %v689
    %1038 = vmatmul.f32.gmra.mxu0 %v981
    %v1039 = vpop.f32.mrf.mxu0
    %v1040 = vadd.f32 0.0, %v1039
    %1041 = vdwg.mxu0
    %1042 = vmatpush.msra.mxu0 %v750
    %1043 = vmatpush.msra.mxu0 %v746
    %1044 = vmatpush.msra.mxu0 %v742
    %1045 = vmatpush.msra.mxu0 %v738
    %1046 = vmatpush.msra.mxu0 %v734
    %1047 = vmatpush.msra.mxu0 %v730
    %1048 = vmatpush.msra.mxu0 %v726
    %1049 = vmatpush.msra.mxu0 %v722
    %1050 = vmatpush.msra.mxu0 %v718
    %1051 = vmatpush.msra.mxu0 %v714
    %1052 = vmatpush.msra.mxu0 %v710
    %1053 = vmatpush.msra.mxu0 %v706
    %1054 = vmatpush.msra.mxu0 %v702
    %1055 = vmatpush.msra.mxu0 %v698
    %1056 = vmatpush.msra.mxu0 %v694
    %1057 = vmatpush.msra.mxu0 %v690
    %1058 = vmatmul.f32.gmra.mxu0 %v981
    %v1059 = vpop.f32.mrf.mxu0
    %v1060 = vadd.f32 0.0, %v1059
    %1061 = vdwg.mxu0
    %v1062 = vadd.f32 %v977, %v1000
    %v1063 = vadd.f32 %v978, %v1020
    %v1064 = vadd.f32 %v979, %v1040
    %v1065 = vadd.f32 %v980, %v1060
    %v1066 = vld [vmem:[#allocation4] sm:$0xff]
    %v1067 = vxor.u32 %v1062, 2147483648
    %v1068 = vmul.f32 %v1067, 1.442695
    %v1069 = vpow.pop %v1068
    %v1070 = vadd.f32 %v1069, 1.0
    %v1071 = vrcp.pop %v1070
    %v1072 = vmul.f32 %v1070, %v1071
    %v1073 = vsub.f32 1.0, %v1072
    %v1074 = vmul.f32 %v1071, %v1073
    %v1075 = vadd.f32 %v1071, %v1074
    %vm1076 = vweird.f32 %v1070
    %vm1077 = vweird.f32 %v1071
    %vm1078 = vmor %vm1076, %vm1077
    %v1079 = vsel %vm1078, %v1071, %v1075
    %v1080 = vand.u32 2147483647, %v1070
    %vm1081 = vcmp.eq.f32.partialorder %v1080, 8.507059e+37
    %v1082 = vand.u32 %v1070, 2147483648
    %v1083 = vor.u32 1.1754944e-38, %v1082
    %v1084 = vsel %vm1081, %v1083, %v1079
    %v1085 = vmul.f32 1.0, %v1084
    %v1086 = vxor.u32 %v1063, 2147483648
    %v1087 = vmul.f32 %v1086, 1.442695
    %v1088 = vpow.pop %v1087
    %v1089 = vadd.f32 %v1088, 1.0
    %v1090 = vrcp.pop %v1089
    %v1091 = vmul.f32 %v1089, %v1090
    %v1092 = vsub.f32 1.0, %v1091
    %v1093 = vmul.f32 %v1090, %v1092
    %v1094 = vadd.f32 %v1090, %v1093
    %vm1095 = vweird.f32 %v1089
    %vm1096 = vweird.f32 %v1090
    %vm1097 = vmor %vm1095, %vm1096
    %v1098 = vsel %vm1097, %v1090, %v1094
    %v1099 = vand.u32 2147483647, %v1089
    %vm1100 = vcmp.eq.f32.partialorder %v1099, 8.507059e+37
    %v1101 = vand.u32 %v1089, 2147483648
    %v1102 = vor.u32 1.1754944e-38, %v1101
    %v1103 = vsel %vm1100, %v1102, %v1098
    %v1104 = vmul.f32 1.0, %v1103
    %v1105 = vtanh.pop %v1064
    %v1106 = vxor.u32 %v1065, 2147483648
    %v1107 = vmul.f32 %v1106, 1.442695
    %v1108 = vpow.pop %v1107
    %v1109 = vadd.f32 %v1108, 1.0
    %v1110 = vrcp.pop %v1109
    %v1111 = vmul.f32 %v1109, %v1110
    %v1112 = vsub.f32 1.0, %v1111
    %v1113 = vmul.f32 %v1110, %v1112
    %v1114 = vadd.f32 %v1110, %v1113
    %vm1115 = vweird.f32 %v1109
    %vm1116 = vweird.f32 %v1110
    %vm1117 = vmor %vm1115, %vm1116
    %v1118 = vsel %vm1117, %v1110, %v1114
    %v1119 = vand.u32 2147483647, %v1109
    %vm1120 = vcmp.eq.f32.partialorder %v1119, 8.507059e+37
    %v1121 = vand.u32 %v1109, 2147483648
    %v1122 = vor.u32 1.1754944e-38, %v1121
    %v1123 = vsel %vm1120, %v1122, %v1118
    %v1124 = vmul.f32 1.0, %v1123
    %v1125 = vmul.f32 %v1104, %v1066
    %v1126 = vmul.f32 %v1085, %v1105
    %v1127 = vadd.f32 %v1125, %v1126
    %v1128 = vtanh.pop %v1127
    %v1129 = vmul.f32 %v1124, %v1128
    %1130 = vst [vmem:[#allocation3] sm:$0xff] %v1129
    %1131 = vst [vmem:[#allocation4] sm:$0xff] %v1127
    %s1132 = scalar_lea.vmem [#allocation7], 8
    %1133 = vst [vmem:[%s1132] sm:$0xff] %v1129
    %s1134 = smul.u32 2, 8
    %s1135 = smul.addr %s1134, 8
    %s1136 = scalar_lea.vmem [#allocation2], %s1135
    %v1137 = vld [vmem:[%s1136] sm:$0xff]
    %v1138 = vld [vmem:[%s1136 + $0x8] sm:$0xff]
    %v1139 = vld [vmem:[%s1136 + $0x10] sm:$0xff]
    %v1140 = vld [vmem:[%s1136 + $0x18] sm:$0xff]
    %v1141 = vld [vmem:[#allocation3] sm:$0xff]
    %1142 = vmatpush.msra.mxu0 %v747
    %1143 = vmatpush.msra.mxu0 %v743
    %1144 = vmatpush.msra.mxu0 %v739
    %1145 = vmatpush.msra.mxu0 %v735
    %1146 = vmatpush.msra.mxu0 %v731
    %1147 = vmatpush.msra.mxu0 %v727
    %1148 = vmatpush.msra.mxu0 %v723
    %1149 = vmatpush.msra.mxu0 %v719
    %1150 = vmatpush.msra.mxu0 %v715
    %1151 = vmatpush.msra.mxu0 %v711
    %1152 = vmatpush.msra.mxu0 %v707
    %1153 = vmatpush.msra.mxu0 %v703
    %1154 = vmatpush.msra.mxu0 %v699
    %1155 = vmatpush.msra.mxu0 %v695
    %1156 = vmatpush.msra.mxu0 %v691
    %1157 = vmatpush.msra.mxu0 %v687
    %1158 = vmatmul.f32.gmra.mxu0 %v1141
    %v1159 = vpop.f32.mrf.mxu0
    %v1160 = vadd.f32 0.0, %v1159
    %1161 = vdwg.mxu0
    %1162 = vmatpush.msra.mxu0 %v748
    %1163 = vmatpush.msra.mxu0 %v744
    %1164 = vmatpush.msra.mxu0 %v740
    %1165 = vmatpush.msra.mxu0 %v736
    %1166 = vmatpush.msra.mxu0 %v732
    %1167 = vmatpush.msra.mxu0 %v728
    %1168 = vmatpush.msra.mxu0 %v724
    %1169 = vmatpush.msra.mxu0 %v720
    %1170 = vmatpush.msra.mxu0 %v716
    %1171 = vmatpush.msra.mxu0 %v712
    %1172 = vmatpush.msra.mxu0 %v708
    %1173 = vmatpush.msra.mxu0 %v704
    %1174 = vmatpush.msra.mxu0 %v700
    %1175 = vmatpush.msra.mxu0 %v696
    %1176 = vmatpush.msra.mxu0 %v692
    %1177 = vmatpush.msra.mxu0 %v688
    %1178 = vmatmul.f32.gmra.mxu0 %v1141
    %v1179 = vpop.f32.mrf.mxu0
    %v1180 = vadd.f32 0.0, %v1179
    %1181 = vdwg.mxu0
    %1182 = vmatpush.msra.mxu0 %v749
    %1183 = vmatpush.msra.mxu0 %v745
    %1184 = vmatpush.msra.mxu0 %v741
    %1185 = vmatpush.msra.mxu0 %v737
    %1186 = vmatpush.msra.mxu0 %v733
    %1187 = vmatpush.msra.mxu0 %v729
    %1188 = vmatpush.msra.mxu0 %v725
    %1189 = vmatpush.msra.mxu0 %v721
    %1190 = vmatpush.msra.mxu0 %v717
    %1191 = vmatpush.msra.mxu0 %v713
    %1192 = vmatpush.msra.mxu0 %v709
    %1193 = vmatpush.msra.mxu0 %v705
    %1194 = vmatpush.msra.mxu0 %v701
    %1195 = vmatpush.msra.mxu0 %v697
    %1196 = vmatpush.msra.mxu0 %v693
    %1197 = vmatpush.msra.mxu0 %v689
    %1198 = vmatmul.f32.gmra.mxu0 %v1141
    %v1199 = vpop.f32.mrf.mxu0
    %v1200 = vadd.f32 0.0, %v1199
    %1201 = vdwg.mxu0
    %1202 = vmatpush.msra.mxu0 %v750
    %1203 = vmatpush.msra.mxu0 %v746
    %1204 = vmatpush.msra.mxu0 %v742
    %1205 = vmatpush.msra.mxu0 %v738
    %1206 = vmatpush.msra.mxu0 %v734
    %1207 = vmatpush.msra.mxu0 %v730
    %1208 = vmatpush.msra.mxu0 %v726
    %1209 = vmatpush.msra.mxu0 %v722
    %1210 = vmatpush.msra.mxu0 %v718
    %1211 = vmatpush.msra.mxu0 %v714
    %1212 = vmatpush.msra.mxu0 %v710
    %1213 = vmatpush.msra.mxu0 %v706
    %1214 = vmatpush.msra.mxu0 %v702
    %1215 = vmatpush.msra.mxu0 %v698
    %1216 = vmatpush.msra.mxu0 %v694
    %1217 = vmatpush.msra.mxu0 %v690
    %1218 = vmatmul.f32.gmra.mxu0 %v1141
    %v1219 = vpop.f32.mrf.mxu0
    %v1220 = vadd.f32 0.0, %v1219
    %1221 = vdwg.mxu0
    %v1222 = vadd.f32 %v1137, %v1160
    %v1223 = vadd.f32 %v1138, %v1180
    %v1224 = vadd.f32 %v1139, %v1200
    %v1225 = vadd.f32 %v1140, %v1220
    %v1226 = vld [vmem:[#allocation4] sm:$0xff]
    %v1227 = vxor.u32 %v1222, 2147483648
    %v1228 = vmul.f32 %v1227, 1.442695
    %v1229 = vpow.pop %v1228
    %v1230 = vadd.f32 %v1229, 1.0
    %v1231 = vrcp.pop %v1230
    %v1232 = vmul.f32 %v1230, %v1231
    %v1233 = vsub.f32 1.0, %v1232
    %v1234 = vmul.f32 %v1231, %v1233
    %v1235 = vadd.f32 %v1231, %v1234
    %vm1236 = vweird.f32 %v1230
    %vm1237 = vweird.f32 %v1231
    %vm1238 = vmor %vm1236, %vm1237
    %v1239 = vsel %vm1238, %v1231, %v1235
    %v1240 = vand.u32 2147483647, %v1230
    %vm1241 = vcmp.eq.f32.partialorder %v1240, 8.507059e+37
    %v1242 = vand.u32 %v1230, 2147483648
    %v1243 = vor.u32 1.1754944e-38, %v1242
    %v1244 = vsel %vm1241, %v1243, %v1239
    %v1245 = vmul.f32 1.0, %v1244
    %v1246 = vxor.u32 %v1223, 2147483648
    %v1247 = vmul.f32 %v1246, 1.442695
    %v1248 = vpow.pop %v1247
    %v1249 = vadd.f32 %v1248, 1.0
    %v1250 = vrcp.pop %v1249
    %v1251 = vmul.f32 %v1249, %v1250
    %v1252 = vsub.f32 1.0, %v1251
    %v1253 = vmul.f32 %v1250, %v1252
    %v1254 = vadd.f32 %v1250, %v1253
    %vm1255 = vweird.f32 %v1249
    %vm1256 = vweird.f32 %v1250
    %vm1257 = vmor %vm1255, %vm1256
    %v1258 = vsel %vm1257, %v1250, %v1254
    %v1259 = vand.u32 2147483647, %v1249
    %vm1260 = vcmp.eq.f32.partialorder %v1259, 8.507059e+37
    %v1261 = vand.u32 %v1249, 2147483648
    %v1262 = vor.u32 1.1754944e-38, %v1261
    %v1263 = vsel %vm1260, %v1262, %v1258
    %v1264 = vmul.f32 1.0, %v1263
    %v1265 = vtanh.pop %v1224
    %v1266 = vxor.u32 %v1225, 2147483648
    %v1267 = vmul.f32 %v1266, 1.442695
    %v1268 = vpow.pop %v1267
    %v1269 = vadd.f32 %v1268, 1.0
    %v1270 = vrcp.pop %v1269
    %v1271 = vmul.f32 %v1269, %v1270
    %v1272 = vsub.f32 1.0, %v1271
    %v1273 = vmul.f32 %v1270, %v1272
    %v1274 = vadd.f32 %v1270, %v1273
    %vm1275 = vweird.f32 %v1269
    %vm1276 = vweird.f32 %v1270
    %vm1277 = vmor %vm1275, %vm1276
    %v1278 = vsel %vm1277, %v1270, %v1274
    %v1279 = vand.u32 2147483647, %v1269
    %vm1280 = vcmp.eq.f32.partialorder %v1279, 8.507059e+37
    %v1281 = vand.u32 %v1269, 2147483648
    %v1282 = vor.u32 1.1754944e-38, %v1281
    %v1283 = vsel %vm1280, %v1282, %v1278
    %v1284 = vmul.f32 1.0, %v1283
    %v1285 = vmul.f32 %v1264, %v1226
    %v1286 = vmul.f32 %v1245, %v1265
    %v1287 = vadd.f32 %v1285, %v1286
    %v1288 = vtanh.pop %v1287
    %v1289 = vmul.f32 %v1284, %v1288
    %1290 = vst [vmem:[#allocation3] sm:$0xff] %v1289
    %1291 = vst [vmem:[#allocation4] sm:$0xff] %v1287
    %s1292 = scalar_lea.vmem [#allocation7], 16
    %1293 = vst [vmem:[%s1292] sm:$0xff] %v1289
    %s1294 = smul.u32 3, 8
    %s1295 = smul.addr %s1294, 8
    %s1296 = scalar_lea.vmem [#allocation2], %s1295
    %v1297 = vld [vmem:[%s1296] sm:$0xff]
    %v1298 = vld [vmem:[%s1296 + $0x8] sm:$0xff]
    %v1299 = vld [vmem:[%s1296 + $0x10] sm:$0xff]
    %v1300 = vld [vmem:[%s1296 + $0x18] sm:$0xff]
    %v1301 = vld [vmem:[#allocation3] sm:$0xff]
    %1302 = vmatpush.msra.mxu0 %v747
    %1303 = vmatpush.msra.mxu0 %v743
    %1304 = vmatpush.msra.mxu0 %v739
    %1305 = vmatpush.msra.mxu0 %v735
    %1306 = vmatpush.msra.mxu0 %v731
    %1307 = vmatpush.msra.mxu0 %v727
    %1308 = vmatpush.msra.mxu0 %v723
    %1309 = vmatpush.msra.mxu0 %v719
    %1310 = vmatpush.msra.mxu0 %v715
    %1311 = vmatpush.msra.mxu0 %v711
    %1312 = vmatpush.msra.mxu0 %v707
    %1313 = vmatpush.msra.mxu0 %v703
    %1314 = vmatpush.msra.mxu0 %v699
    %1315 = vmatpush.msra.mxu0 %v695
    %1316 = vmatpush.msra.mxu0 %v691
    %1317 = vmatpush.msra.mxu0 %v687
    %1318 = vmatmul.f32.gmra.mxu0 %v1301
    %v1319 = vpop.f32.mrf.mxu0
    %v1320 = vadd.f32 0.0, %v1319
    %1321 = vdwg.mxu0
    %1322 = vmatpush.msra.mxu0 %v748
    %1323 = vmatpush.msra.mxu0 %v744
    %1324 = vmatpush.msra.mxu0 %v740
    %1325 = vmatpush.msra.mxu0 %v736
    %1326 = vmatpush.msra.mxu0 %v732
    %1327 = vmatpush.msra.mxu0 %v728
    %1328 = vmatpush.msra.mxu0 %v724
    %1329 = vmatpush.msra.mxu0 %v720
    %1330 = vmatpush.msra.mxu0 %v716
    %1331 = vmatpush.msra.mxu0 %v712
    %1332 = vmatpush.msra.mxu0 %v708
    %1333 = vmatpush.msra.mxu0 %v704
    %1334 = vmatpush.msra.mxu0 %v700
    %1335 = vmatpush.msra.mxu0 %v696
    %1336 = vmatpush.msra.mxu0 %v692
    %1337 = vmatpush.msra.mxu0 %v688
    %1338 = vmatmul.f32.gmra.mxu0 %v1301
    %v1339 = vpop.f32.mrf.mxu0
    %v1340 = vadd.f32 0.0, %v1339
    %1341 = vdwg.mxu0
    %1342 = vmatpush.msra.mxu0 %v749
    %1343 = vmatpush.msra.mxu0 %v745
    %1344 = vmatpush.msra.mxu0 %v741
    %1345 = vmatpush.msra.mxu0 %v737
    %1346 = vmatpush.msra.mxu0 %v733
    %1347 = vmatpush.msra.mxu0 %v729
    %1348 = vmatpush.msra.mxu0 %v725
    %1349 = vmatpush.msra.mxu0 %v721
    %1350 = vmatpush.msra.mxu0 %v717
    %1351 = vmatpush.msra.mxu0 %v713
    %1352 = vmatpush.msra.mxu0 %v709
    %1353 = vmatpush.msra.mxu0 %v705
    %1354 = vmatpush.msra.mxu0 %v701
    %1355 = vmatpush.msra.mxu0 %v697
    %1356 = vmatpush.msra.mxu0 %v693
    %1357 = vmatpush.msra.mxu0 %v689
    %1358 = vmatmul.f32.gmra.mxu0 %v1301
    %v1359 = vpop.f32.mrf.mxu0
    %v1360 = vadd.f32 0.0, %v1359
    %1361 = vdwg.mxu0
    %1362 = vmatpush.msra.mxu0 %v750
    %1363 = vmatpush.msra.mxu0 %v746
    %1364 = vmatpush.msra.mxu0 %v742
    %1365 = vmatpush.msra.mxu0 %v738
    %1366 = vmatpush.msra.mxu0 %v734
    %1367 = vmatpush.msra.mxu0 %v730
    %1368 = vmatpush.msra.mxu0 %v726
    %1369 = vmatpush.msra.mxu0 %v722
    %1370 = vmatpush.msra.mxu0 %v718
    %1371 = vmatpush.msra.mxu0 %v714
    %1372 = vmatpush.msra.mxu0 %v710
    %1373 = vmatpush.msra.mxu0 %v706
    %1374 = vmatpush.msra.mxu0 %v702
    %1375 = vmatpush.msra.mxu0 %v698
    %1376 = vmatpush.msra.mxu0 %v694
    %1377 = vmatpush.msra.mxu0 %v690
    %1378 = vmatmul.f32.gmra.mxu0 %v1301
    %v1379 = vpop.f32.mrf.mxu0
    %v1380 = vadd.f32 0.0, %v1379
    %1381 = vdwg.mxu0
    %v1382 = vadd.f32 %v1297, %v1320
    %v1383 = vadd.f32 %v1298, %v1340
    %v1384 = vadd.f32 %v1299, %v1360
    %v1385 = vadd.f32 %v1300, %v1380
    %v1386 = vld [vmem:[#allocation4] sm:$0xff]
    %v1387 = vxor.u32 %v1382, 2147483648
    %v1388 = vmul.f32 %v1387, 1.442695
    %v1389 = vpow.pop %v1388
    %v1390 = vadd.f32 %v1389, 1.0
    %v1391 = vrcp.pop %v1390
    %v1392 = vmul.f32 %v1390, %v1391
    %v1393 = vsub.f32 1.0, %v1392
    %v1394 = vmul.f32 %v1391, %v1393
    %v1395 = vadd.f32 %v1391, %v1394
    %vm1396 = vweird.f32 %v1390
    %vm1397 = vweird.f32 %v1391
    %vm1398 = vmor %vm1396, %vm1397
    %v1399 = vsel %vm1398, %v1391, %v1395
    %v1400 = vand.u32 2147483647, %v1390
    %vm1401 = vcmp.eq.f32.partialorder %v1400, 8.507059e+37
    %v1402 = vand.u32 %v1390, 2147483648
    %v1403 = vor.u32 1.1754944e-38, %v1402
    %v1404 = vsel %vm1401, %v1403, %v1399
    %v1405 = vmul.f32 1.0, %v1404
    %v1406 = vxor.u32 %v1383, 2147483648
    %v1407 = vmul.f32 %v1406, 1.442695
    %v1408 = vpow.pop %v1407
    %v1409 = vadd.f32 %v1408, 1.0
    %v1410 = vrcp.pop %v1409
    %v1411 = vmul.f32 %v1409, %v1410
    %v1412 = vsub.f32 1.0, %v1411
    %v1413 = vmul.f32 %v1410, %v1412
    %v1414 = vadd.f32 %v1410, %v1413
    %vm1415 = vweird.f32 %v1409
    %vm1416 = vweird.f32 %v1410
    %vm1417 = vmor %vm1415, %vm1416
    %v1418 = vsel %vm1417, %v1410, %v1414
    %v1419 = vand.u32 2147483647, %v1409
    %vm1420 = vcmp.eq.f32.partialorder %v1419, 8.507059e+37
    %v1421 = vand.u32 %v1409, 2147483648
    %v1422 = vor.u32 1.1754944e-38, %v1421
    %v1423 = vsel %vm1420, %v1422, %v1418
    %v1424 = vmul.f32 1.0, %v1423
    %v1425 = vtanh.pop %v1384
    %v1426 = vxor.u32 %v1385, 2147483648
    %v1427 = vmul.f32 %v1426, 1.442695
    %v1428 = vpow.pop %v1427
    %v1429 = vadd.f32 %v1428, 1.0
    %v1430 = vrcp.pop %v1429
    %v1431 = vmul.f32 %v1429, %v1430
    %v1432 = vsub.f32 1.0, %v1431
    %v1433 = vmul.f32 %v1430, %v1432
    %v1434 = vadd.f32 %v1430, %v1433
    %vm1435 = vweird.f32 %v1429
    %vm1436 = vweird.f32 %v1430
    %vm1437 = vmor %vm1435, %vm1436
    %v1438 = vsel %vm1437, %v1430, %v1434
    %v1439 = vand.u32 2147483647, %v1429
    %vm1440 = vcmp.eq.f32.partialorder %v1439, 8.507059e+37
    %v1441 = vand.u32 %v1429, 2147483648
    %v1442 = vor.u32 1.1754944e-38, %v1441
    %v1443 = vsel %vm1440, %v1442, %v1438
    %v1444 = vmul.f32 1.0, %v1443
    %v1445 = vmul.f32 %v1424, %v1386
    %v1446 = vmul.f32 %v1405, %v1425
    %v1447 = vadd.f32 %v1445, %v1446
    %v1448 = vtanh.pop %v1447
    %v1449 = vmul.f32 %v1444, %v1448
    %1450 = vst [vmem:[#allocation3] sm:$0xff] %v1449
    %1451 = vst [vmem:[#allocation4] sm:$0xff] %v1447
    %s1452 = scalar_lea.vmem [#allocation7], 24
    %1453 = vst [vmem:[%s1452] sm:$0xff] %v1449
    %s1454 = smul.u32 4, 8
    %s1455 = smul.addr %s1454, 8
    %s1456 = scalar_lea.vmem [#allocation2], %s1455
    %v1457 = vld [vmem:[%s1456] sm:$0xff]
    %v1458 = vld [vmem:[%s1456 + $0x8] sm:$0xff]
    %v1459 = vld [vmem:[%s1456 + $0x10] sm:$0xff]
    %v1460 = vld [vmem:[%s1456 + $0x18] sm:$0xff]
    %v1461 = vld [vmem:[#allocation3] sm:$0xff]
    %1462 = vmatpush.msra.mxu0 %v747
    %1463 = vmatpush.msra.mxu0 %v743
    %1464 = vmatpush.msra.mxu0 %v739
    %1465 = vmatpush.msra.mxu0 %v735
    %1466 = vmatpush.msra.mxu0 %v731
    %1467 = vmatpush.msra.mxu0 %v727
    %1468 = vmatpush.msra.mxu0 %v723
    %1469 = vmatpush.msra.mxu0 %v719
    %1470 = vmatpush.msra.mxu0 %v715
    %1471 = vmatpush.msra.mxu0 %v711
    %1472 = vmatpush.msra.mxu0 %v707
    %1473 = vmatpush.msra.mxu0 %v703
    %1474 = vmatpush.msra.mxu0 %v699
    %1475 = vmatpush.msra.mxu0 %v695
    %1476 = vmatpush.msra.mxu0 %v691
    %1477 = vmatpush.msra.mxu0 %v687
    %1478 = vmatmul.f32.gmra.mxu0 %v1461
    %v1479 = vpop.f32.mrf.mxu0
    %v1480 = vadd.f32 0.0, %v1479
    %1481 = vdwg.mxu0
    %1482 = vmatpush.msra.mxu0 %v748
    %1483 = vmatpush.msra.mxu0 %v744
    %1484 = vmatpush.msra.mxu0 %v740
    %1485 = vmatpush.msra.mxu0 %v736
    %1486 = vmatpush.msra.mxu0 %v732
    %1487 = vmatpush.msra.mxu0 %v728
    %1488 = vmatpush.msra.mxu0 %v724
    %1489 = vmatpush.msra.mxu0 %v720
    %1490 = vmatpush.msra.mxu0 %v716
    %1491 = vmatpush.msra.mxu0 %v712
    %1492 = vmatpush.msra.mxu0 %v708
    %1493 = vmatpush.msra.mxu0 %v704
    %1494 = vmatpush.msra.mxu0 %v700
    %1495 = vmatpush.msra.mxu0 %v696
    %1496 = vmatpush.msra.mxu0 %v692
    %1497 = vmatpush.msra.mxu0 %v688
    %1498 = vmatmul.f32.gmra.mxu0 %v1461
    %v1499 = vpop.f32.mrf.mxu0
    %v1500 = vadd.f32 0.0, %v1499
    %1501 = vdwg.mxu0
    %1502 = vmatpush.msra.mxu0 %v749
    %1503 = vmatpush.msra.mxu0 %v745
    %1504 = vmatpush.msra.mxu0 %v741
    %1505 = vmatpush.msra.mxu0 %v737
    %1506 = vmatpush.msra.mxu0 %v733
    %1507 = vmatpush.msra.mxu0 %v729
    %1508 = vmatpush.msra.mxu0 %v725
    %1509 = vmatpush.msra.mxu0 %v721
    %1510 = vmatpush.msra.mxu0 %v717
    %1511 = vmatpush.msra.mxu0 %v713
    %1512 = vmatpush.msra.mxu0 %v709
    %1513 = vmatpush.msra.mxu0 %v705
    %1514 = vmatpush.msra.mxu0 %v701
    %1515 = vmatpush.msra.mxu0 %v697
    %1516 = vmatpush.msra.mxu0 %v693
    %1517 = vmatpush.msra.mxu0 %v689
    %1518 = vmatmul.f32.gmra.mxu0 %v1461
    %v1519 = vpop.f32.mrf.mxu0
    %v1520 = vadd.f32 0.0, %v1519
    %1521 = vdwg.mxu0
    %1522 = vmatpush.msra.mxu0 %v750
    %1523 = vmatpush.msra.mxu0 %v746
    %1524 = vmatpush.msra.mxu0 %v742
    %1525 = vmatpush.msra.mxu0 %v738
    %1526 = vmatpush.msra.mxu0 %v734
    %1527 = vmatpush.msra.mxu0 %v730
    %1528 = vmatpush.msra.mxu0 %v726
    %1529 = vmatpush.msra.mxu0 %v722
    %1530 = vmatpush.msra.mxu0 %v718
    %1531 = vmatpush.msra.mxu0 %v714
    %1532 = vmatpush.msra.mxu0 %v710
    %1533 = vmatpush.msra.mxu0 %v706
    %1534 = vmatpush.msra.mxu0 %v702
    %1535 = vmatpush.msra.mxu0 %v698
    %1536 = vmatpush.msra.mxu0 %v694
    %1537 = vmatpush.msra.mxu0 %v690
    %1538 = vmatmul.f32.gmra.mxu0 %v1461
    %v1539 = vpop.f32.mrf.mxu0
    %v1540 = vadd.f32 0.0, %v1539
    %1541 = vdwg.mxu0
    %v1542 = vadd.f32 %v1457, %v1480
    %v1543 = vadd.f32 %v1458, %v1500
    %v1544 = vadd.f32 %v1459, %v1520
    %v1545 = vadd.f32 %v1460, %v1540
    %v1546 = vld [vmem:[#allocation4] sm:$0xff]
    %v1547 = vxor.u32 %v1542, 2147483648
    %v1548 = vmul.f32 %v1547, 1.442695
    %v1549 = vpow.pop %v1548
    %v1550 = vadd.f32 %v1549, 1.0
    %v1551 = vrcp.pop %v1550
    %v1552 = vmul.f32 %v1550, %v1551
    %v1553 = vsub.f32 1.0, %v1552
    %v1554 = vmul.f32 %v1551, %v1553
    %v1555 = vadd.f32 %v1551, %v1554
    %vm1556 = vweird.f32 %v1550
    %vm1557 = vweird.f32 %v1551
    %vm1558 = vmor %vm1556, %vm1557
    %v1559 = vsel %vm1558, %v1551, %v1555
    %v1560 = vand.u32 2147483647, %v1550
    %vm1561 = vcmp.eq.f32.partialorder %v1560, 8.507059e+37
    %v1562 = vand.u32 %v1550, 2147483648
    %v1563 = vor.u32 1.1754944e-38, %v1562
    %v1564 = vsel %vm1561, %v1563, %v1559
    %v1565 = vmul.f32 1.0, %v1564
    %v1566 = vxor.u32 %v1543, 2147483648
    %v1567 = vmul.f32 %v1566, 1.442695
    %v1568 = vpow.pop %v1567
    %v1569 = vadd.f32 %v1568, 1.0
    %v1570 = vrcp.pop %v1569
    %v1571 = vmul.f32 %v1569, %v1570
    %v1572 = vsub.f32 1.0, %v1571
    %v1573 = vmul.f32 %v1570, %v1572
    %v1574 = vadd.f32 %v1570, %v1573
    %vm1575 = vweird.f32 %v1569
    %vm1576 = vweird.f32 %v1570
    %vm1577 = vmor %vm1575, %vm1576
    %v1578 = vsel %vm1577, %v1570, %v1574
    %v1579 = vand.u32 2147483647, %v1569
    %vm1580 = vcmp.eq.f32.partialorder %v1579, 8.507059e+37
    %v1581 = vand.u32 %v1569, 2147483648
    %v1582 = vor.u32 1.1754944e-38, %v1581
    %v1583 = vsel %vm1580, %v1582, %v1578
    %v1584 = vmul.f32 1.0, %v1583
    %v1585 = vtanh.pop %v1544
    %v1586 = vxor.u32 %v1545, 2147483648
    %v1587 = vmul.f32 %v1586, 1.442695
    %v1588 = vpow.pop %v1587
    %v1589 = vadd.f32 %v1588, 1.0
    %v1590 = vrcp.pop %v1589
    %v1591 = vmul.f32 %v1589, %v1590
    %v1592 = vsub.f32 1.0, %v1591
    %v1593 = vmul.f32 %v1590, %v1592
    %v1594 = vadd.f32 %v1590, %v1593
    %vm1595 = vweird.f32 %v1589
    %vm1596 = vweird.f32 %v1590
    %vm1597 = vmor %vm1595, %vm1596
    %v1598 = vsel %vm1597, %v1590, %v1594
    %v1599 = vand.u32 2147483647, %v1589
    %vm1600 = vcmp.eq.f32.partialorder %v1599, 8.507059e+37
    %v1601 = vand.u32 %v1589, 2147483648
    %v1602 = vor.u32 1.1754944e-38, %v1601
    %v1603 = vsel %vm1600, %v1602, %v1598
    %v1604 = vmul.f32 1.0, %v1603
    %v1605 = vmul.f32 %v1584, %v1546
    %v1606 = vmul.f32 %v1565, %v1585
    %v1607 = vadd.f32 %v1605, %v1606
    %v1608 = vtanh.pop %v1607
    %v1609 = vmul.f32 %v1604, %v1608
    %1610 = vst [vmem:[#allocation3] sm:$0xff] %v1609
    %1611 = vst [vmem:[#allocation4] sm:$0xff] %v1607
    %s1612 = scalar_lea.vmem [#allocation7], 32
    %1613 = vst [vmem:[%s1612] sm:$0xff] %v1609
    %s1614 = smul.u32 5, 8
    %s1615 = smul.addr %s1614, 8
    %s1616 = scalar_lea.vmem [#allocation2], %s1615
    %v1617 = vld [vmem:[%s1616] sm:$0xff]
    %v1618 = vld [vmem:[%s1616 + $0x8] sm:$0xff]
    %v1619 = vld [vmem:[%s1616 + $0x10] sm:$0xff]
    %v1620 = vld [vmem:[%s1616 + $0x18] sm:$0xff]
    %v1621 = vld [vmem:[#allocation3] sm:$0xff]
    %1622 = vmatpush.msra.mxu0 %v747
    %1623 = vmatpush.msra.mxu0 %v743
    %1624 = vmatpush.msra.mxu0 %v739
    %1625 = vmatpush.msra.mxu0 %v735
    %1626 = vmatpush.msra.mxu0 %v731
    %1627 = vmatpush.msra.mxu0 %v727
    %1628 = vmatpush.msra.mxu0 %v723
    %1629 = vmatpush.msra.mxu0 %v719
    %1630 = vmatpush.msra.mxu0 %v715
    %1631 = vmatpush.msra.mxu0 %v711
    %1632 = vmatpush.msra.mxu0 %v707
    %1633 = vmatpush.msra.mxu0 %v703
    %1634 = vmatpush.msra.mxu0 %v699
    %1635 = vmatpush.msra.mxu0 %v695
    %1636 = vmatpush.msra.mxu0 %v691
    %1637 = vmatpush.msra.mxu0 %v687
    %1638 = vmatmul.f32.gmra.mxu0 %v1621
    %v1639 = vpop.f32.mrf.mxu0
    %v1640 = vadd.f32 0.0, %v1639
    %1641 = vdwg.mxu0
    %1642 = vmatpush.msra.mxu0 %v748
    %1643 = vmatpush.msra.mxu0 %v744
    %1644 = vmatpush.msra.mxu0 %v740
    %1645 = vmatpush.msra.mxu0 %v736
    %1646 = vmatpush.msra.mxu0 %v732
    %1647 = vmatpush.msra.mxu0 %v728
    %1648 = vmatpush.msra.mxu0 %v724
    %1649 = vmatpush.msra.mxu0 %v720
    %1650 = vmatpush.msra.mxu0 %v716
    %1651 = vmatpush.msra.mxu0 %v712
    %1652 = vmatpush.msra.mxu0 %v708
    %1653 = vmatpush.msra.mxu0 %v704
    %1654 = vmatpush.msra.mxu0 %v700
    %1655 = vmatpush.msra.mxu0 %v696
    %1656 = vmatpush.msra.mxu0 %v692
    %1657 = vmatpush.msra.mxu0 %v688
    %1658 = vmatmul.f32.gmra.mxu0 %v1621
    %v1659 = vpop.f32.mrf.mxu0
    %v1660 = vadd.f32 0.0, %v1659
    %1661 = vdwg.mxu0
    %1662 = vmatpush.msra.mxu0 %v749
    %1663 = vmatpush.msra.mxu0 %v745
    %1664 = vmatpush.msra.mxu0 %v741
    %1665 = vmatpush.msra.mxu0 %v737
    %1666 = vmatpush.msra.mxu0 %v733
    %1667 = vmatpush.msra.mxu0 %v729
    %1668 = vmatpush.msra.mxu0 %v725
    %1669 = vmatpush.msra.mxu0 %v721
    %1670 = vmatpush.msra.mxu0 %v717
    %1671 = vmatpush.msra.mxu0 %v713
    %1672 = vmatpush.msra.mxu0 %v709
    %1673 = vmatpush.msra.mxu0 %v705
    %1674 = vmatpush.msra.mxu0 %v701
    %1675 = vmatpush.msra.mxu0 %v697
    %1676 = vmatpush.msra.mxu0 %v693
    %1677 = vmatpush.msra.mxu0 %v689
    %1678 = vmatmul.f32.gmra.mxu0 %v1621
    %v1679 = vpop.f32.mrf.mxu0
    %v1680 = vadd.f32 0.0, %v1679
    %1681 = vdwg.mxu0
    %1682 = vmatpush.msra.mxu0 %v750
    %1683 = vmatpush.msra.mxu0 %v746
    %1684 = vmatpush.msra.mxu0 %v742
    %1685 = vmatpush.msra.mxu0 %v738
    %1686 = vmatpush.msra.mxu0 %v734
    %1687 = vmatpush.msra.mxu0 %v730
    %1688 = vmatpush.msra.mxu0 %v726
    %1689 = vmatpush.msra.mxu0 %v722
    %1690 = vmatpush.msra.mxu0 %v718
    %1691 = vmatpush.msra.mxu0 %v714
    %1692 = vmatpush.msra.mxu0 %v710
    %1693 = vmatpush.msra.mxu0 %v706
    %1694 = vmatpush.msra.mxu0 %v702
    %1695 = vmatpush.msra.mxu0 %v698
    %1696 = vmatpush.msra.mxu0 %v694
    %1697 = vmatpush.msra.mxu0 %v690
    %1698 = vmatmul.f32.gmra.mxu0 %v1621
    %v1699 = vpop.f32.mrf.mxu0
    %v1700 = vadd.f32 0.0, %v1699
    %1701 = vdwg.mxu0
    %v1702 = vadd.f32 %v1617, %v1640
    %v1703 = vadd.f32 %v1618, %v1660
    %v1704 = vadd.f32 %v1619, %v1680
    %v1705 = vadd.f32 %v1620, %v1700
    %v1706 = vld [vmem:[#allocation4] sm:$0xff]
    %v1707 = vxor.u32 %v1702, 2147483648
    %v1708 = vmul.f32 %v1707, 1.442695
    %v1709 = vpow.pop %v1708
    %v1710 = vadd.f32 %v1709, 1.0
    %v1711 = vrcp.pop %v1710
    %v1712 = vmul.f32 %v1710, %v1711
    %v1713 = vsub.f32 1.0, %v1712
    %v1714 = vmul.f32 %v1711, %v1713
    %v1715 = vadd.f32 %v1711, %v1714
    %vm1716 = vweird.f32 %v1710
    %vm1717 = vweird.f32 %v1711
    %vm1718 = vmor %vm1716, %vm1717
    %v1719 = vsel %vm1718, %v1711, %v1715
    %v1720 = vand.u32 2147483647, %v1710
    %vm1721 = vcmp.eq.f32.partialorder %v1720, 8.507059e+37
    %v1722 = vand.u32 %v1710, 2147483648
    %v1723 = vor.u32 1.1754944e-38, %v1722
    %v1724 = vsel %vm1721, %v1723, %v1719
    %v1725 = vmul.f32 1.0, %v1724
    %v1726 = vxor.u32 %v1703, 2147483648
    %v1727 = vmul.f32 %v1726, 1.442695
    %v1728 = vpow.pop %v1727
    %v1729 = vadd.f32 %v1728, 1.0
    %v1730 = vrcp.pop %v1729
    %v1731 = vmul.f32 %v1729, %v1730
    %v1732 = vsub.f32 1.0, %v1731
    %v1733 = vmul.f32 %v1730, %v1732
    %v1734 = vadd.f32 %v1730, %v1733
    %vm1735 = vweird.f32 %v1729
    %vm1736 = vweird.f32 %v1730
    %vm1737 = vmor %vm1735, %vm1736
    %v1738 = vsel %vm1737, %v1730, %v1734
    %v1739 = vand.u32 2147483647, %v1729
    %vm1740 = vcmp.eq.f32.partialorder %v1739, 8.507059e+37
    %v1741 = vand.u32 %v1729, 2147483648
    %v1742 = vor.u32 1.1754944e-38, %v1741
    %v1743 = vsel %vm1740, %v1742, %v1738
    %v1744 = vmul.f32 1.0, %v1743
    %v1745 = vtanh.pop %v1704
    %v1746 = vxor.u32 %v1705, 2147483648
    %v1747 = vmul.f32 %v1746, 1.442695
    %v1748 = vpow.pop %v1747
    %v1749 = vadd.f32 %v1748, 1.0
    %v1750 = vrcp.pop %v1749
    %v1751 = vmul.f32 %v1749, %v1750
    %v1752 = vsub.f32 1.0, %v1751
    %v1753 = vmul.f32 %v1750, %v1752
    %v1754 = vadd.f32 %v1750, %v1753
    %vm1755 = vweird.f32 %v1749
    %vm1756 = vweird.f32 %v1750
    %vm1757 = vmor %vm1755, %vm1756
    %v1758 = vsel %vm1757, %v1750, %v1754
    %v1759 = vand.u32 2147483647, %v1749
    %vm1760 = vcmp.eq.f32.partialorder %v1759, 8.507059e+37
    %v1761 = vand.u32 %v1749, 2147483648
    %v1762 = vor.u32 1.1754944e-38, %v1761
    %v1763 = vsel %vm1760, %v1762, %v1758
    %v1764 = vmul.f32 1.0, %v1763
    %v1765 = vmul.f32 %v1744, %v1706
    %v1766 = vmul.f32 %v1725, %v1745
    %v1767 = vadd.f32 %v1765, %v1766
    %v1768 = vtanh.pop %v1767
    %v1769 = vmul.f32 %v1764, %v1768
    %1770 = vst [vmem:[#allocation3] sm:$0xff] %v1769
    %1771 = vst [vmem:[#allocation4] sm:$0xff] %v1767
    %s1772 = scalar_lea.vmem [#allocation7], 40
    %1773 = vst [vmem:[%s1772] sm:$0xff] %v1769
    %s1774 = smul.u32 6, 8
    %s1775 = smul.addr %s1774, 8
    %s1776 = scalar_lea.vmem [#allocation2], %s1775
    %v1777 = vld [vmem:[%s1776] sm:$0xff]
    %v1778 = vld [vmem:[%s1776 + $0x8] sm:$0xff]
    %v1779 = vld [vmem:[%s1776 + $0x10] sm:$0xff]
    %v1780 = vld [vmem:[%s1776 + $0x18] sm:$0xff]
    %v1781 = vld [vmem:[#allocation3] sm:$0xff]
    %1782 = vmatpush.msra.mxu0 %v747
    %1783 = vmatpush.msra.mxu0 %v743
    %1784 = vmatpush.msra.mxu0 %v739
    %1785 = vmatpush.msra.mxu0 %v735
    %1786 = vmatpush.msra.mxu0 %v731
    %1787 = vmatpush.msra.mxu0 %v727
    %1788 = vmatpush.msra.mxu0 %v723
    %1789 = vmatpush.msra.mxu0 %v719
    %1790 = vmatpush.msra.mxu0 %v715
    %1791 = vmatpush.msra.mxu0 %v711
    %1792 = vmatpush.msra.mxu0 %v707
    %1793 = vmatpush.msra.mxu0 %v703
    %1794 = vmatpush.msra.mxu0 %v699
    %1795 = vmatpush.msra.mxu0 %v695
    %1796 = vmatpush.msra.mxu0 %v691
    %1797 = vmatpush.msra.mxu0 %v687
    %1798 = vmatmul.f32.gmra.mxu0 %v1781
    %v1799 = vpop.f32.mrf.mxu0
    %v1800 = vadd.f32 0.0, %v1799
    %1801 = vdwg.mxu0
    %1802 = vmatpush.msra.mxu0 %v748
    %1803 = vmatpush.msra.mxu0 %v744
    %1804 = vmatpush.msra.mxu0 %v740
    %1805 = vmatpush.msra.mxu0 %v736
    %1806 = vmatpush.msra.mxu0 %v732
    %1807 = vmatpush.msra.mxu0 %v728
    %1808 = vmatpush.msra.mxu0 %v724
    %1809 = vmatpush.msra.mxu0 %v720
    %1810 = vmatpush.msra.mxu0 %v716
    %1811 = vmatpush.msra.mxu0 %v712
    %1812 = vmatpush.msra.mxu0 %v708
    %1813 = vmatpush.msra.mxu0 %v704
    %1814 = vmatpush.msra.mxu0 %v700
    %1815 = vmatpush.msra.mxu0 %v696
    %1816 = vmatpush.msra.mxu0 %v692
    %1817 = vmatpush.msra.mxu0 %v688
    %1818 = vmatmul.f32.gmra.mxu0 %v1781
    %v1819 = vpop.f32.mrf.mxu0
    %v1820 = vadd.f32 0.0, %v1819
    %1821 = vdwg.mxu0
    %1822 = vmatpush.msra.mxu0 %v749
    %1823 = vmatpush.msra.mxu0 %v745
    %1824 = vmatpush.msra.mxu0 %v741
    %1825 = vmatpush.msra.mxu0 %v737
    %1826 = vmatpush.msra.mxu0 %v733
    %1827 = vmatpush.msra.mxu0 %v729
    %1828 = vmatpush.msra.mxu0 %v725
    %1829 = vmatpush.msra.mxu0 %v721
    %1830 = vmatpush.msra.mxu0 %v717
    %1831 = vmatpush.msra.mxu0 %v713
    %1832 = vmatpush.msra.mxu0 %v709
    %1833 = vmatpush.msra.mxu0 %v705
    %1834 = vmatpush.msra.mxu0 %v701
    %1835 = vmatpush.msra.mxu0 %v697
    %1836 = vmatpush.msra.mxu0 %v693
    %1837 = vmatpush.msra.mxu0 %v689
    %1838 = vmatmul.f32.gmra.mxu0 %v1781
    %v1839 = vpop.f32.mrf.mxu0
    %v1840 = vadd.f32 0.0, %v1839
    %1841 = vdwg.mxu0
    %1842 = vmatpush.msra.mxu0 %v750
    %1843 = vmatpush.msra.mxu0 %v746
    %1844 = vmatpush.msra.mxu0 %v742
    %1845 = vmatpush.msra.mxu0 %v738
    %1846 = vmatpush.msra.mxu0 %v734
    %1847 = vmatpush.msra.mxu0 %v730
    %1848 = vmatpush.msra.mxu0 %v726
    %1849 = vmatpush.msra.mxu0 %v722
    %1850 = vmatpush.msra.mxu0 %v718
    %1851 = vmatpush.msra.mxu0 %v714
    %1852 = vmatpush.msra.mxu0 %v710
    %1853 = vmatpush.msra.mxu0 %v706
    %1854 = vmatpush.msra.mxu0 %v702
    %1855 = vmatpush.msra.mxu0 %v698
    %1856 = vmatpush.msra.mxu0 %v694
    %1857 = vmatpush.msra.mxu0 %v690
    %1858 = vmatmul.f32.gmra.mxu0 %v1781
    %v1859 = vpop.f32.mrf.mxu0
    %v1860 = vadd.f32 0.0, %v1859
    %1861 = vdwg.mxu0
    %v1862 = vadd.f32 %v1777, %v1800
    %v1863 = vadd.f32 %v1778, %v1820
    %v1864 = vadd.f32 %v1779, %v1840
    %v1865 = vadd.f32 %v1780, %v1860
    %v1866 = vld [vmem:[#allocation4] sm:$0xff]
    %v1867 = vxor.u32 %v1862, 2147483648
    %v1868 = vmul.f32 %v1867, 1.442695
    %v1869 = vpow.pop %v1868
    %v1870 = vadd.f32 %v1869, 1.0
    %v1871 = vrcp.pop %v1870
    %v1872 = vmul.f32 %v1870, %v1871
    %v1873 = vsub.f32 1.0, %v1872
    %v1874 = vmul.f32 %v1871, %v1873
    %v1875 = vadd.f32 %v1871, %v1874
    %vm1876 = vweird.f32 %v1870
    %vm1877 = vweird.f32 %v1871
    %vm1878 = vmor %vm1876, %vm1877
    %v1879 = vsel %vm1878, %v1871, %v1875
    %v1880 = vand.u32 2147483647, %v1870
    %vm1881 = vcmp.eq.f32.partialorder %v1880, 8.507059e+37
    %v1882 = vand.u32 %v1870, 2147483648
    %v1883 = vor.u32 1.1754944e-38, %v1882
    %v1884 = vsel %vm1881, %v1883, %v1879
    %v1885 = vmul.f32 1.0, %v1884
    %v1886 = vxor.u32 %v1863, 2147483648
    %v1887 = vmul.f32 %v1886, 1.442695
    %v1888 = vpow.pop %v1887
    %v1889 = vadd.f32 %v1888, 1.0
    %v1890 = vrcp.pop %v1889
    %v1891 = vmul.f32 %v1889, %v1890
    %v1892 = vsub.f32 1.0, %v1891
    %v1893 = vmul.f32 %v1890, %v1892
    %v1894 = vadd.f32 %v1890, %v1893
    %vm1895 = vweird.f32 %v1889
    %vm1896 = vweird.f32 %v1890
    %vm1897 = vmor %vm1895, %vm1896
    %v1898 = vsel %vm1897, %v1890, %v1894
    %v1899 = vand.u32 2147483647, %v1889
    %vm1900 = vcmp.eq.f32.partialorder %v1899, 8.507059e+37
    %v1901 = vand.u32 %v1889, 2147483648
    %v1902 = vor.u32 1.1754944e-38, %v1901
    %v1903 = vsel %vm1900, %v1902, %v1898
    %v1904 = vmul.f32 1.0, %v1903
    %v1905 = vtanh.pop %v1864
    %v1906 = vxor.u32 %v1865, 2147483648
    %v1907 = vmul.f32 %v1906, 1.442695
    %v1908 = vpow.pop %v1907
    %v1909 = vadd.f32 %v1908, 1.0
    %v1910 = vrcp.pop %v1909
    %v1911 = vmul.f32 %v1909, %v1910
    %v1912 = vsub.f32 1.0, %v1911
    %v1913 = vmul.f32 %v1910, %v1912
    %v1914 = vadd.f32 %v1910, %v1913
    %vm1915 = vweird.f32 %v1909
    %vm1916 = vweird.f32 %v1910
    %vm1917 = vmor %vm1915, %vm1916
    %v1918 = vsel %vm1917, %v1910, %v1914
    %v1919 = vand.u32 2147483647, %v1909
    %vm1920 = vcmp.eq.f32.partialorder %v1919, 8.507059e+37
    %v1921 = vand.u32 %v1909, 2147483648
    %v1922 = vor.u32 1.1754944e-38, %v1921
    %v1923 = vsel %vm1920, %v1922, %v1918
    %v1924 = vmul.f32 1.0, %v1923
    %v1925 = vmul.f32 %v1904, %v1866
    %v1926 = vmul.f32 %v1885, %v1905
    %v1927 = vadd.f32 %v1925, %v1926
    %v1928 = vtanh.pop %v1927
    %v1929 = vmul.f32 %v1924, %v1928
    %1930 = vst [vmem:[#allocation3] sm:$0xff] %v1929
    %1931 = vst [vmem:[#allocation4] sm:$0xff] %v1927
    %s1932 = scalar_lea.vmem [#allocation7], 48
    %1933 = vst [vmem:[%s1932] sm:$0xff] %v1929
    %s1934 = smul.u32 7, 8
    %s1935 = smul.addr %s1934, 8
    %s1936 = scalar_lea.vmem [#allocation2], %s1935
    %v1937 = vld [vmem:[%s1936] sm:$0xff]
    %v1938 = vld [vmem:[%s1936 + $0x8] sm:$0xff]
    %v1939 = vld [vmem:[%s1936 + $0x10] sm:$0xff]
    %v1940 = vld [vmem:[%s1936 + $0x18] sm:$0xff]
    %v1941 = vld [vmem:[#allocation3] sm:$0xff]
    %1942 = vmatpush.msra.mxu0 %v747
    %1943 = vmatpush.msra.mxu0 %v743
    %1944 = vmatpush.msra.mxu0 %v739
    %1945 = vmatpush.msra.mxu0 %v735
    %1946 = vmatpush.msra.mxu0 %v731
    %1947 = vmatpush.msra.mxu0 %v727
    %1948 = vmatpush.msra.mxu0 %v723
    %1949 = vmatpush.msra.mxu0 %v719
    %1950 = vmatpush.msra.mxu0 %v715
    %1951 = vmatpush.msra.mxu0 %v711
    %1952 = vmatpush.msra.mxu0 %v707
    %1953 = vmatpush.msra.mxu0 %v703
    %1954 = vmatpush.msra.mxu0 %v699
    %1955 = vmatpush.msra.mxu0 %v695
    %1956 = vmatpush.msra.mxu0 %v691
    %1957 = vmatpush.msra.mxu0 %v687
    %1958 = vmatmul.f32.gmra.mxu0 %v1941
    %v1959 = vpop.f32.mrf.mxu0
    %v1960 = vadd.f32 0.0, %v1959
    %1961 = vdwg.mxu0
    %1962 = vmatpush.msra.mxu0 %v748
    %1963 = vmatpush.msra.mxu0 %v744
    %1964 = vmatpush.msra.mxu0 %v740
    %1965 = vmatpush.msra.mxu0 %v736
    %1966 = vmatpush.msra.mxu0 %v732
    %1967 = vmatpush.msra.mxu0 %v728
    %1968 = vmatpush.msra.mxu0 %v724
    %1969 = vmatpush.msra.mxu0 %v720
    %1970 = vmatpush.msra.mxu0 %v716
    %1971 = vmatpush.msra.mxu0 %v712
    %1972 = vmatpush.msra.mxu0 %v708
    %1973 = vmatpush.msra.mxu0 %v704
    %1974 = vmatpush.msra.mxu0 %v700
    %1975 = vmatpush.msra.mxu0 %v696
    %1976 = vmatpush.msra.mxu0 %v692
    %1977 = vmatpush.msra.mxu0 %v688
    %1978 = vmatmul.f32.gmra.mxu0 %v1941
    %v1979 = vpop.f32.mrf.mxu0
    %v1980 = vadd.f32 0.0, %v1979
    %1981 = vdwg.mxu0
    %1982 = vmatpush.msra.mxu0 %v749
    %1983 = vmatpush.msra.mxu0 %v745
    %1984 = vmatpush.msra.mxu0 %v741
    %1985 = vmatpush.msra.mxu0 %v737
    %1986 = vmatpush.msra.mxu0 %v733
    %1987 = vmatpush.msra.mxu0 %v729
    %1988 = vmatpush.msra.mxu0 %v725
    %1989 = vmatpush.msra.mxu0 %v721
    %1990 = vmatpush.msra.mxu0 %v717
    %1991 = vmatpush.msra.mxu0 %v713
    %1992 = vmatpush.msra.mxu0 %v709
    %1993 = vmatpush.msra.mxu0 %v705
    %1994 = vmatpush.msra.mxu0 %v701
    %1995 = vmatpush.msra.mxu0 %v697
    %1996 = vmatpush.msra.mxu0 %v693
    %1997 = vmatpush.msra.mxu0 %v689
    %1998 = vmatmul.f32.gmra.mxu0 %v1941
    %v1999 = vpop.f32.mrf.mxu0
    %v2000 = vadd.f32 0.0, %v1999
    %2001 = vdwg.mxu0
    %2002 = vmatpush.msra.mxu0 %v750
    %2003 = vmatpush.msra.mxu0 %v746
    %2004 = vmatpush.msra.mxu0 %v742
    %2005 = vmatpush.msra.mxu0 %v738
    %2006 = vmatpush.msra.mxu0 %v734
    %2007 = vmatpush.msra.mxu0 %v730
    %2008 = vmatpush.msra.mxu0 %v726
    %2009 = vmatpush.msra.mxu0 %v722
    %2010 = vmatpush.msra.mxu0 %v718
    %2011 = vmatpush.msra.mxu0 %v714
    %2012 = vmatpush.msra.mxu0 %v710
    %2013 = vmatpush.msra.mxu0 %v706
    %2014 = vmatpush.msra.mxu0 %v702
    %2015 = vmatpush.msra.mxu0 %v698
    %2016 = vmatpush.msra.mxu0 %v694
    %2017 = vmatpush.msra.mxu0 %v690
    %2018 = vmatmul.f32.gmra.mxu0 %v1941
    %v2019 = vpop.f32.mrf.mxu0
    %v2020 = vadd.f32 0.0, %v2019
    %2021 = vdwg.mxu0
    %v2022 = vadd.f32 %v1937, %v1960
    %v2023 = vadd.f32 %v1938, %v1980
    %v2024 = vadd.f32 %v1939, %v2000
    %v2025 = vadd.f32 %v1940, %v2020
    %v2026 = vld [vmem:[#allocation4] sm:$0xff]
    %v2027 = vxor.u32 %v2022, 2147483648
    %v2028 = vmul.f32 %v2027, 1.442695
    %v2029 = vpow.pop %v2028
    %v2030 = vadd.f32 %v2029, 1.0
    %v2031 = vrcp.pop %v2030
    %v2032 = vmul.f32 %v2030, %v2031
    %v2033 = vsub.f32 1.0, %v2032
    %v2034 = vmul.f32 %v2031, %v2033
    %v2035 = vadd.f32 %v2031, %v2034
    %vm2036 = vweird.f32 %v2030
    %vm2037 = vweird.f32 %v2031
    %vm2038 = vmor %vm2036, %vm2037
    %v2039 = vsel %vm2038, %v2031, %v2035
    %v2040 = vand.u32 2147483647, %v2030
    %vm2041 = vcmp.eq.f32.partialorder %v2040, 8.507059e+37
    %v2042 = vand.u32 %v2030, 2147483648
    %v2043 = vor.u32 1.1754944e-38, %v2042
    %v2044 = vsel %vm2041, %v2043, %v2039
    %v2045 = vmul.f32 1.0, %v2044
    %v2046 = vxor.u32 %v2023, 2147483648
    %v2047 = vmul.f32 %v2046, 1.442695
    %v2048 = vpow.pop %v2047
    %v2049 = vadd.f32 %v2048, 1.0
    %v2050 = vrcp.pop %v2049
    %v2051 = vmul.f32 %v2049, %v2050
    %v2052 = vsub.f32 1.0, %v2051
    %v2053 = vmul.f32 %v2050, %v2052
    %v2054 = vadd.f32 %v2050, %v2053
    %vm2055 = vweird.f32 %v2049
    %vm2056 = vweird.f32 %v2050
    %vm2057 = vmor %vm2055, %vm2056
    %v2058 = vsel %vm2057, %v2050, %v2054
    %v2059 = vand.u32 2147483647, %v2049
    %vm2060 = vcmp.eq.f32.partialorder %v2059, 8.507059e+37
    %v2061 = vand.u32 %v2049, 2147483648
    %v2062 = vor.u32 1.1754944e-38, %v2061
    %v2063 = vsel %vm2060, %v2062, %v2058
    %v2064 = vmul.f32 1.0, %v2063
    %v2065 = vtanh.pop %v2024
    %v2066 = vxor.u32 %v2025, 2147483648
    %v2067 = vmul.f32 %v2066, 1.442695
    %v2068 = vpow.pop %v2067
    %v2069 = vadd.f32 %v2068, 1.0
    %v2070 = vrcp.pop %v2069
    %v2071 = vmul.f32 %v2069, %v2070
    %v2072 = vsub.f32 1.0, %v2071
    %v2073 = vmul.f32 %v2070, %v2072
    %v2074 = vadd.f32 %v2070, %v2073
    %vm2075 = vweird.f32 %v2069
    %vm2076 = vweird.f32 %v2070
    %vm2077 = vmor %vm2075, %vm2076
    %v2078 = vsel %vm2077, %v2070, %v2074
    %v2079 = vand.u32 2147483647, %v2069
    %vm2080 = vcmp.eq.f32.partialorder %v2079, 8.507059e+37
    %v2081 = vand.u32 %v2069, 2147483648
    %v2082 = vor.u32 1.1754944e-38, %v2081
    %v2083 = vsel %vm2080, %v2082, %v2078
    %v2084 = vmul.f32 1.0, %v2083
    %v2085 = vmul.f32 %v2064, %v2026
    %v2086 = vmul.f32 %v2045, %v2065
    %v2087 = vadd.f32 %v2085, %v2086
    %v2088 = vtanh.pop %v2087
    %v2089 = vmul.f32 %v2084, %v2088
    %2090 = vst [vmem:[#allocation3] sm:$0xff] %v2089
    %2091 = vst [vmem:[#allocation4] sm:$0xff] %v2087
    %s2092 = scalar_lea.vmem [#allocation7], 56
    %2093 = vst [vmem:[%s2092] sm:$0xff] %v2089
    %v2094 = vld [vmem:[%s1936 + $0x20] sm:$0xff]
    %v2095 = vld [vmem:[%s1936 + $0x28] sm:$0xff]
    %v2096 = vld [vmem:[%s1936 + $0x30] sm:$0xff]
    %v2097 = vld [vmem:[%s1936 + $0x38] sm:$0xff]
    %v2098 = vld [vmem:[#allocation5] sm:$0xff]
    %2099 = vmatpush.msra.mxu0 %v811
    %2100 = vmatpush.msra.mxu0 %v807
    %2101 = vmatpush.msra.mxu0 %v803
    %2102 = vmatpush.msra.mxu0 %v799
    %2103 = vmatpush.msra.mxu0 %v795
    %2104 = vmatpush.msra.mxu0 %v791
    %2105 = vmatpush.msra.mxu0 %v787
    %2106 = vmatpush.msra.mxu0 %v783
    %2107 = vmatpush.msra.mxu0 %v779
    %2108 = vmatpush.msra.mxu0 %v775
    %2109 = vmatpush.msra.mxu0 %v771
    %2110 = vmatpush.msra.mxu0 %v767
    %2111 = vmatpush.msra.mxu0 %v763
    %2112 = vmatpush.msra.mxu0 %v759
    %2113 = vmatpush.msra.mxu0 %v755
    %2114 = vmatpush.msra.mxu0 %v751
    %2115 = vmatmul.f32.gmra.mxu0 %v2098
    %v2116 = vpop.f32.mrf.mxu0
    %v2117 = vadd.f32 0.0, %v2116
    %2118 = vdwg.mxu0
    %2119 = vmatpush.msra.mxu0 %v812
    %2120 = vmatpush.msra.mxu0 %v808
    %2121 = vmatpush.msra.mxu0 %v804
    %2122 = vmatpush.msra.mxu0 %v800
    %2123 = vmatpush.msra.mxu0 %v796
    %2124 = vmatpush.msra.mxu0 %v792
    %2125 = vmatpush.msra.mxu0 %v788
    %2126 = vmatpush.msra.mxu0 %v784
    %2127 = vmatpush.msra.mxu0 %v780
    %2128 = vmatpush.msra.mxu0 %v776
    %2129 = vmatpush.msra.mxu0 %v772
    %2130 = vmatpush.msra.mxu0 %v768
    %2131 = vmatpush.msra.mxu0 %v764
    %2132 = vmatpush.msra.mxu0 %v760
    %2133 = vmatpush.msra.mxu0 %v756
    %2134 = vmatpush.msra.mxu0 %v752
    %2135 = vmatmul.f32.gmra.mxu0 %v2098
    %v2136 = vpop.f32.mrf.mxu0
    %v2137 = vadd.f32 0.0, %v2136
    %2138 = vdwg.mxu0
    %2139 = vmatpush.msra.mxu0 %v813
    %2140 = vmatpush.msra.mxu0 %v809
    %2141 = vmatpush.msra.mxu0 %v805
    %2142 = vmatpush.msra.mxu0 %v801
    %2143 = vmatpush.msra.mxu0 %v797
    %2144 = vmatpush.msra.mxu0 %v793
    %2145 = vmatpush.msra.mxu0 %v789
    %2146 = vmatpush.msra.mxu0 %v785
    %2147 = vmatpush.msra.mxu0 %v781
    %2148 = vmatpush.msra.mxu0 %v777
    %2149 = vmatpush.msra.mxu0 %v773
    %2150 = vmatpush.msra.mxu0 %v769
    %2151 = vmatpush.msra.mxu0 %v765
    %2152 = vmatpush.msra.mxu0 %v761
    %2153 = vmatpush.msra.mxu0 %v757
    %2154 = vmatpush.msra.mxu0 %v753
    %2155 = vmatmul.f32.gmra.mxu0 %v2098
    %v2156 = vpop.f32.mrf.mxu0
    %v2157 = vadd.f32 0.0, %v2156
    %2158 = vdwg.mxu0
    %2159 = vmatpush.msra.mxu0 %v814
    %2160 = vmatpush.msra.mxu0 %v810
    %2161 = vmatpush.msra.mxu0 %v806
    %2162 = vmatpush.msra.mxu0 %v802
    %2163 = vmatpush.msra.mxu0 %v798
    %2164 = vmatpush.msra.mxu0 %v794
    %2165 = vmatpush.msra.mxu0 %v790
    %2166 = vmatpush.msra.mxu0 %v786
    %2167 = vmatpush.msra.mxu0 %v782
    %2168 = vmatpush.msra.mxu0 %v778
    %2169 = vmatpush.msra.mxu0 %v774
    %2170 = vmatpush.msra.mxu0 %v770
    %2171 = vmatpush.msra.mxu0 %v766
    %2172 = vmatpush.msra.mxu0 %v762
    %2173 = vmatpush.msra.mxu0 %v758
    %2174 = vmatpush.msra.mxu0 %v754
    %2175 = vmatmul.f32.gmra.mxu0 %v2098
    %v2176 = vpop.f32.mrf.mxu0
    %v2177 = vadd.f32 0.0, %v2176
    %2178 = vdwg.mxu0
    %v2179 = vadd.f32 %v2094, %v2117
    %v2180 = vadd.f32 %v2095, %v2137
    %v2181 = vadd.f32 %v2096, %v2157
    %v2182 = vadd.f32 %v2097, %v2177
    %v2183 = vld [vmem:[#allocation6] sm:$0xff]
    %v2184 = vxor.u32 %v2179, 2147483648
    %v2185 = vmul.f32 %v2184, 1.442695
    %v2186 = vpow.pop %v2185
    %v2187 = vadd.f32 %v2186, 1.0
    %v2188 = vrcp.pop %v2187
    %v2189 = vmul.f32 %v2187, %v2188
    %v2190 = vsub.f32 1.0, %v2189
    %v2191 = vmul.f32 %v2188, %v2190
    %v2192 = vadd.f32 %v2188, %v2191
    %vm2193 = vweird.f32 %v2187
    %vm2194 = vweird.f32 %v2188
    %vm2195 = vmor %vm2193, %vm2194
    %v2196 = vsel %vm2195, %v2188, %v2192
    %v2197 = vand.u32 2147483647, %v2187
    %vm2198 = vcmp.eq.f32.partialorder %v2197, 8.507059e+37
    %v2199 = vand.u32 %v2187, 2147483648
    %v2200 = vor.u32 1.1754944e-38, %v2199
    %v2201 = vsel %vm2198, %v2200, %v2196
    %v2202 = vmul.f32 1.0, %v2201
    %v2203 = vxor.u32 %v2180, 2147483648
    %v2204 = vmul.f32 %v2203, 1.442695
    %v2205 = vpow.pop %v2204
    %v2206 = vadd.f32 %v2205, 1.0
    %v2207 = vrcp.pop %v2206
    %v2208 = vmul.f32 %v2206, %v2207
    %v2209 = vsub.f32 1.0, %v2208
    %v2210 = vmul.f32 %v2207, %v2209
    %v2211 = vadd.f32 %v2207, %v2210
    %vm2212 = vweird.f32 %v2206
    %vm2213 = vweird.f32 %v2207
    %vm2214 = vmor %vm2212, %vm2213
    %v2215 = vsel %vm2214, %v2207, %v2211
    %v2216 = vand.u32 2147483647, %v2206
    %vm2217 = vcmp.eq.f32.partialorder %v2216, 8.507059e+37
    %v2218 = vand.u32 %v2206, 2147483648
    %v2219 = vor.u32 1.1754944e-38, %v2218
    %v2220 = vsel %vm2217, %v2219, %v2215
    %v2221 = vmul.f32 1.0, %v2220
    %v2222 = vtanh.pop %v2181
    %v2223 = vxor.u32 %v2182, 2147483648
    %v2224 = vmul.f32 %v2223, 1.442695
    %v2225 = vpow.pop %v2224
    %v2226 = vadd.f32 %v2225, 1.0
    %v2227 = vrcp.pop %v2226
    %v2228 = vmul.f32 %v2226, %v2227
    %v2229 = vsub.f32 1.0, %v2228
    %v2230 = vmul.f32 %v2227, %v2229
    %v2231 = vadd.f32 %v2227, %v2230
    %vm2232 = vweird.f32 %v2226
    %vm2233 = vweird.f32 %v2227
    %vm2234 = vmor %vm2232, %vm2233
    %v2235 = vsel %vm2234, %v2227, %v2231
    %v2236 = vand.u32 2147483647, %v2226
    %vm2237 = vcmp.eq.f32.partialorder %v2236, 8.507059e+37
    %v2238 = vand.u32 %v2226, 2147483648
    %v2239 = vor.u32 1.1754944e-38, %v2238
    %v2240 = vsel %vm2237, %v2239, %v2235
    %v2241 = vmul.f32 1.0, %v2240
    %v2242 = vmul.f32 %v2221, %v2183
    %v2243 = vmul.f32 %v2202, %v2222
    %v2244 = vadd.f32 %v2242, %v2243
    %v2245 = vtanh.pop %v2244
    %v2246 = vmul.f32 %v2241, %v2245
    %2247 = vst [vmem:[#allocation5] sm:$0xff] %v2246
    %2248 = vst [vmem:[#allocation6] sm:$0xff] %v2244
    %s2249 = scalar_lea.vmem [#allocation8], 56
    %2250 = vst [vmem:[%s2249] sm:$0xff] %v2246
    %v2251 = vld [vmem:[%s1776 + $0x20] sm:$0xff]
    %v2252 = vld [vmem:[%s1776 + $0x28] sm:$0xff]
    %v2253 = vld [vmem:[%s1776 + $0x30] sm:$0xff]
    %v2254 = vld [vmem:[%s1776 + $0x38] sm:$0xff]
    %v2255 = vld [vmem:[#allocation5] sm:$0xff]
    %2256 = vmatpush.msra.mxu0 %v811
    %2257 = vmatpush.msra.mxu0 %v807
    %2258 = vmatpush.msra.mxu0 %v803
    %2259 = vmatpush.msra.mxu0 %v799
    %2260 = vmatpush.msra.mxu0 %v795
    %2261 = vmatpush.msra.mxu0 %v791
    %2262 = vmatpush.msra.mxu0 %v787
    %2263 = vmatpush.msra.mxu0 %v783
    %2264 = vmatpush.msra.mxu0 %v779
    %2265 = vmatpush.msra.mxu0 %v775
    %2266 = vmatpush.msra.mxu0 %v771
    %2267 = vmatpush.msra.mxu0 %v767
    %2268 = vmatpush.msra.mxu0 %v763
    %2269 = vmatpush.msra.mxu0 %v759
    %2270 = vmatpush.msra.mxu0 %v755
    %2271 = vmatpush.msra.mxu0 %v751
    %2272 = vmatmul.f32.gmra.mxu0 %v2255
    %v2273 = vpop.f32.mrf.mxu0
    %v2274 = vadd.f32 0.0, %v2273
    %2275 = vdwg.mxu0
    %2276 = vmatpush.msra.mxu0 %v812
    %2277 = vmatpush.msra.mxu0 %v808
    %2278 = vmatpush.msra.mxu0 %v804
    %2279 = vmatpush.msra.mxu0 %v800
    %2280 = vmatpush.msra.mxu0 %v796
    %2281 = vmatpush.msra.mxu0 %v792
    %2282 = vmatpush.msra.mxu0 %v788
    %2283 = vmatpush.msra.mxu0 %v784
    %2284 = vmatpush.msra.mxu0 %v780
    %2285 = vmatpush.msra.mxu0 %v776
    %2286 = vmatpush.msra.mxu0 %v772
    %2287 = vmatpush.msra.mxu0 %v768
    %2288 = vmatpush.msra.mxu0 %v764
    %2289 = vmatpush.msra.mxu0 %v760
    %2290 = vmatpush.msra.mxu0 %v756
    %2291 = vmatpush.msra.mxu0 %v752
    %2292 = vmatmul.f32.gmra.mxu0 %v2255
    %v2293 = vpop.f32.mrf.mxu0
    %v2294 = vadd.f32 0.0, %v2293
    %2295 = vdwg.mxu0
    %2296 = vmatpush.msra.mxu0 %v813
    %2297 = vmatpush.msra.mxu0 %v809
    %2298 = vmatpush.msra.mxu0 %v805
    %2299 = vmatpush.msra.mxu0 %v801
    %2300 = vmatpush.msra.mxu0 %v797
    %2301 = vmatpush.msra.mxu0 %v793
    %2302 = vmatpush.msra.mxu0 %v789
    %2303 = vmatpush.msra.mxu0 %v785
    %2304 = vmatpush.msra.mxu0 %v781
    %2305 = vmatpush.msra.mxu0 %v777
    %2306 = vmatpush.msra.mxu0 %v773
    %2307 = vmatpush.msra.mxu0 %v769
    %2308 = vmatpush.msra.mxu0 %v765
    %2309 = vmatpush.msra.mxu0 %v761
    %2310 = vmatpush.msra.mxu0 %v757
    %2311 = vmatpush.msra.mxu0 %v753
    %2312 = vmatmul.f32.gmra.mxu0 %v2255
    %v2313 = vpop.f32.mrf.mxu0
    %v2314 = vadd.f32 0.0, %v2313
    %2315 = vdwg.mxu0
    %2316 = vmatpush.msra.mxu0 %v814
    %2317 = vmatpush.msra.mxu0 %v810
    %2318 = vmatpush.msra.mxu0 %v806
    %2319 = vmatpush.msra.mxu0 %v802
    %2320 = vmatpush.msra.mxu0 %v798
    %2321 = vmatpush.msra.mxu0 %v794
    %2322 = vmatpush.msra.mxu0 %v790
    %2323 = vmatpush.msra.mxu0 %v786
    %2324 = vmatpush.msra.mxu0 %v782
    %2325 = vmatpush.msra.mxu0 %v778
    %2326 = vmatpush.msra.mxu0 %v774
    %2327 = vmatpush.msra.mxu0 %v770
    %2328 = vmatpush.msra.mxu0 %v766
    %2329 = vmatpush.msra.mxu0 %v762
    %2330 = vmatpush.msra.mxu0 %v758
    %2331 = vmatpush.msra.mxu0 %v754
    %2332 = vmatmul.f32.gmra.mxu0 %v2255
    %v2333 = vpop.f32.mrf.mxu0
    %v2334 = vadd.f32 0.0, %v2333
    %2335 = vdwg.mxu0
    %v2336 = vadd.f32 %v2251, %v2274
    %v2337 = vadd.f32 %v2252, %v2294
    %v2338 = vadd.f32 %v2253, %v2314
    %v2339 = vadd.f32 %v2254, %v2334
    %v2340 = vld [vmem:[#allocation6] sm:$0xff]
    %v2341 = vxor.u32 %v2336, 2147483648
    %v2342 = vmul.f32 %v2341, 1.442695
    %v2343 = vpow.pop %v2342
    %v2344 = vadd.f32 %v2343, 1.0
    %v2345 = vrcp.pop %v2344
    %v2346 = vmul.f32 %v2344, %v2345
    %v2347 = vsub.f32 1.0, %v2346
    %v2348 = vmul.f32 %v2345, %v2347
    %v2349 = vadd.f32 %v2345, %v2348
    %vm2350 = vweird.f32 %v2344
    %vm2351 = vweird.f32 %v2345
    %vm2352 = vmor %vm2350, %vm2351
    %v2353 = vsel %vm2352, %v2345, %v2349
    %v2354 = vand.u32 2147483647, %v2344
    %vm2355 = vcmp.eq.f32.partialorder %v2354, 8.507059e+37
    %v2356 = vand.u32 %v2344, 2147483648
    %v2357 = vor.u32 1.1754944e-38, %v2356
    %v2358 = vsel %vm2355, %v2357, %v2353
    %v2359 = vmul.f32 1.0, %v2358
    %v2360 = vxor.u32 %v2337, 2147483648
    %v2361 = vmul.f32 %v2360, 1.442695
    %v2362 = vpow.pop %v2361
    %v2363 = vadd.f32 %v2362, 1.0
    %v2364 = vrcp.pop %v2363
    %v2365 = vmul.f32 %v2363, %v2364
    %v2366 = vsub.f32 1.0, %v2365
    %v2367 = vmul.f32 %v2364, %v2366
    %v2368 = vadd.f32 %v2364, %v2367
    %vm2369 = vweird.f32 %v2363
    %vm2370 = vweird.f32 %v2364
    %vm2371 = vmor %vm2369, %vm2370
    %v2372 = vsel %vm2371, %v2364, %v2368
    %v2373 = vand.u32 2147483647, %v2363
    %vm2374 = vcmp.eq.f32.partialorder %v2373, 8.507059e+37
    %v2375 = vand.u32 %v2363, 2147483648
    %v2376 = vor.u32 1.1754944e-38, %v2375
    %v2377 = vsel %vm2374, %v2376, %v2372
    %v2378 = vmul.f32 1.0, %v2377
    %v2379 = vtanh.pop %v2338
    %v2380 = vxor.u32 %v2339, 2147483648
    %v2381 = vmul.f32 %v2380, 1.442695
    %v2382 = vpow.pop %v2381
    %v2383 = vadd.f32 %v2382, 1.0
    %v2384 = vrcp.pop %v2383
    %v2385 = vmul.f32 %v2383, %v2384
    %v2386 = vsub.f32 1.0, %v2385
    %v2387 = vmul.f32 %v2384, %v2386
    %v2388 = vadd.f32 %v2384, %v2387
    %vm2389 = vweird.f32 %v2383
    %vm2390 = vweird.f32 %v2384
    %vm2391 = vmor %vm2389, %vm2390
    %v2392 = vsel %vm2391, %v2384, %v2388
    %v2393 = vand.u32 2147483647, %v2383
    %vm2394 = vcmp.eq.f32.partialorder %v2393, 8.507059e+37
    %v2395 = vand.u32 %v2383, 2147483648
    %v2396 = vor.u32 1.1754944e-38, %v2395
    %v2397 = vsel %vm2394, %v2396, %v2392
    %v2398 = vmul.f32 1.0, %v2397
    %v2399 = vmul.f32 %v2378, %v2340
    %v2400 = vmul.f32 %v2359, %v2379
    %v2401 = vadd.f32 %v2399, %v2400
    %v2402 = vtanh.pop %v2401
    %v2403 = vmul.f32 %v2398, %v2402
    %2404 = vst [vmem:[#allocation5] sm:$0xff] %v2403
    %2405 = vst [vmem:[#allocation6] sm:$0xff] %v2401
    %s2406 = scalar_lea.vmem [#allocation8], 48
    %2407 = vst [vmem:[%s2406] sm:$0xff] %v2403
    %v2408 = vld [vmem:[%s1616 + $0x20] sm:$0xff]
    %v2409 = vld [vmem:[%s1616 + $0x28] sm:$0xff]
    %v2410 = vld [vmem:[%s1616 + $0x30] sm:$0xff]
    %v2411 = vld [vmem:[%s1616 + $0x38] sm:$0xff]
    %v2412 = vld [vmem:[#allocation5] sm:$0xff]
    %2413 = vmatpush.msra.mxu0 %v811
    %2414 = vmatpush.msra.mxu0 %v807
    %2415 = vmatpush.msra.mxu0 %v803
    %2416 = vmatpush.msra.mxu0 %v799
    %2417 = vmatpush.msra.mxu0 %v795
    %2418 = vmatpush.msra.mxu0 %v791
    %2419 = vmatpush.msra.mxu0 %v787
    %2420 = vmatpush.msra.mxu0 %v783
    %2421 = vmatpush.msra.mxu0 %v779
    %2422 = vmatpush.msra.mxu0 %v775
    %2423 = vmatpush.msra.mxu0 %v771
    %2424 = vmatpush.msra.mxu0 %v767
    %2425 = vmatpush.msra.mxu0 %v763
    %2426 = vmatpush.msra.mxu0 %v759
    %2427 = vmatpush.msra.mxu0 %v755
    %2428 = vmatpush.msra.mxu0 %v751
    %2429 = vmatmul.f32.gmra.mxu0 %v2412
    %v2430 = vpop.f32.mrf.mxu0
    %v2431 = vadd.f32 0.0, %v2430
    %2432 = vdwg.mxu0
    %2433 = vmatpush.msra.mxu0 %v812
    %2434 = vmatpush.msra.mxu0 %v808
    %2435 = vmatpush.msra.mxu0 %v804
    %2436 = vmatpush.msra.mxu0 %v800
    %2437 = vmatpush.msra.mxu0 %v796
    %2438 = vmatpush.msra.mxu0 %v792
    %2439 = vmatpush.msra.mxu0 %v788
    %2440 = vmatpush.msra.mxu0 %v784
    %2441 = vmatpush.msra.mxu0 %v780
    %2442 = vmatpush.msra.mxu0 %v776
    %2443 = vmatpush.msra.mxu0 %v772
    %2444 = vmatpush.msra.mxu0 %v768
    %2445 = vmatpush.msra.mxu0 %v764
    %2446 = vmatpush.msra.mxu0 %v760
    %2447 = vmatpush.msra.mxu0 %v756
    %2448 = vmatpush.msra.mxu0 %v752
    %2449 = vmatmul.f32.gmra.mxu0 %v2412
    %v2450 = vpop.f32.mrf.mxu0
    %v2451 = vadd.f32 0.0, %v2450
    %2452 = vdwg.mxu0
    %2453 = vmatpush.msra.mxu0 %v813
    %2454 = vmatpush.msra.mxu0 %v809
    %2455 = vmatpush.msra.mxu0 %v805
    %2456 = vmatpush.msra.mxu0 %v801
    %2457 = vmatpush.msra.mxu0 %v797
    %2458 = vmatpush.msra.mxu0 %v793
    %2459 = vmatpush.msra.mxu0 %v789
    %2460 = vmatpush.msra.mxu0 %v785
    %2461 = vmatpush.msra.mxu0 %v781
    %2462 = vmatpush.msra.mxu0 %v777
    %2463 = vmatpush.msra.mxu0 %v773
    %2464 = vmatpush.msra.mxu0 %v769
    %2465 = vmatpush.msra.mxu0 %v765
    %2466 = vmatpush.msra.mxu0 %v761
    %2467 = vmatpush.msra.mxu0 %v757
    %2468 = vmatpush.msra.mxu0 %v753
    %2469 = vmatmul.f32.gmra.mxu0 %v2412
    %v2470 = vpop.f32.mrf.mxu0
    %v2471 = vadd.f32 0.0, %v2470
    %2472 = vdwg.mxu0
    %2473 = vmatpush.msra.mxu0 %v814
    %2474 = vmatpush.msra.mxu0 %v810
    %2475 = vmatpush.msra.mxu0 %v806
    %2476 = vmatpush.msra.mxu0 %v802
    %2477 = vmatpush.msra.mxu0 %v798
    %2478 = vmatpush.msra.mxu0 %v794
    %2479 = vmatpush.msra.mxu0 %v790
    %2480 = vmatpush.msra.mxu0 %v786
    %2481 = vmatpush.msra.mxu0 %v782
    %2482 = vmatpush.msra.mxu0 %v778
    %2483 = vmatpush.msra.mxu0 %v774
    %2484 = vmatpush.msra.mxu0 %v770
    %2485 = vmatpush.msra.mxu0 %v766
    %2486 = vmatpush.msra.mxu0 %v762
    %2487 = vmatpush.msra.mxu0 %v758
    %2488 = vmatpush.msra.mxu0 %v754
    %2489 = vmatmul.f32.gmra.mxu0 %v2412
    %v2490 = vpop.f32.mrf.mxu0
    %v2491 = vadd.f32 0.0, %v2490
    %2492 = vdwg.mxu0
    %v2493 = vadd.f32 %v2408, %v2431
    %v2494 = vadd.f32 %v2409, %v2451
    %v2495 = vadd.f32 %v2410, %v2471
    %v2496 = vadd.f32 %v2411, %v2491
    %v2497 = vld [vmem:[#allocation6] sm:$0xff]
    %v2498 = vxor.u32 %v2493, 2147483648
    %v2499 = vmul.f32 %v2498, 1.442695
    %v2500 = vpow.pop %v2499
    %v2501 = vadd.f32 %v2500, 1.0
    %v2502 = vrcp.pop %v2501
    %v2503 = vmul.f32 %v2501, %v2502
    %v2504 = vsub.f32 1.0, %v2503
    %v2505 = vmul.f32 %v2502, %v2504
    %v2506 = vadd.f32 %v2502, %v2505
    %vm2507 = vweird.f32 %v2501
    %vm2508 = vweird.f32 %v2502
    %vm2509 = vmor %vm2507, %vm2508
    %v2510 = vsel %vm2509, %v2502, %v2506
    %v2511 = vand.u32 2147483647, %v2501
    %vm2512 = vcmp.eq.f32.partialorder %v2511, 8.507059e+37
    %v2513 = vand.u32 %v2501, 2147483648
    %v2514 = vor.u32 1.1754944e-38, %v2513
    %v2515 = vsel %vm2512, %v2514, %v2510
    %v2516 = vmul.f32 1.0, %v2515
    %v2517 = vxor.u32 %v2494, 2147483648
    %v2518 = vmul.f32 %v2517, 1.442695
    %v2519 = vpow.pop %v2518
    %v2520 = vadd.f32 %v2519, 1.0
    %v2521 = vrcp.pop %v2520
    %v2522 = vmul.f32 %v2520, %v2521
    %v2523 = vsub.f32 1.0, %v2522
    %v2524 = vmul.f32 %v2521, %v2523
    %v2525 = vadd.f32 %v2521, %v2524
    %vm2526 = vweird.f32 %v2520
    %vm2527 = vweird.f32 %v2521
    %vm2528 = vmor %vm2526, %vm2527
    %v2529 = vsel %vm2528, %v2521, %v2525
    %v2530 = vand.u32 2147483647, %v2520
    %vm2531 = vcmp.eq.f32.partialorder %v2530, 8.507059e+37
    %v2532 = vand.u32 %v2520, 2147483648
    %v2533 = vor.u32 1.1754944e-38, %v2532
    %v2534 = vsel %vm2531, %v2533, %v2529
    %v2535 = vmul.f32 1.0, %v2534
    %v2536 = vtanh.pop %v2495
    %v2537 = vxor.u32 %v2496, 2147483648
    %v2538 = vmul.f32 %v2537, 1.442695
    %v2539 = vpow.pop %v2538
    %v2540 = vadd.f32 %v2539, 1.0
    %v2541 = vrcp.pop %v2540
    %v2542 = vmul.f32 %v2540, %v2541
    %v2543 = vsub.f32 1.0, %v2542
    %v2544 = vmul.f32 %v2541, %v2543
    %v2545 = vadd.f32 %v2541, %v2544
    %vm2546 = vweird.f32 %v2540
    %vm2547 = vweird.f32 %v2541
    %vm2548 = vmor %vm2546, %vm2547
    %v2549 = vsel %vm2548, %v2541, %v2545
    %v2550 = vand.u32 2147483647, %v2540
    %vm2551 = vcmp.eq.f32.partialorder %v2550, 8.507059e+37
    %v2552 = vand.u32 %v2540, 2147483648
    %v2553 = vor.u32 1.1754944e-38, %v2552
    %v2554 = vsel %vm2551, %v2553, %v2549
    %v2555 = vmul.f32 1.0, %v2554
    %v2556 = vmul.f32 %v2535, %v2497
    %v2557 = vmul.f32 %v2516, %v2536
    %v2558 = vadd.f32 %v2556, %v2557
    %v2559 = vtanh.pop %v2558
    %v2560 = vmul.f32 %v2555, %v2559
    %2561 = vst [vmem:[#allocation5] sm:$0xff] %v2560
    %2562 = vst [vmem:[#allocation6] sm:$0xff] %v2558
    %s2563 = scalar_lea.vmem [#allocation8], 40
    %2564 = vst [vmem:[%s2563] sm:$0xff] %v2560
    %v2565 = vld [vmem:[%s1456 + $0x20] sm:$0xff]
    %v2566 = vld [vmem:[%s1456 + $0x28] sm:$0xff]
    %v2567 = vld [vmem:[%s1456 + $0x30] sm:$0xff]
    %v2568 = vld [vmem:[%s1456 + $0x38] sm:$0xff]
    %v2569 = vld [vmem:[#allocation5] sm:$0xff]
    %2570 = vmatpush.msra.mxu0 %v811
    %2571 = vmatpush.msra.mxu0 %v807
    %2572 = vmatpush.msra.mxu0 %v803
    %2573 = vmatpush.msra.mxu0 %v799
    %2574 = vmatpush.msra.mxu0 %v795
    %2575 = vmatpush.msra.mxu0 %v791
    %2576 = vmatpush.msra.mxu0 %v787
    %2577 = vmatpush.msra.mxu0 %v783
    %2578 = vmatpush.msra.mxu0 %v779
    %2579 = vmatpush.msra.mxu0 %v775
    %2580 = vmatpush.msra.mxu0 %v771
    %2581 = vmatpush.msra.mxu0 %v767
    %2582 = vmatpush.msra.mxu0 %v763
    %2583 = vmatpush.msra.mxu0 %v759
    %2584 = vmatpush.msra.mxu0 %v755
    %2585 = vmatpush.msra.mxu0 %v751
    %2586 = vmatmul.f32.gmra.mxu0 %v2569
    %v2587 = vpop.f32.mrf.mxu0
    %v2588 = vadd.f32 0.0, %v2587
    %2589 = vdwg.mxu0
    %2590 = vmatpush.msra.mxu0 %v812
    %2591 = vmatpush.msra.mxu0 %v808
    %2592 = vmatpush.msra.mxu0 %v804
    %2593 = vmatpush.msra.mxu0 %v800
    %2594 = vmatpush.msra.mxu0 %v796
    %2595 = vmatpush.msra.mxu0 %v792
    %2596 = vmatpush.msra.mxu0 %v788
    %2597 = vmatpush.msra.mxu0 %v784
    %2598 = vmatpush.msra.mxu0 %v780
    %2599 = vmatpush.msra.mxu0 %v776
    %2600 = vmatpush.msra.mxu0 %v772
    %2601 = vmatpush.msra.mxu0 %v768
    %2602 = vmatpush.msra.mxu0 %v764
    %2603 = vmatpush.msra.mxu0 %v760
    %2604 = vmatpush.msra.mxu0 %v756
    %2605 = vmatpush.msra.mxu0 %v752
    %2606 = vmatmul.f32.gmra.mxu0 %v2569
    %v2607 = vpop.f32.mrf.mxu0
    %v2608 = vadd.f32 0.0, %v2607
    %2609 = vdwg.mxu0
    %2610 = vmatpush.msra.mxu0 %v813
    %2611 = vmatpush.msra.mxu0 %v809
    %2612 = vmatpush.msra.mxu0 %v805
    %2613 = vmatpush.msra.mxu0 %v801
    %2614 = vmatpush.msra.mxu0 %v797
    %2615 = vmatpush.msra.mxu0 %v793
    %2616 = vmatpush.msra.mxu0 %v789
    %2617 = vmatpush.msra.mxu0 %v785
    %2618 = vmatpush.msra.mxu0 %v781
    %2619 = vmatpush.msra.mxu0 %v777
    %2620 = vmatpush.msra.mxu0 %v773
    %2621 = vmatpush.msra.mxu0 %v769
    %2622 = vmatpush.msra.mxu0 %v765
    %2623 = vmatpush.msra.mxu0 %v761
    %2624 = vmatpush.msra.mxu0 %v757
    %2625 = vmatpush.msra.mxu0 %v753
    %2626 = vmatmul.f32.gmra.mxu0 %v2569
    %v2627 = vpop.f32.mrf.mxu0
    %v2628 = vadd.f32 0.0, %v2627
    %2629 = vdwg.mxu0
    %2630 = vmatpush.msra.mxu0 %v814
    %2631 = vmatpush.msra.mxu0 %v810
    %2632 = vmatpush.msra.mxu0 %v806
    %2633 = vmatpush.msra.mxu0 %v802
    %2634 = vmatpush.msra.mxu0 %v798
    %2635 = vmatpush.msra.mxu0 %v794
    %2636 = vmatpush.msra.mxu0 %v790
    %2637 = vmatpush.msra.mxu0 %v786
    %2638 = vmatpush.msra.mxu0 %v782
    %2639 = vmatpush.msra.mxu0 %v778
    %2640 = vmatpush.msra.mxu0 %v774
    %2641 = vmatpush.msra.mxu0 %v770
    %2642 = vmatpush.msra.mxu0 %v766
    %2643 = vmatpush.msra.mxu0 %v762
    %2644 = vmatpush.msra.mxu0 %v758
    %2645 = vmatpush.msra.mxu0 %v754
    %2646 = vmatmul.f32.gmra.mxu0 %v2569
    %v2647 = vpop.f32.mrf.mxu0
    %v2648 = vadd.f32 0.0, %v2647
    %2649 = vdwg.mxu0
    %v2650 = vadd.f32 %v2565, %v2588
    %v2651 = vadd.f32 %v2566, %v2608
    %v2652 = vadd.f32 %v2567, %v2628
    %v2653 = vadd.f32 %v2568, %v2648
    %v2654 = vld [vmem:[#allocation6] sm:$0xff]
    %v2655 = vxor.u32 %v2650, 2147483648
    %v2656 = vmul.f32 %v2655, 1.442695
    %v2657 = vpow.pop %v2656
    %v2658 = vadd.f32 %v2657, 1.0
    %v2659 = vrcp.pop %v2658
    %v2660 = vmul.f32 %v2658, %v2659
    %v2661 = vsub.f32 1.0, %v2660
    %v2662 = vmul.f32 %v2659, %v2661
    %v2663 = vadd.f32 %v2659, %v2662
    %vm2664 = vweird.f32 %v2658
    %vm2665 = vweird.f32 %v2659
    %vm2666 = vmor %vm2664, %vm2665
    %v2667 = vsel %vm2666, %v2659, %v2663
    %v2668 = vand.u32 2147483647, %v2658
    %vm2669 = vcmp.eq.f32.partialorder %v2668, 8.507059e+37
    %v2670 = vand.u32 %v2658, 2147483648
    %v2671 = vor.u32 1.1754944e-38, %v2670
    %v2672 = vsel %vm2669, %v2671, %v2667
    %v2673 = vmul.f32 1.0, %v2672
    %v2674 = vxor.u32 %v2651, 2147483648
    %v2675 = vmul.f32 %v2674, 1.442695
    %v2676 = vpow.pop %v2675
    %v2677 = vadd.f32 %v2676, 1.0
    %v2678 = vrcp.pop %v2677
    %v2679 = vmul.f32 %v2677, %v2678
    %v2680 = vsub.f32 1.0, %v2679
    %v2681 = vmul.f32 %v2678, %v2680
    %v2682 = vadd.f32 %v2678, %v2681
    %vm2683 = vweird.f32 %v2677
    %vm2684 = vweird.f32 %v2678
    %vm2685 = vmor %vm2683, %vm2684
    %v2686 = vsel %vm2685, %v2678, %v2682
    %v2687 = vand.u32 2147483647, %v2677
    %vm2688 = vcmp.eq.f32.partialorder %v2687, 8.507059e+37
    %v2689 = vand.u32 %v2677, 2147483648
    %v2690 = vor.u32 1.1754944e-38, %v2689
    %v2691 = vsel %vm2688, %v2690, %v2686
    %v2692 = vmul.f32 1.0, %v2691
    %v2693 = vtanh.pop %v2652
    %v2694 = vxor.u32 %v2653, 2147483648
    %v2695 = vmul.f32 %v2694, 1.442695
    %v2696 = vpow.pop %v2695
    %v2697 = vadd.f32 %v2696, 1.0
    %v2698 = vrcp.pop %v2697
    %v2699 = vmul.f32 %v2697, %v2698
    %v2700 = vsub.f32 1.0, %v2699
    %v2701 = vmul.f32 %v2698, %v2700
    %v2702 = vadd.f32 %v2698, %v2701
    %vm2703 = vweird.f32 %v2697
    %vm2704 = vweird.f32 %v2698
    %vm2705 = vmor %vm2703, %vm2704
    %v2706 = vsel %vm2705, %v2698, %v2702
    %v2707 = vand.u32 2147483647, %v2697
    %vm2708 = vcmp.eq.f32.partialorder %v2707, 8.507059e+37
    %v2709 = vand.u32 %v2697, 2147483648
    %v2710 = vor.u32 1.1754944e-38, %v2709
    %v2711 = vsel %vm2708, %v2710, %v2706
    %v2712 = vmul.f32 1.0, %v2711
    %v2713 = vmul.f32 %v2692, %v2654
    %v2714 = vmul.f32 %v2673, %v2693
    %v2715 = vadd.f32 %v2713, %v2714
    %v2716 = vtanh.pop %v2715
    %v2717 = vmul.f32 %v2712, %v2716
    %2718 = vst [vmem:[#allocation5] sm:$0xff] %v2717
    %2719 = vst [vmem:[#allocation6] sm:$0xff] %v2715
    %s2720 = scalar_lea.vmem [#allocation8], 32
    %2721 = vst [vmem:[%s2720] sm:$0xff] %v2717
    %v2722 = vld [vmem:[%s1296 + $0x20] sm:$0xff]
    %v2723 = vld [vmem:[%s1296 + $0x28] sm:$0xff]
    %v2724 = vld [vmem:[%s1296 + $0x30] sm:$0xff]
    %v2725 = vld [vmem:[%s1296 + $0x38] sm:$0xff]
    %v2726 = vld [vmem:[#allocation5] sm:$0xff]
    %2727 = vmatpush.msra.mxu0 %v811
    %2728 = vmatpush.msra.mxu0 %v807
    %2729 = vmatpush.msra.mxu0 %v803
    %2730 = vmatpush.msra.mxu0 %v799
    %2731 = vmatpush.msra.mxu0 %v795
    %2732 = vmatpush.msra.mxu0 %v791
    %2733 = vmatpush.msra.mxu0 %v787
    %2734 = vmatpush.msra.mxu0 %v783
    %2735 = vmatpush.msra.mxu0 %v779
    %2736 = vmatpush.msra.mxu0 %v775
    %2737 = vmatpush.msra.mxu0 %v771
    %2738 = vmatpush.msra.mxu0 %v767
    %2739 = vmatpush.msra.mxu0 %v763
    %2740 = vmatpush.msra.mxu0 %v759
    %2741 = vmatpush.msra.mxu0 %v755
    %2742 = vmatpush.msra.mxu0 %v751
    %2743 = vmatmul.f32.gmra.mxu0 %v2726
    %v2744 = vpop.f32.mrf.mxu0
    %v2745 = vadd.f32 0.0, %v2744
    %2746 = vdwg.mxu0
    %2747 = vmatpush.msra.mxu0 %v812
    %2748 = vmatpush.msra.mxu0 %v808
    %2749 = vmatpush.msra.mxu0 %v804
    %2750 = vmatpush.msra.mxu0 %v800
    %2751 = vmatpush.msra.mxu0 %v796
    %2752 = vmatpush.msra.mxu0 %v792
    %2753 = vmatpush.msra.mxu0 %v788
    %2754 = vmatpush.msra.mxu0 %v784
    %2755 = vmatpush.msra.mxu0 %v780
    %2756 = vmatpush.msra.mxu0 %v776
    %2757 = vmatpush.msra.mxu0 %v772
    %2758 = vmatpush.msra.mxu0 %v768
    %2759 = vmatpush.msra.mxu0 %v764
    %2760 = vmatpush.msra.mxu0 %v760
    %2761 = vmatpush.msra.mxu0 %v756
    %2762 = vmatpush.msra.mxu0 %v752
    %2763 = vmatmul.f32.gmra.mxu0 %v2726
    %v2764 = vpop.f32.mrf.mxu0
    %v2765 = vadd.f32 0.0, %v2764
    %2766 = vdwg.mxu0
    %2767 = vmatpush.msra.mxu0 %v813
    %2768 = vmatpush.msra.mxu0 %v809
    %2769 = vmatpush.msra.mxu0 %v805
    %2770 = vmatpush.msra.mxu0 %v801
    %2771 = vmatpush.msra.mxu0 %v797
    %2772 = vmatpush.msra.mxu0 %v793
    %2773 = vmatpush.msra.mxu0 %v789
    %2774 = vmatpush.msra.mxu0 %v785
    %2775 = vmatpush.msra.mxu0 %v781
    %2776 = vmatpush.msra.mxu0 %v777
    %2777 = vmatpush.msra.mxu0 %v773
    %2778 = vmatpush.msra.mxu0 %v769
    %2779 = vmatpush.msra.mxu0 %v765
    %2780 = vmatpush.msra.mxu0 %v761
    %2781 = vmatpush.msra.mxu0 %v757
    %2782 = vmatpush.msra.mxu0 %v753
    %2783 = vmatmul.f32.gmra.mxu0 %v2726
    %v2784 = vpop.f32.mrf.mxu0
    %v2785 = vadd.f32 0.0, %v2784
    %2786 = vdwg.mxu0
    %2787 = vmatpush.msra.mxu0 %v814
    %2788 = vmatpush.msra.mxu0 %v810
    %2789 = vmatpush.msra.mxu0 %v806
    %2790 = vmatpush.msra.mxu0 %v802
    %2791 = vmatpush.msra.mxu0 %v798
    %2792 = vmatpush.msra.mxu0 %v794
    %2793 = vmatpush.msra.mxu0 %v790
    %2794 = vmatpush.msra.mxu0 %v786
    %2795 = vmatpush.msra.mxu0 %v782
    %2796 = vmatpush.msra.mxu0 %v778
    %2797 = vmatpush.msra.mxu0 %v774
    %2798 = vmatpush.msra.mxu0 %v770
    %2799 = vmatpush.msra.mxu0 %v766
    %2800 = vmatpush.msra.mxu0 %v762
    %2801 = vmatpush.msra.mxu0 %v758
    %2802 = vmatpush.msra.mxu0 %v754
    %2803 = vmatmul.f32.gmra.mxu0 %v2726
    %v2804 = vpop.f32.mrf.mxu0
    %v2805 = vadd.f32 0.0, %v2804
    %2806 = vdwg.mxu0
    %v2807 = vadd.f32 %v2722, %v2745
    %v2808 = vadd.f32 %v2723, %v2765
    %v2809 = vadd.f32 %v2724, %v2785
    %v2810 = vadd.f32 %v2725, %v2805
    %v2811 = vld [vmem:[#allocation6] sm:$0xff]
    %v2812 = vxor.u32 %v2807, 2147483648
    %v2813 = vmul.f32 %v2812, 1.442695
    %v2814 = vpow.pop %v2813
    %v2815 = vadd.f32 %v2814, 1.0
    %v2816 = vrcp.pop %v2815
    %v2817 = vmul.f32 %v2815, %v2816
    %v2818 = vsub.f32 1.0, %v2817
    %v2819 = vmul.f32 %v2816, %v2818
    %v2820 = vadd.f32 %v2816, %v2819
    %vm2821 = vweird.f32 %v2815
    %vm2822 = vweird.f32 %v2816
    %vm2823 = vmor %vm2821, %vm2822
    %v2824 = vsel %vm2823, %v2816, %v2820
    %v2825 = vand.u32 2147483647, %v2815
    %vm2826 = vcmp.eq.f32.partialorder %v2825, 8.507059e+37
    %v2827 = vand.u32 %v2815, 2147483648
    %v2828 = vor.u32 1.1754944e-38, %v2827
    %v2829 = vsel %vm2826, %v2828, %v2824
    %v2830 = vmul.f32 1.0, %v2829
    %v2831 = vxor.u32 %v2808, 2147483648
    %v2832 = vmul.f32 %v2831, 1.442695
    %v2833 = vpow.pop %v2832
    %v2834 = vadd.f32 %v2833, 1.0
    %v2835 = vrcp.pop %v2834
    %v2836 = vmul.f32 %v2834, %v2835
    %v2837 = vsub.f32 1.0, %v2836
    %v2838 = vmul.f32 %v2835, %v2837
    %v2839 = vadd.f32 %v2835, %v2838
    %vm2840 = vweird.f32 %v2834
    %vm2841 = vweird.f32 %v2835
    %vm2842 = vmor %vm2840, %vm2841
    %v2843 = vsel %vm2842, %v2835, %v2839
    %v2844 = vand.u32 2147483647, %v2834
    %vm2845 = vcmp.eq.f32.partialorder %v2844, 8.507059e+37
    %v2846 = vand.u32 %v2834, 2147483648
    %v2847 = vor.u32 1.1754944e-38, %v2846
    %v2848 = vsel %vm2845, %v2847, %v2843
    %v2849 = vmul.f32 1.0, %v2848
    %v2850 = vtanh.pop %v2809
    %v2851 = vxor.u32 %v2810, 2147483648
    %v2852 = vmul.f32 %v2851, 1.442695
    %v2853 = vpow.pop %v2852
    %v2854 = vadd.f32 %v2853, 1.0
    %v2855 = vrcp.pop %v2854
    %v2856 = vmul.f32 %v2854, %v2855
    %v2857 = vsub.f32 1.0, %v2856
    %v2858 = vmul.f32 %v2855, %v2857
    %v2859 = vadd.f32 %v2855, %v2858
    %vm2860 = vweird.f32 %v2854
    %vm2861 = vweird.f32 %v2855
    %vm2862 = vmor %vm2860, %vm2861
    %v2863 = vsel %vm2862, %v2855, %v2859
    %v2864 = vand.u32 2147483647, %v2854
    %vm2865 = vcmp.eq.f32.partialorder %v2864, 8.507059e+37
    %v2866 = vand.u32 %v2854, 2147483648
    %v2867 = vor.u32 1.1754944e-38, %v2866
    %v2868 = vsel %vm2865, %v2867, %v2863
    %v2869 = vmul.f32 1.0, %v2868
    %v2870 = vmul.f32 %v2849, %v2811
    %v2871 = vmul.f32 %v2830, %v2850
    %v2872 = vadd.f32 %v2870, %v2871
    %v2873 = vtanh.pop %v2872
    %v2874 = vmul.f32 %v2869, %v2873
    %2875 = vst [vmem:[#allocation5] sm:$0xff] %v2874
    %2876 = vst [vmem:[#allocation6] sm:$0xff] %v2872
    %s2877 = scalar_lea.vmem [#allocation8], 24
    %2878 = vst [vmem:[%s2877] sm:$0xff] %v2874
    %v2879 = vld [vmem:[%s1136 + $0x20] sm:$0xff]
    %v2880 = vld [vmem:[%s1136 + $0x28] sm:$0xff]
    %v2881 = vld [vmem:[%s1136 + $0x30] sm:$0xff]
    %v2882 = vld [vmem:[%s1136 + $0x38] sm:$0xff]
    %v2883 = vld [vmem:[#allocation5] sm:$0xff]
    %2884 = vmatpush.msra.mxu0 %v811
    %2885 = vmatpush.msra.mxu0 %v807
    %2886 = vmatpush.msra.mxu0 %v803
    %2887 = vmatpush.msra.mxu0 %v799
    %2888 = vmatpush.msra.mxu0 %v795
    %2889 = vmatpush.msra.mxu0 %v791
    %2890 = vmatpush.msra.mxu0 %v787
    %2891 = vmatpush.msra.mxu0 %v783
    %2892 = vmatpush.msra.mxu0 %v779
    %2893 = vmatpush.msra.mxu0 %v775
    %2894 = vmatpush.msra.mxu0 %v771
    %2895 = vmatpush.msra.mxu0 %v767
    %2896 = vmatpush.msra.mxu0 %v763
    %2897 = vmatpush.msra.mxu0 %v759
    %2898 = vmatpush.msra.mxu0 %v755
    %2899 = vmatpush.msra.mxu0 %v751
    %2900 = vmatmul.f32.gmra.mxu0 %v2883
    %v2901 = vpop.f32.mrf.mxu0
    %v2902 = vadd.f32 0.0, %v2901
    %2903 = vdwg.mxu0
    %2904 = vmatpush.msra.mxu0 %v812
    %2905 = vmatpush.msra.mxu0 %v808
    %2906 = vmatpush.msra.mxu0 %v804
    %2907 = vmatpush.msra.mxu0 %v800
    %2908 = vmatpush.msra.mxu0 %v796
    %2909 = vmatpush.msra.mxu0 %v792
    %2910 = vmatpush.msra.mxu0 %v788
    %2911 = vmatpush.msra.mxu0 %v784
    %2912 = vmatpush.msra.mxu0 %v780
    %2913 = vmatpush.msra.mxu0 %v776
    %2914 = vmatpush.msra.mxu0 %v772
    %2915 = vmatpush.msra.mxu0 %v768
    %2916 = vmatpush.msra.mxu0 %v764
    %2917 = vmatpush.msra.mxu0 %v760
    %2918 = vmatpush.msra.mxu0 %v756
    %2919 = vmatpush.msra.mxu0 %v752
    %2920 = vmatmul.f32.gmra.mxu0 %v2883
    %v2921 = vpop.f32.mrf.mxu0
    %v2922 = vadd.f32 0.0, %v2921
    %2923 = vdwg.mxu0
    %2924 = vmatpush.msra.mxu0 %v813
    %2925 = vmatpush.msra.mxu0 %v809
    %2926 = vmatpush.msra.mxu0 %v805
    %2927 = vmatpush.msra.mxu0 %v801
    %2928 = vmatpush.msra.mxu0 %v797
    %2929 = vmatpush.msra.mxu0 %v793
    %2930 = vmatpush.msra.mxu0 %v789
    %2931 = vmatpush.msra.mxu0 %v785
    %2932 = vmatpush.msra.mxu0 %v781
    %2933 = vmatpush.msra.mxu0 %v777
    %2934 = vmatpush.msra.mxu0 %v773
    %2935 = vmatpush.msra.mxu0 %v769
    %2936 = vmatpush.msra.mxu0 %v765
    %2937 = vmatpush.msra.mxu0 %v761
    %2938 = vmatpush.msra.mxu0 %v757
    %2939 = vmatpush.msra.mxu0 %v753
    %2940 = vmatmul.f32.gmra.mxu0 %v2883
    %v2941 = vpop.f32.mrf.mxu0
    %v2942 = vadd.f32 0.0, %v2941
    %2943 = vdwg.mxu0
    %2944 = vmatpush.msra.mxu0 %v814
    %2945 = vmatpush.msra.mxu0 %v810
    %2946 = vmatpush.msra.mxu0 %v806
    %2947 = vmatpush.msra.mxu0 %v802
    %2948 = vmatpush.msra.mxu0 %v798
    %2949 = vmatpush.msra.mxu0 %v794
    %2950 = vmatpush.msra.mxu0 %v790
    %2951 = vmatpush.msra.mxu0 %v786
    %2952 = vmatpush.msra.mxu0 %v782
    %2953 = vmatpush.msra.mxu0 %v778
    %2954 = vmatpush.msra.mxu0 %v774
    %2955 = vmatpush.msra.mxu0 %v770
    %2956 = vmatpush.msra.mxu0 %v766
    %2957 = vmatpush.msra.mxu0 %v762
    %2958 = vmatpush.msra.mxu0 %v758
    %2959 = vmatpush.msra.mxu0 %v754
    %2960 = vmatmul.f32.gmra.mxu0 %v2883
    %v2961 = vpop.f32.mrf.mxu0
    %v2962 = vadd.f32 0.0, %v2961
    %2963 = vdwg.mxu0
    %v2964 = vadd.f32 %v2879, %v2902
    %v2965 = vadd.f32 %v2880, %v2922
    %v2966 = vadd.f32 %v2881, %v2942
    %v2967 = vadd.f32 %v2882, %v2962
    %v2968 = vld [vmem:[#allocation6] sm:$0xff]
    %v2969 = vxor.u32 %v2964, 2147483648
    %v2970 = vmul.f32 %v2969, 1.442695
    %v2971 = vpow.pop %v2970
    %v2972 = vadd.f32 %v2971, 1.0
    %v2973 = vrcp.pop %v2972
    %v2974 = vmul.f32 %v2972, %v2973
    %v2975 = vsub.f32 1.0, %v2974
    %v2976 = vmul.f32 %v2973, %v2975
    %v2977 = vadd.f32 %v2973, %v2976
    %vm2978 = vweird.f32 %v2972
    %vm2979 = vweird.f32 %v2973
    %vm2980 = vmor %vm2978, %vm2979
    %v2981 = vsel %vm2980, %v2973, %v2977
    %v2982 = vand.u32 2147483647, %v2972
    %vm2983 = vcmp.eq.f32.partialorder %v2982, 8.507059e+37
    %v2984 = vand.u32 %v2972, 2147483648
    %v2985 = vor.u32 1.1754944e-38, %v2984
    %v2986 = vsel %vm2983, %v2985, %v2981
    %v2987 = vmul.f32 1.0, %v2986
    %v2988 = vxor.u32 %v2965, 2147483648
    %v2989 = vmul.f32 %v2988, 1.442695
    %v2990 = vpow.pop %v2989
    %v2991 = vadd.f32 %v2990, 1.0
    %v2992 = vrcp.pop %v2991
    %v2993 = vmul.f32 %v2991, %v2992
    %v2994 = vsub.f32 1.0, %v2993
    %v2995 = vmul.f32 %v2992, %v2994
    %v2996 = vadd.f32 %v2992, %v2995
    %vm2997 = vweird.f32 %v2991
    %vm2998 = vweird.f32 %v2992
    %vm2999 = vmor %vm2997, %vm2998
    %v3000 = vsel %vm2999, %v2992, %v2996
    %v3001 = vand.u32 2147483647, %v2991
    %vm3002 = vcmp.eq.f32.partialorder %v3001, 8.507059e+37
    %v3003 = vand.u32 %v2991, 2147483648
    %v3004 = vor.u32 1.1754944e-38, %v3003
    %v3005 = vsel %vm3002, %v3004, %v3000
    %v3006 = vmul.f32 1.0, %v3005
    %v3007 = vtanh.pop %v2966
    %v3008 = vxor.u32 %v2967, 2147483648
    %v3009 = vmul.f32 %v3008, 1.442695
    %v3010 = vpow.pop %v3009
    %v3011 = vadd.f32 %v3010, 1.0
    %v3012 = vrcp.pop %v3011
    %v3013 = vmul.f32 %v3011, %v3012
    %v3014 = vsub.f32 1.0, %v3013
    %v3015 = vmul.f32 %v3012, %v3014
    %v3016 = vadd.f32 %v3012, %v3015
    %vm3017 = vweird.f32 %v3011
    %vm3018 = vweird.f32 %v3012
    %vm3019 = vmor %vm3017, %vm3018
    %v3020 = vsel %vm3019, %v3012, %v3016
    %v3021 = vand.u32 2147483647, %v3011
    %vm3022 = vcmp.eq.f32.partialorder %v3021, 8.507059e+37
    %v3023 = vand.u32 %v3011, 2147483648
    %v3024 = vor.u32 1.1754944e-38, %v3023
    %v3025 = vsel %vm3022, %v3024, %v3020
    %v3026 = vmul.f32 1.0, %v3025
    %v3027 = vmul.f32 %v3006, %v2968
    %v3028 = vmul.f32 %v2987, %v3007
    %v3029 = vadd.f32 %v3027, %v3028
    %v3030 = vtanh.pop %v3029
    %v3031 = vmul.f32 %v3026, %v3030
    %3032 = vst [vmem:[#allocation5] sm:$0xff] %v3031
    %3033 = vst [vmem:[#allocation6] sm:$0xff] %v3029
    %s3034 = scalar_lea.vmem [#allocation8], 16
    %3035 = vst [vmem:[%s3034] sm:$0xff] %v3031
    %v3036 = vld [vmem:[%s976 + $0x20] sm:$0xff]
    %v3037 = vld [vmem:[%s976 + $0x28] sm:$0xff]
    %v3038 = vld [vmem:[%s976 + $0x30] sm:$0xff]
    %v3039 = vld [vmem:[%s976 + $0x38] sm:$0xff]
    %v3040 = vld [vmem:[#allocation5] sm:$0xff]
    %3041 = vmatpush.msra.mxu0 %v811
    %3042 = vmatpush.msra.mxu0 %v807
    %3043 = vmatpush.msra.mxu0 %v803
    %3044 = vmatpush.msra.mxu0 %v799
    %3045 = vmatpush.msra.mxu0 %v795
    %3046 = vmatpush.msra.mxu0 %v791
    %3047 = vmatpush.msra.mxu0 %v787
    %3048 = vmatpush.msra.mxu0 %v783
    %3049 = vmatpush.msra.mxu0 %v779
    %3050 = vmatpush.msra.mxu0 %v775
    %3051 = vmatpush.msra.mxu0 %v771
    %3052 = vmatpush.msra.mxu0 %v767
    %3053 = vmatpush.msra.mxu0 %v763
    %3054 = vmatpush.msra.mxu0 %v759
    %3055 = vmatpush.msra.mxu0 %v755
    %3056 = vmatpush.msra.mxu0 %v751
    %3057 = vmatmul.f32.gmra.mxu0 %v3040
    %v3058 = vpop.f32.mrf.mxu0
    %v3059 = vadd.f32 0.0, %v3058
    %3060 = vdwg.mxu0
    %3061 = vmatpush.msra.mxu0 %v812
    %3062 = vmatpush.msra.mxu0 %v808
    %3063 = vmatpush.msra.mxu0 %v804
    %3064 = vmatpush.msra.mxu0 %v800
    %3065 = vmatpush.msra.mxu0 %v796
    %3066 = vmatpush.msra.mxu0 %v792
    %3067 = vmatpush.msra.mxu0 %v788
    %3068 = vmatpush.msra.mxu0 %v784
    %3069 = vmatpush.msra.mxu0 %v780
    %3070 = vmatpush.msra.mxu0 %v776
    %3071 = vmatpush.msra.mxu0 %v772
    %3072 = vmatpush.msra.mxu0 %v768
    %3073 = vmatpush.msra.mxu0 %v764
    %3074 = vmatpush.msra.mxu0 %v760
    %3075 = vmatpush.msra.mxu0 %v756
    %3076 = vmatpush.msra.mxu0 %v752
    %3077 = vmatmul.f32.gmra.mxu0 %v3040
    %v3078 = vpop.f32.mrf.mxu0
    %v3079 = vadd.f32 0.0, %v3078
    %3080 = vdwg.mxu0
    %3081 = vmatpush.msra.mxu0 %v813
    %3082 = vmatpush.msra.mxu0 %v809
    %3083 = vmatpush.msra.mxu0 %v805
    %3084 = vmatpush.msra.mxu0 %v801
    %3085 = vmatpush.msra.mxu0 %v797
    %3086 = vmatpush.msra.mxu0 %v793
    %3087 = vmatpush.msra.mxu0 %v789
    %3088 = vmatpush.msra.mxu0 %v785
    %3089 = vmatpush.msra.mxu0 %v781
    %3090 = vmatpush.msra.mxu0 %v777
    %3091 = vmatpush.msra.mxu0 %v773
    %3092 = vmatpush.msra.mxu0 %v769
    %3093 = vmatpush.msra.mxu0 %v765
    %3094 = vmatpush.msra.mxu0 %v761
    %3095 = vmatpush.msra.mxu0 %v757
    %3096 = vmatpush.msra.mxu0 %v753
    %3097 = vmatmul.f32.gmra.mxu0 %v3040
    %v3098 = vpop.f32.mrf.mxu0
    %v3099 = vadd.f32 0.0, %v3098
    %3100 = vdwg.mxu0
    %3101 = vmatpush.msra.mxu0 %v814
    %3102 = vmatpush.msra.mxu0 %v810
    %3103 = vmatpush.msra.mxu0 %v806
    %3104 = vmatpush.msra.mxu0 %v802
    %3105 = vmatpush.msra.mxu0 %v798
    %3106 = vmatpush.msra.mxu0 %v794
    %3107 = vmatpush.msra.mxu0 %v790
    %3108 = vmatpush.msra.mxu0 %v786
    %3109 = vmatpush.msra.mxu0 %v782
    %3110 = vmatpush.msra.mxu0 %v778
    %3111 = vmatpush.msra.mxu0 %v774
    %3112 = vmatpush.msra.mxu0 %v770
    %3113 = vmatpush.msra.mxu0 %v766
    %3114 = vmatpush.msra.mxu0 %v762
    %3115 = vmatpush.msra.mxu0 %v758
    %3116 = vmatpush.msra.mxu0 %v754
    %3117 = vmatmul.f32.gmra.mxu0 %v3040
    %v3118 = vpop.f32.mrf.mxu0
    %v3119 = vadd.f32 0.0, %v3118
    %3120 = vdwg.mxu0
    %v3121 = vadd.f32 %v3036, %v3059
    %v3122 = vadd.f32 %v3037, %v3079
    %v3123 = vadd.f32 %v3038, %v3099
    %v3124 = vadd.f32 %v3039, %v3119
    %v3125 = vld [vmem:[#allocation6] sm:$0xff]
    %v3126 = vxor.u32 %v3121, 2147483648
    %v3127 = vmul.f32 %v3126, 1.442695
    %v3128 = vpow.pop %v3127
    %v3129 = vadd.f32 %v3128, 1.0
    %v3130 = vrcp.pop %v3129
    %v3131 = vmul.f32 %v3129, %v3130
    %v3132 = vsub.f32 1.0, %v3131
    %v3133 = vmul.f32 %v3130, %v3132
    %v3134 = vadd.f32 %v3130, %v3133
    %vm3135 = vweird.f32 %v3129
    %vm3136 = vweird.f32 %v3130
    %vm3137 = vmor %vm3135, %vm3136
    %v3138 = vsel %vm3137, %v3130, %v3134
    %v3139 = vand.u32 2147483647, %v3129
    %vm3140 = vcmp.eq.f32.partialorder %v3139, 8.507059e+37
    %v3141 = vand.u32 %v3129, 2147483648
    %v3142 = vor.u32 1.1754944e-38, %v3141
    %v3143 = vsel %vm3140, %v3142, %v3138
    %v3144 = vmul.f32 1.0, %v3143
    %v3145 = vxor.u32 %v3122, 2147483648
    %v3146 = vmul.f32 %v3145, 1.442695
    %v3147 = vpow.pop %v3146
    %v3148 = vadd.f32 %v3147, 1.0
    %v3149 = vrcp.pop %v3148
    %v3150 = vmul.f32 %v3148, %v3149
    %v3151 = vsub.f32 1.0, %v3150
    %v3152 = vmul.f32 %v3149, %v3151
    %v3153 = vadd.f32 %v3149, %v3152
    %vm3154 = vweird.f32 %v3148
    %vm3155 = vweird.f32 %v3149
    %vm3156 = vmor %vm3154, %vm3155
    %v3157 = vsel %vm3156, %v3149, %v3153
    %v3158 = vand.u32 2147483647, %v3148
    %vm3159 = vcmp.eq.f32.partialorder %v3158, 8.507059e+37
    %v3160 = vand.u32 %v3148, 2147483648
    %v3161 = vor.u32 1.1754944e-38, %v3160
    %v3162 = vsel %vm3159, %v3161, %v3157
    %v3163 = vmul.f32 1.0, %v3162
    %v3164 = vtanh.pop %v3123
    %v3165 = vxor.u32 %v3124, 2147483648
    %v3166 = vmul.f32 %v3165, 1.442695
    %v3167 = vpow.pop %v3166
    %v3168 = vadd.f32 %v3167, 1.0
    %v3169 = vrcp.pop %v3168
    %v3170 = vmul.f32 %v3168, %v3169
    %v3171 = vsub.f32 1.0, %v3170
    %v3172 = vmul.f32 %v3169, %v3171
    %v3173 = vadd.f32 %v3169, %v3172
    %vm3174 = vweird.f32 %v3168
    %vm3175 = vweird.f32 %v3169
    %vm3176 = vmor %vm3174, %vm3175
    %v3177 = vsel %vm3176, %v3169, %v3173
    %v3178 = vand.u32 2147483647, %v3168
    %vm3179 = vcmp.eq.f32.partialorder %v3178, 8.507059e+37
    %v3180 = vand.u32 %v3168, 2147483648
    %v3181 = vor.u32 1.1754944e-38, %v3180
    %v3182 = vsel %vm3179, %v3181, %v3177
    %v3183 = vmul.f32 1.0, %v3182
    %v3184 = vmul.f32 %v3163, %v3125
    %v3185 = vmul.f32 %v3144, %v3164
    %v3186 = vadd.f32 %v3184, %v3185
    %v3187 = vtanh.pop %v3186
    %v3188 = vmul.f32 %v3183, %v3187
    %3189 = vst [vmem:[#allocation5] sm:$0xff] %v3188
    %3190 = vst [vmem:[#allocation6] sm:$0xff] %v3186
    %s3191 = scalar_lea.vmem [#allocation8], 8
    %3192 = vst [vmem:[%s3191] sm:$0xff] %v3188
    %v3193 = vld [vmem:[%s817 + $0x20] sm:$0xff]
    %v3194 = vld [vmem:[%s817 + $0x28] sm:$0xff]
    %v3195 = vld [vmem:[%s817 + $0x30] sm:$0xff]
    %v3196 = vld [vmem:[%s817 + $0x38] sm:$0xff]
    %v3197 = vld [vmem:[#allocation5] sm:$0xff]
    %3198 = vmatpush.msra.mxu0 %v811
    %3199 = vmatpush.msra.mxu0 %v807
    %3200 = vmatpush.msra.mxu0 %v803
    %3201 = vmatpush.msra.mxu0 %v799
    %3202 = vmatpush.msra.mxu0 %v795
    %3203 = vmatpush.msra.mxu0 %v791
    %3204 = vmatpush.msra.mxu0 %v787
    %3205 = vmatpush.msra.mxu0 %v783
    %3206 = vmatpush.msra.mxu0 %v779
    %3207 = vmatpush.msra.mxu0 %v775
    %3208 = vmatpush.msra.mxu0 %v771
    %3209 = vmatpush.msra.mxu0 %v767
    %3210 = vmatpush.msra.mxu0 %v763
    %3211 = vmatpush.msra.mxu0 %v759
    %3212 = vmatpush.msra.mxu0 %v755
    %3213 = vmatpush.msra.mxu0 %v751
    %3214 = vmatmul.f32.gmra.mxu0 %v3197
    %v3215 = vpop.f32.mrf.mxu0
    %v3216 = vadd.f32 0.0, %v3215
    %3217 = vdwg.mxu0
    %3218 = vmatpush.msra.mxu0 %v812
    %3219 = vmatpush.msra.mxu0 %v808
    %3220 = vmatpush.msra.mxu0 %v804
    %3221 = vmatpush.msra.mxu0 %v800
    %3222 = vmatpush.msra.mxu0 %v796
    %3223 = vmatpush.msra.mxu0 %v792
    %3224 = vmatpush.msra.mxu0 %v788
    %3225 = vmatpush.msra.mxu0 %v784
    %3226 = vmatpush.msra.mxu0 %v780
    %3227 = vmatpush.msra.mxu0 %v776
    %3228 = vmatpush.msra.mxu0 %v772
    %3229 = vmatpush.msra.mxu0 %v768
    %3230 = vmatpush.msra.mxu0 %v764
    %3231 = vmatpush.msra.mxu0 %v760
    %3232 = vmatpush.msra.mxu0 %v756
    %3233 = vmatpush.msra.mxu0 %v752
    %3234 = vmatmul.f32.gmra.mxu0 %v3197
    %v3235 = vpop.f32.mrf.mxu0
    %v3236 = vadd.f32 0.0, %v3235
    %3237 = vdwg.mxu0
    %3238 = vmatpush.msra.mxu0 %v813
    %3239 = vmatpush.msra.mxu0 %v809
    %3240 = vmatpush.msra.mxu0 %v805
    %3241 = vmatpush.msra.mxu0 %v801
    %3242 = vmatpush.msra.mxu0 %v797
    %3243 = vmatpush.msra.mxu0 %v793
    %3244 = vmatpush.msra.mxu0 %v789
    %3245 = vmatpush.msra.mxu0 %v785
    %3246 = vmatpush.msra.mxu0 %v781
    %3247 = vmatpush.msra.mxu0 %v777
    %3248 = vmatpush.msra.mxu0 %v773
    %3249 = vmatpush.msra.mxu0 %v769
    %3250 = vmatpush.msra.mxu0 %v765
    %3251 = vmatpush.msra.mxu0 %v761
    %3252 = vmatpush.msra.mxu0 %v757
    %3253 = vmatpush.msra.mxu0 %v753
    %3254 = vmatmul.f32.gmra.mxu0 %v3197
    %v3255 = vpop.f32.mrf.mxu0
    %v3256 = vadd.f32 0.0, %v3255
    %3257 = vdwg.mxu0
    %3258 = vmatpush.msra.mxu0 %v814
    %3259 = vmatpush.msra.mxu0 %v810
    %3260 = vmatpush.msra.mxu0 %v806
    %3261 = vmatpush.msra.mxu0 %v802
    %3262 = vmatpush.msra.mxu0 %v798
    %3263 = vmatpush.msra.mxu0 %v794
    %3264 = vmatpush.msra.mxu0 %v790
    %3265 = vmatpush.msra.mxu0 %v786
    %3266 = vmatpush.msra.mxu0 %v782
    %3267 = vmatpush.msra.mxu0 %v778
    %3268 = vmatpush.msra.mxu0 %v774
    %3269 = vmatpush.msra.mxu0 %v770
    %3270 = vmatpush.msra.mxu0 %v766
    %3271 = vmatpush.msra.mxu0 %v762
    %3272 = vmatpush.msra.mxu0 %v758
    %3273 = vmatpush.msra.mxu0 %v754
    %3274 = vmatmul.f32.gmra.mxu0 %v3197
    %v3275 = vpop.f32.mrf.mxu0
    %v3276 = vadd.f32 0.0, %v3275
    %3277 = vdwg.mxu0
    %v3278 = vadd.f32 %v3193, %v3216
    %v3279 = vadd.f32 %v3194, %v3236
    %v3280 = vadd.f32 %v3195, %v3256
    %v3281 = vadd.f32 %v3196, %v3276
    %v3282 = vld [vmem:[#allocation6] sm:$0xff]
    %v3283 = vxor.u32 %v3278, 2147483648
    %v3284 = vmul.f32 %v3283, 1.442695
    %v3285 = vpow.pop %v3284
    %v3286 = vadd.f32 %v3285, 1.0
    %v3287 = vrcp.pop %v3286
    %v3288 = vmul.f32 %v3286, %v3287
    %v3289 = vsub.f32 1.0, %v3288
    %v3290 = vmul.f32 %v3287, %v3289
    %v3291 = vadd.f32 %v3287, %v3290
    %vm3292 = vweird.f32 %v3286
    %vm3293 = vweird.f32 %v3287
    %vm3294 = vmor %vm3292, %vm3293
    %v3295 = vsel %vm3294, %v3287, %v3291
    %v3296 = vand.u32 2147483647, %v3286
    %vm3297 = vcmp.eq.f32.partialorder %v3296, 8.507059e+37
    %v3298 = vand.u32 %v3286, 2147483648
    %v3299 = vor.u32 1.1754944e-38, %v3298
    %v3300 = vsel %vm3297, %v3299, %v3295
    %v3301 = vmul.f32 1.0, %v3300
    %v3302 = vxor.u32 %v3279, 2147483648
    %v3303 = vmul.f32 %v3302, 1.442695
    %v3304 = vpow.pop %v3303
    %v3305 = vadd.f32 %v3304, 1.0
    %v3306 = vrcp.pop %v3305
    %v3307 = vmul.f32 %v3305, %v3306
    %v3308 = vsub.f32 1.0, %v3307
    %v3309 = vmul.f32 %v3306, %v3308
    %v3310 = vadd.f32 %v3306, %v3309
    %vm3311 = vweird.f32 %v3305
    %vm3312 = vweird.f32 %v3306
    %vm3313 = vmor %vm3311, %vm3312
    %v3314 = vsel %vm3313, %v3306, %v3310
    %v3315 = vand.u32 2147483647, %v3305
    %vm3316 = vcmp.eq.f32.partialorder %v3315, 8.507059e+37
    %v3317 = vand.u32 %v3305, 2147483648
    %v3318 = vor.u32 1.1754944e-38, %v3317
    %v3319 = vsel %vm3316, %v3318, %v3314
    %v3320 = vmul.f32 1.0, %v3319
    %v3321 = vtanh.pop %v3280
    %v3322 = vxor.u32 %v3281, 2147483648
    %v3323 = vmul.f32 %v3322, 1.442695
    %v3324 = vpow.pop %v3323
    %v3325 = vadd.f32 %v3324, 1.0
    %v3326 = vrcp.pop %v3325
    %v3327 = vmul.f32 %v3325, %v3326
    %v3328 = vsub.f32 1.0, %v3327
    %v3329 = vmul.f32 %v3326, %v3328
    %v3330 = vadd.f32 %v3326, %v3329
    %vm3331 = vweird.f32 %v3325
    %vm3332 = vweird.f32 %v3326
    %vm3333 = vmor %vm3331, %vm3332
    %v3334 = vsel %vm3333, %v3326, %v3330
    %v3335 = vand.u32 2147483647, %v3325
    %vm3336 = vcmp.eq.f32.partialorder %v3335, 8.507059e+37
    %v3337 = vand.u32 %v3325, 2147483648
    %v3338 = vor.u32 1.1754944e-38, %v3337
    %v3339 = vsel %vm3336, %v3338, %v3334
    %v3340 = vmul.f32 1.0, %v3339
    %v3341 = vmul.f32 %v3320, %v3282
    %v3342 = vmul.f32 %v3301, %v3321
    %v3343 = vadd.f32 %v3341, %v3342
    %v3344 = vtanh.pop %v3343
    %v3345 = vmul.f32 %v3340, %v3344
    %3346 = vst [vmem:[#allocation5] sm:$0xff] %v3345
    %3347 = vst [vmem:[#allocation6] sm:$0xff] %v3343
    %3348 = vst [vmem:[#allocation8] sm:$0xff] %v3345
    %v3349 = vld [vmem:[#allocation7] sm:$0xff]
    %v3350 = vld [vmem:[#allocation7 + $0x8] sm:$0xff]
    %v3351 = vld [vmem:[#allocation7 + $0x10] sm:$0xff]
    %v3352 = vld [vmem:[#allocation7 + $0x18] sm:$0xff]
    %v3353 = vld [vmem:[#allocation7 + $0x20] sm:$0xff]
    %v3354 = vld [vmem:[#allocation7 + $0x28] sm:$0xff]
    %v3355 = vld [vmem:[#allocation7 + $0x30] sm:$0xff]
    %v3356 = vld [vmem:[#allocation7 + $0x38] sm:$0xff]
    %v3357 = vld [vmem:[#allocation18] sm:$0xff]
    %v3358 = vld [vmem:[#allocation18 + $0x8] sm:$0xff]
    %v3359 = vld [vmem:[#allocation18 + $0x10] sm:$0xff]
    %v3360 = vld [vmem:[#allocation18 + $0x18] sm:$0xff]
    %v3361 = vld [vmem:[#allocation18 + $0x20] sm:$0xff]
    %v3362 = vld [vmem:[#allocation18 + $0x28] sm:$0xff]
    %v3363 = vld [vmem:[#allocation18 + $0x30] sm:$0xff]
    %v3364 = vld [vmem:[#allocation18 + $0x38] sm:$0xff]
    %v3365 = vld [vmem:[#allocation18 + $0x40] sm:$0xff]
    %v3366 = vld [vmem:[#allocation18 + $0x48] sm:$0xff]
    %v3367 = vld [vmem:[#allocation18 + $0x50] sm:$0xff]
    %v3368 = vld [vmem:[#allocation18 + $0x58] sm:$0xff]
    %v3369 = vld [vmem:[#allocation18 + $0x60] sm:$0xff]
    %v3370 = vld [vmem:[#allocation18 + $0x68] sm:$0xff]
    %v3371 = vld [vmem:[#allocation18 + $0x70] sm:$0xff]
    %v3372 = vld [vmem:[#allocation18 + $0x78] sm:$0xff]
    %v3373 = vld [vmem:[#allocation8] sm:$0xff]
    %v3374 = vld [vmem:[#allocation8 + $0x8] sm:$0xff]
    %v3375 = vld [vmem:[#allocation8 + $0x10] sm:$0xff]
    %v3376 = vld [vmem:[#allocation8 + $0x18] sm:$0xff]
    %v3377 = vld [vmem:[#allocation8 + $0x20] sm:$0xff]
    %v3378 = vld [vmem:[#allocation8 + $0x28] sm:$0xff]
    %v3379 = vld [vmem:[#allocation8 + $0x30] sm:$0xff]
    %v3380 = vld [vmem:[#allocation8 + $0x38] sm:$0xff]
    %v3381 = vld [vmem:[#allocation20] sm:$0xff]
    %v3382 = vld [vmem:[#allocation20 + $0x8] sm:$0xff]
    %v3383 = vld [vmem:[#allocation20 + $0x10] sm:$0xff]
    %v3384 = vld [vmem:[#allocation20 + $0x18] sm:$0xff]
    %v3385 = vld [vmem:[#allocation20 + $0x20] sm:$0xff]
    %v3386 = vld [vmem:[#allocation20 + $0x28] sm:$0xff]
    %v3387 = vld [vmem:[#allocation20 + $0x30] sm:$0xff]
    %v3388 = vld [vmem:[#allocation20 + $0x38] sm:$0xff]
    %v3389 = vld [vmem:[#allocation20 + $0x40] sm:$0xff]
    %v3390 = vld [vmem:[#allocation20 + $0x48] sm:$0xff]
    %v3391 = vld [vmem:[#allocation20 + $0x50] sm:$0xff]
    %v3392 = vld [vmem:[#allocation20 + $0x58] sm:$0xff]
    %v3393 = vld [vmem:[#allocation20 + $0x60] sm:$0xff]
    %v3394 = vld [vmem:[#allocation20 + $0x68] sm:$0xff]
    %v3395 = vld [vmem:[#allocation20 + $0x70] sm:$0xff]
    %v3396 = vld [vmem:[#allocation20 + $0x78] sm:$0xff]
    %3397 = vmatpush.msra.mxu0 %v3396
    %3398 = vmatpush.msra.mxu0 %v3395
    %3399 = vmatpush.msra.mxu0 %v3394
    %3400 = vmatpush.msra.mxu0 %v3393
    %3401 = vmatpush.msra.mxu0 %v3392
    %3402 = vmatpush.msra.mxu0 %v3391
    %3403 = vmatpush.msra.mxu0 %v3390
    %3404 = vmatpush.msra.mxu0 %v3389
    %3405 = vmatpush.msra.mxu0 %v3388
    %3406 = vmatpush.msra.mxu0 %v3387
    %3407 = vmatpush.msra.mxu0 %v3386
    %3408 = vmatpush.msra.mxu0 %v3385
    %3409 = vmatpush.msra.mxu0 %v3384
    %3410 = vmatpush.msra.mxu0 %v3383
    %3411 = vmatpush.msra.mxu0 %v3382
    %3412 = vmatpush.msra.mxu0 %v3381
    %3413 = vmatmul.f32.gmra.mxu0 %v3373
    %v3414 = vpop.f32.mrf.mxu0
    %v3415 = vadd.f32 0.0, %v3414
    %3416 = vmatmul.f32.gmra.mxu0 %v3374
    %v3417 = vpop.f32.mrf.mxu0
    %v3418 = vadd.f32 0.0, %v3417
    %3419 = vmatmul.f32.gmra.mxu0 %v3375
    %v3420 = vpop.f32.mrf.mxu0
    %v3421 = vadd.f32 0.0, %v3420
    %3422 = vmatmul.f32.gmra.mxu0 %v3376
    %v3423 = vpop.f32.mrf.mxu0
    %v3424 = vadd.f32 0.0, %v3423
    %3425 = vmatmul.f32.gmra.mxu0 %v3377
    %v3426 = vpop.f32.mrf.mxu0
    %v3427 = vadd.f32 0.0, %v3426
    %3428 = vmatmul.f32.gmra.mxu0 %v3378
    %v3429 = vpop.f32.mrf.mxu0
    %v3430 = vadd.f32 0.0, %v3429
    %3431 = vmatmul.f32.gmra.mxu0 %v3379
    %v3432 = vpop.f32.mrf.mxu0
    %v3433 = vadd.f32 0.0, %v3432
    %3434 = vmatmul.f32.gmra.mxu0 %v3380
    %v3435 = vpop.f32.mrf.mxu0
    %v3436 = vadd.f32 0.0, %v3435
    %3437 = vdwg.mxu0
    %3438 = vmatpush.msra.mxu0 %v3372
    %3439 = vmatpush.msra.mxu0 %v3371
    %3440 = vmatpush.msra.mxu0 %v3370
    %3441 = vmatpush.msra.mxu0 %v3369
    %3442 = vmatpush.msra.mxu0 %v3368
    %3443 = vmatpush.msra.mxu0 %v3367
    %3444 = vmatpush.msra.mxu0 %v3366
    %3445 = vmatpush.msra.mxu0 %v3365
    %3446 = vmatpush.msra.mxu0 %v3364
    %3447 = vmatpush.msra.mxu0 %v3363
    %3448 = vmatpush.msra.mxu0 %v3362
    %3449 = vmatpush.msra.mxu0 %v3361
    %3450 = vmatpush.msra.mxu0 %v3360
    %3451 = vmatpush.msra.mxu0 %v3359
    %3452 = vmatpush.msra.mxu0 %v3358
    %3453 = vmatpush.msra.mxu0 %v3357
    %3454 = vmatmul.f32.gmra.mxu0 %v3349
    %v3455 = vpop.f32.mrf.mxu0
    %v3456 = vadd.f32 %v3415, %v3455
    %3457 = vmatmul.f32.gmra.mxu0 %v3350
    %v3458 = vpop.f32.mrf.mxu0
    %v3459 = vadd.f32 %v3418, %v3458
    %3460 = vmatmul.f32.gmra.mxu0 %v3351
    %v3461 = vpop.f32.mrf.mxu0
    %v3462 = vadd.f32 %v3421, %v3461
    %3463 = vmatmul.f32.gmra.mxu0 %v3352
    %v3464 = vpop.f32.mrf.mxu0
    %v3465 = vadd.f32 %v3424, %v3464
    %3466 = vmatmul.f32.gmra.mxu0 %v3353
    %v3467 = vpop.f32.mrf.mxu0
    %v3468 = vadd.f32 %v3427, %v3467
    %3469 = vmatmul.f32.gmra.mxu0 %v3354
    %v3470 = vpop.f32.mrf.mxu0
    %v3471 = vadd.f32 %v3430, %v3470
    %3472 = vmatmul.f32.gmra.mxu0 %v3355
    %v3473 = vpop.f32.mrf.mxu0
    %v3474 = vadd.f32 %v3433, %v3473
    %3475 = vmatmul.f32.gmra.mxu0 %v3356
    %v3476 = vpop.f32.mrf.mxu0
    %v3477 = vadd.f32 %v3436, %v3476
    %3478 = vdwg.mxu0
    %v3479 = vld [vmem:[%s7] sm:$0x1]
    %v3481 = vperm.slane %v3479, 0
    %v3483 = vadd.f32 %v3456, %v3481
    %v3484 = vadd.f32 %v3459, %v3481
    %v3485 = vadd.f32 %v3462, %v3481
    %v3486 = vadd.f32 %v3465, %v3481
    %v3487 = vadd.f32 %v3468, %v3481
    %v3488 = vadd.f32 %v3471, %v3481
    %v3489 = vadd.f32 %v3474, %v3481
    %v3490 = vadd.f32 %v3477, %v3481
    %3491 = vst [vmem:[#allocation21] sm:$0xff] %v3483
    %3492 = vst [vmem:[#allocation21 + $0x8] sm:$0xff] %v3484
    %3493 = vst [vmem:[#allocation21 + $0x10] sm:$0xff] %v3485
    %3494 = vst [vmem:[#allocation21 + $0x18] sm:$0xff] %v3486
    %3495 = vst [vmem:[#allocation21 + $0x20] sm:$0xff] %v3487
    %3496 = vst [vmem:[#allocation21 + $0x28] sm:$0xff] %v3488
    %3497 = vst [vmem:[#allocation21 + $0x30] sm:$0xff] %v3489
    %3498 = vst [vmem:[#allocation21 + $0x38] sm:$0xff] %v3490
    // Predicated region
    $region62: #{tpu_custom_call.1} parent=1 // pred_check
      _
    $region63: #{tpu_custom_call.1} parent=1 // pred_check_branch
      %3500 = sbr.rel (0) target = $region65
    $region64: #{tpu_custom_call.1} parent=1 // pred_region
      %3502 = vsyncadd [#allocation11], 0
      %s3503 = sshll.u32 [#allocation21], 4
      %s3504 = int_to_ptr.vmem [resolvable:$true] %s3503
      %s3505 = sshll.u32 %s8, 4
      %s3506 = int_to_ptr.hbm [resolvable:$true] %s3505
      %3511 = dma.vmem_to_hbm [thread:$0]  %s3504, 1024, %s3506, [#allocation11], 128, 128, 8
    $region65: #{tpu_custom_call.1} parent=1 // pred_fallthru
      _
    // Predicated region
    $region66: #{tpu_custom_call.1} parent=1 // pred_check
      _
    $region67: #{tpu_custom_call.1} parent=1 // pred_check_branch
      %3513 = sbr.rel (0) target = $region69
    $region68: #{tpu_custom_call.1} parent=1 // pred_region
      %3515 = dma.done [#allocation11], 1024
    $region69: #{tpu_custom_call.1} parent=1 // pred_fallthru
      _
    %3516 = vsyncpa [#allocation10], 1
    %3517 = vsyncpa [#allocation13], 1
    %3518 = vsyncpa [#allocation16], 1
    %3519 = vsyncpa [#allocation19], 1
    %3520 = vsyncpa [#allocation11], 1

</llo_original>
